<compile_context>
chip_gen: v7x
topology: tpu7x:2x2x1
jax: 0.10.0
libtpu: 0.0.40
codegen_flags: <defaults>
</compile_context>

<pallas_src>
import jax
import jax.numpy as jnp
import numpy as np
from jax import lax
from jax.experimental import pallas as pl
from jax.experimental.pallas import tpu as pltpu

# ---------------- config (small, consistent with the module) ----------------
V = 20    # source_melody_size (= target vocabulary)
E = 16    # embedding_dim
L = 2     # num_layers (encoder LSTM)
H = 32    # hidden_size
S = 8     # source sequence length
T = 6     # target sequence length   -> output is (T-1, B, V)
B = 2     # batch size
EPS = 1e-8   # CosineSimilarity eps
VP = 128     # padded logit width (lane-dense output, sliced back to V)


# ------------------------------ fused kernel --------------------------------
def make_fused_kernel(num_layers, hidden, vocab, src_len, dec_len, batch, pad_v):
    H4 = 4 * hidden

    def gates_to_state(gates, c):
        # one full-width sigmoid + one full-width tanh over the 4H lanes,
        # then pick the i/f/g/o 32-lane windows (numerically identical for the
        # lanes that are actually used).
        sg = jax.nn.sigmoid(gates)
        th = jnp.tanh(gates)
        i = sg[:, 0 * hidden:1 * hidden]
        f = sg[:, 1 * hidden:2 * hidden]
        g = th[:, 2 * hidden:3 * hidden]
        o = sg[:, 3 * hidden:4 * hidden]
        c_new = f * c + i * g
        h_new = o * jnp.tanh(c_new)
        return h_new, c_new

    def kernel(*refs):
        src_ids_ref, tgt_ids_ref = refs[0], refs[1]
        enc_proj0_ref, b0_ref, w_hh0_ref = refs[2], refs[3], refs[4]
        p = 5
        enc_lw = []
        for _ in range(num_layers - 1):          # per layer>=1: ((2H,4H), (1,4H))
            enc_lw.append((refs[p], refs[p + 1]))
            p += 2
        dec_proj_ref = refs[p]                   # (V, 4H)
        b_d_ref = refs[p + 1]                    # (1, 4H)
        w_dec_ref = refs[p + 2]                  # (2H, 4H+VP)
        b_ff_ref = refs[p + 3]                   # (1, VP)
        out_ref = refs[p + 4]                    # (T-1, B, VP)
        lhs_s = refs[p + 5]                      # (B, 2H) VMEM scratch (LHS staging)

        # ---- hoisted input-side gate projections (embedding folded in wrapper) ----
        def onehot_gates(ids_ref, proj_ref, bias_ref, n_rows):
            lanes = lax.broadcasted_iota(jnp.int32, (n_rows, vocab), 1)
            onehot = (ids_ref[...] == lanes).astype(jnp.float32)
            return jnp.dot(onehot, proj_ref[...],
                           preferred_element_type=jnp.float32) + bias_ref[...]

        gates0_in = onehot_gates(src_ids_ref, enc_proj0_ref, b0_ref,
                                 src_len * batch)          # (S*B, 4H)
        gates_d_in = onehot_gates(tgt_ids_ref, dec_proj_ref, b_d_ref,
                                  dec_len * batch)         # ((T-1)*B, 4H)

        def fused_step(first, second, w_ref):
            # stage the (B, 2H) LHS via two lane-window stores, one MXU pass.
            lhs_s[:, 0:hidden] = first
            lhs_s[:, hidden:2 * hidden] = second
            return jnp.dot(lhs_s[...], w_ref[...],
                           preferred_element_type=jnp.float32)

        # ---- encoder recurrence (fully unrolled over source steps) ----
        zeros_bh = jnp.zeros((batch, hidden), jnp.float32)
        h = [zeros_bh] * num_layers
        c = [zeros_bh] * num_layers
        enc = jnp.zeros((batch, src_len, hidden), jnp.float32)   # dense (B,S,H)
        s_iota = lax.broadcasted_iota(jnp.int32, (batch, src_len, hidden), 1)
        for t in range(src_len):
            g0 = gates0_in[t * batch:(t + 1) * batch, :] + jnp.dot(
                h[0], w_hh0_ref[...], preferred_element_type=jnp.float32)
            h[0], c[0] = gates_to_state(g0, c[0])
            x = h[0]
            for l in range(1, num_layers):
                w_ref, b_ref = enc_lw[l - 1]
                gl = fused_step(x, h[l], w_ref) + b_ref[...]
                h[l], c[l] = gates_to_state(gl, c[l])
                x = h[l]
            enc = jnp.where(s_iota == t, x[:, None, :], enc)     # place step t

        enc_norm = jnp.sqrt(jnp.sum(enc * enc, axis=-1))         # (B, S), hoisted

        # ---- decoder recurrence (teacher forcing, fully unrolled) ----
        hd = zeros_bh
        cd = zeros_bh
        for t in range(dec_len):
            # attention: cosine similarity over H, softmax over S (all on (B,S))
            dots = jnp.sum(enc * hd[:, None, :], axis=-1)                    # (B, S)
            h_norm = jnp.sqrt(jnp.sum(hd * hd, axis=-1, keepdims=True))      # (B, 1)
            sim = dots / jnp.maximum(h_norm * enc_norm, EPS)
            sim_max = jnp.max(sim, axis=1, keepdims=True)
            ex = jnp.exp(sim - sim_max)
            attn = ex / jnp.sum(ex, axis=1, keepdims=True)                   # (B, S)
            ctx = jnp.sum(attn[:, :, None] * enc, axis=1)                    # (B, H)

            # one MXU pass: [ctx|hd] @ [[w_ih_ctx, 0],[w_hh, w_ff]]
            #   lanes [0, 4H)   -> hidden-side gate contribution for THIS step
            #   lanes [4H, ...) -> logits of hd, i.e. the PREVIOUS step's output
            big = fused_step(ctx, hd, w_dec_ref)                             # (B, 4H+VP)
            if t > 0:
                out_ref[t - 1] = big[:, H4:] + b_ff_ref[...]
            gd = gates_d_in[t * batch:(t + 1) * batch, :] + big[:, :H4]
            hd, cd = gates_to_state(gd, cd)

        # logits of the final step (hd produced by the last iteration)
        w_ff_blk = w_dec_ref[hidden:2 * hidden, H4:H4 + pad_v]               # (H, VP)
        out_ref[dec_len - 1] = jnp.dot(
            hd, w_ff_blk, preferred_element_type=jnp.float32) + b_ff_ref[...]

    return kernel


def _const_spec(shape):
    nd = len(shape)
    return pl.BlockSpec(shape, lambda i, _nd=nd: (0,) * _nd)


# ------------------------------ full forward ---------------------------------
@jax.jit
def encoder_decoder_forward(source_melody, target_melody, params):
    S_, B_ = source_melody.shape
    Tm1 = target_melody.shape[0] - 1

    # ids flattened time-major: row r = t*B + b
    src_ids = source_melody.reshape(S_ * B_, 1).astype(jnp.int32)
    tgt_ids = target_melody[:Tm1].reshape(Tm1 * B_, 1).astype(jnp.int32)

    # ---- weight prep: fold embeddings into projections, fuse gate weights ----
    w_ih0, w_hh0, b0 = params["enc_lstm"][0]
    enc_proj0 = params["enc_emb"] @ w_ih0.T                              # (V, 4H)
    inputs = [src_ids, tgt_ids, enc_proj0, b0, w_hh0.T]
    for (w_ih_l, w_hh_l, b_l) in params["enc_lstm"][1:]:
        inputs += [jnp.concatenate([w_ih_l.T, w_hh_l.T], axis=0), b_l]   # (2H,4H),(1,4H)

    dec_w_ih = params["dec_w_ih"]                                        # (4H, E+H)
    dec_proj = params["dec_emb"] @ dec_w_ih[:, :E].T                     # (V, 4H)
    w_ih_c = dec_w_ih[:, E:].T                                           # (H, 4H)
    w_hh_d = params["dec_w_hh"].T                                        # (H, 4H)
    w_ff_p = jnp.pad(params["dec_w_ff"].T, ((0, 0), (0, VP - V)))        # (H, VP)
    b_ff_p = jnp.pad(params["dec_b_ff"], ((0, 0), (0, VP - V)))          # (1, VP)
    w_dec = jnp.concatenate(
        [jnp.concatenate([w_ih_c, jnp.zeros((H, VP), jnp.float32)], axis=1),
         jnp.concatenate([w_hh_d, w_ff_p], axis=1)], axis=0)             # (2H, 4H+VP)
    inputs += [dec_proj, params["dec_b"], w_dec, b_ff_p]

    in_specs = [_const_spec(a.shape) for a in inputs]

    out_pad = pl.pallas_call(
        make_fused_kernel(L, H, V, S_, Tm1, B_, VP),
        out_shape=jax.ShapeDtypeStruct((Tm1, B_, VP), jnp.float32),
        grid_spec=pltpu.PrefetchScalarGridSpec(
            num_scalar_prefetch=0,
            grid=(1,),
            in_specs=in_specs,
            out_specs=pl.BlockSpec((Tm1, B_, VP), lambda i: (0, 0, 0)),
            scratch_shapes=[pltpu.VMEM((B_, 2 * H), jnp.float32)]),
        compiler_params=pltpu.CompilerParams(
            dimension_semantics=("arbitrary",)),
    )(*inputs)
    return out_pad[..., :V]


# ------------------------------ pure-JAX reference ---------------------------
def reference_forward(source_melody, target_melody, params):
    src_emb = params["enc_emb"][source_melody]
    x = src_emb
    for (w_ih, w_hh, b) in params["enc_lstm"]:
        h = jnp.zeros((B, H), jnp.float32)
        c = jnp.zeros((B, H), jnp.float32)
        outs = []
        for t in range(x.shape[0]):
            gates = x[t] @ w_ih.T + h @ w_hh.T + b[0]
            i = jax.nn.sigmoid(gates[:, :H])
            f = jax.nn.sigmoid(gates[:, H:2 * H])
            g = jnp.tanh(gates[:, 2 * H:3 * H])
            o = jax.nn.sigmoid(gates[:, 3 * H:4 * H])
            c = f * c + i * g
            h = o * jnp.tanh(c)
            outs.append(h)
        x = jnp.stack(outs)
    enc = x                                           # (S, B, H)

    h = jnp.zeros((B, H), jnp.float32)
    c = jnp.zeros((B, H), jnp.float32)
    w_ih, w_hh, b_cell = params["dec_w_ih"], params["dec_w_hh"], params["dec_b"]
    w_ff, b_ff = params["dec_w_ff"], params["dec_b_ff"]
    outs = []
    for t in range(1, target_melody.shape[0]):
        emb = params["dec_emb"][target_melody[t - 1]]              # (B, E)
        dot = jnp.sum(enc * h[None], axis=-1)                      # (S, B)
        h_norm = jnp.sqrt(jnp.sum(h * h, axis=-1))                 # (B,)
        enc_norm = jnp.sqrt(jnp.sum(enc * enc, axis=-1))           # (S, B)
        sim = dot / jnp.maximum(h_norm[None, :] * enc_norm, EPS)
        attn = jax.nn.softmax(sim, axis=0)
        ctx = jnp.sum(attn[:, :, None] * enc, axis=0)              # (B, H)
        x_in = jnp.concatenate([emb, ctx], axis=1)
        gates = x_in @ w_ih.T + h @ w_hh.T + b_cell[0]
        i = jax.nn.sigmoid(gates[:, :H])
        f = jax.nn.sigmoid(gates[:, H:2 * H])
        g = jnp.tanh(gates[:, 2 * H:3 * H])
        o = jax.nn.sigmoid(gates[:, 3 * H:4 * H])
        c = f * c + i * g
        h = o * jnp.tanh(c)
        outs.append(h @ w_ff.T + b_ff[0])
    return jnp.stack(outs)


# ------------------------------ parameter init --------------------------------
def init_params(key):
    ks = jax.random.split(key, 16)
    scale = 1.0 / float(np.sqrt(H))

    def u(k, shape):
        return jax.random.uniform(k, shape, jnp.float32, -scale, scale)

    params = {}
    params["enc_emb"] = 0.1 * jax.random.normal(ks[0], (V, E), jnp.float32)
    enc_lstm = []
    for l in range(L):
        in_dim = E if l == 0 else H
        w_ih = u(ks[1 + 3 * l], (4 * H, in_dim))
        w_hh = u(ks[2 + 3 * l], (4 * H, H))
        b = u(ks[3 + 3 * l], (1, 4 * H))      # combined b_ih + b_hh
        enc_lstm.append((w_ih, w_hh, b))
    params["enc_lstm"] = enc_lstm
    params["dec_emb"] = 0.1 * jax.random.normal(ks[7], (V, E), jnp.float32)
    params["dec_w_ih"] = u(ks[8], (4 * H, E + H))
    params["dec_w_hh"] = u(ks[9], (4 * H, H))
    params["dec_b"] = u(ks[10], (1, 4 * H))
    params["dec_w_ff"] = u(ks[11], (V, H))
    params["dec_b_ff"] = u(ks[12], (1, V))
    return params


if __name__ == "__main__":
    key = jax.random.PRNGKey(0)
    kp, ks, kt = jax.random.split(key, 3)
    params = init_params(kp)
    source_melody = jax.random.randint(ks, (S, B), 0, V, dtype=jnp.int32)
    target_melody = jax.random.randint(kt, (T, B), 0, V, dtype=jnp.int32)

    out = encoder_decoder_forward(source_melody, target_melody, params)
    out = jax.block_until_ready(out)
    assert out.shape == (T - 1, B, V), out.shape

    ref = reference_forward(source_melody, target_melody, params)
    np.testing.assert_allclose(np.asarray(out), np.asarray(ref),
                               rtol=1e-4, atol=1e-4)
    print("KERNEL_OK")
</pallas_src>

<mosaic_0001>
module attributes {stable_mosaic.version = 11 : i64} {
  func.func @kernel(%arg0: i32, %arg1: memref<16x1xi32, #tpu.memory_space<vmem>>, %arg2: memref<10x1xi32, #tpu.memory_space<vmem>>, %arg3: memref<20x128xf32, #tpu.memory_space<vmem>>, %arg4: memref<1x128xf32, #tpu.memory_space<vmem>>, %arg5: memref<32x128xf32, #tpu.memory_space<vmem>>, %arg6: memref<64x128xf32, #tpu.memory_space<vmem>>, %arg7: memref<1x128xf32, #tpu.memory_space<vmem>>, %arg8: memref<20x128xf32, #tpu.memory_space<vmem>>, %arg9: memref<1x128xf32, #tpu.memory_space<vmem>>, %arg10: memref<64x256xf32, #tpu.memory_space<vmem>>, %arg11: memref<1x128xf32, #tpu.memory_space<vmem>>, %arg12: memref<5x2x128xf32, #tpu.memory_space<vmem>>, %arg13: memref<2x64xf32, #tpu.memory_space<vmem>>) attributes {dimension_semantics = [#tpu.dimension_semantics<arbitrary>], iteration_bounds = array<i64: 1>, scalar_prefetch = 0 : i64, scratch_operands = 1 : i64, tpu.core_type = #tpu.core_type<tc>, window_params = [{pipeline_mode = #tpu.pipeline_mode<synchronous>, transform_indices = @transform_0, window_bounds = array<i64: 16, 1>}, {pipeline_mode = #tpu.pipeline_mode<synchronous>, transform_indices = @transform_1, window_bounds = array<i64: 10, 1>}, {pipeline_mode = #tpu.pipeline_mode<synchronous>, transform_indices = @transform_2, window_bounds = array<i64: 20, 128>}, {pipeline_mode = #tpu.pipeline_mode<synchronous>, transform_indices = @transform_3, window_bounds = array<i64: 1, 128>}, {pipeline_mode = #tpu.pipeline_mode<synchronous>, transform_indices = @transform_4, window_bounds = array<i64: 32, 128>}, {pipeline_mode = #tpu.pipeline_mode<synchronous>, transform_indices = @transform_5, window_bounds = array<i64: 64, 128>}, {pipeline_mode = #tpu.pipeline_mode<synchronous>, transform_indices = @transform_6, window_bounds = array<i64: 1, 128>}, {pipeline_mode = #tpu.pipeline_mode<synchronous>, transform_indices = @transform_7, window_bounds = array<i64: 20, 128>}, {pipeline_mode = #tpu.pipeline_mode<synchronous>, transform_indices = @transform_8, window_bounds = array<i64: 1, 128>}, {pipeline_mode = #tpu.pipeline_mode<synchronous>, transform_indices = @transform_9, window_bounds = array<i64: 64, 256>}, {pipeline_mode = #tpu.pipeline_mode<synchronous>, transform_indices = @transform_10, window_bounds = array<i64: 1, 128>}, {pipeline_mode = #tpu.pipeline_mode<synchronous>, transform_indices = @transform_11, window_bounds = array<i64: 5, 2, 128>}]} {
    %0 = tpu.iota {dimensions = array<i32: 1>} : vector<16x20xi32>
    %c0 = arith.constant 0 : index
    %c0_0 = arith.constant 0 : index
    %1 = vector.load %arg1[%c0, %c0_0] : memref<16x1xi32, #tpu.memory_space<vmem>>, vector<16x1xi32>
    %2 = vector.broadcast %1 : vector<16x1xi32> to vector<16x20xi32>
    %3 = arith.cmpi eq, %2, %0 : vector<16x20xi32>
    %4 = arith.extui %3 : vector<16x20xi1> to vector<16x20xi32>
    %5 = arith.sitofp %4 : vector<16x20xi32> to vector<16x20xf32>
    %c0_1 = arith.constant 0 : index
    %c0_2 = arith.constant 0 : index
    %6 = vector.load %arg3[%c0_1, %c0_2] : memref<20x128xf32, #tpu.memory_space<vmem>>, vector<20x128xf32>
    %cst = arith.constant dense<0.000000e+00> : vector<16x128xf32>
    %7 = tpu.matmul %5, %6, %cst {dimension_numbers = #tpu.dot_dimension_numbers<[1], [0], [0], [1], [0, 0, 1, 1], [], []>} : vector<16x20xf32>, vector<20x128xf32>, vector<16x128xf32> -> vector<16x128xf32>
    %c0_3 = arith.constant 0 : index
    %c0_4 = arith.constant 0 : index
    %8 = vector.load %arg4[%c0_3, %c0_4] : memref<1x128xf32, #tpu.memory_space<vmem>>, vector<1x128xf32>
    %9 = vector.broadcast %8 : vector<1x128xf32> to vector<16x128xf32>
    %10 = arith.addf %7, %9 : vector<16x128xf32>
    %11 = tpu.iota {dimensions = array<i32: 1>} : vector<10x20xi32>
    %c0_5 = arith.constant 0 : index
    %c0_6 = arith.constant 0 : index
    %12 = vector.load %arg2[%c0_5, %c0_6] : memref<10x1xi32, #tpu.memory_space<vmem>>, vector<10x1xi32>
    %13 = vector.broadcast %12 : vector<10x1xi32> to vector<10x20xi32>
    %14 = arith.cmpi eq, %13, %11 : vector<10x20xi32>
    %15 = arith.extui %14 : vector<10x20xi1> to vector<10x20xi32>
    %16 = arith.sitofp %15 : vector<10x20xi32> to vector<10x20xf32>
    %c0_7 = arith.constant 0 : index
    %c0_8 = arith.constant 0 : index
    %17 = vector.load %arg8[%c0_7, %c0_8] : memref<20x128xf32, #tpu.memory_space<vmem>>, vector<20x128xf32>
    %cst_9 = arith.constant dense<0.000000e+00> : vector<10x128xf32>
    %18 = tpu.matmul %16, %17, %cst_9 {dimension_numbers = #tpu.dot_dimension_numbers<[1], [0], [0], [1], [0, 0, 1, 1], [], []>} : vector<10x20xf32>, vector<20x128xf32>, vector<10x128xf32> -> vector<10x128xf32>
    %c0_10 = arith.constant 0 : index
    %c0_11 = arith.constant 0 : index
    %19 = vector.load %arg9[%c0_10, %c0_11] : memref<1x128xf32, #tpu.memory_space<vmem>>, vector<1x128xf32>
    %20 = vector.broadcast %19 : vector<1x128xf32> to vector<10x128xf32>
    %21 = arith.addf %18, %20 : vector<10x128xf32>
    %cst_12 = arith.constant 0.000000e+00 : f32
    %22 = vector.broadcast %cst_12 : f32 to vector<2x32xf32>
    %cst_13 = arith.constant 0.000000e+00 : f32
    %23 = vector.broadcast %cst_13 : f32 to vector<2x8x32xf32>
    %24 = tpu.iota {dimensions = array<i32: 1>} : vector<2x8x32xi32>
    %25 = vector.extract_strided_slice %10 {offsets = [0, 0], sizes = [2, 128], strides = [1, 1]} : vector<16x128xf32> to vector<2x128xf32>
    %c0_14 = arith.constant 0 : index
    %c0_15 = arith.constant 0 : index
    %26 = vector.load %arg5[%c0_14, %c0_15] : memref<32x128xf32, #tpu.memory_space<vmem>>, vector<32x128xf32>
    %cst_16 = arith.constant dense<0.000000e+00> : vector<2x128xf32>
    %27 = tpu.matmul %22, %26, %cst_16 {dimension_numbers = #tpu.dot_dimension_numbers<[1], [0], [0], [1], [0, 0, 1, 1], [], []>} : vector<2x32xf32>, vector<32x128xf32>, vector<2x128xf32> -> vector<2x128xf32>
    %28 = arith.addf %25, %27 : vector<2x128xf32>
    %29 = arith.negf %28 : vector<2x128xf32>
    %30 = math.exp %29 : vector<2x128xf32>
    %cst_17 = arith.constant 1.000000e+00 : f32
    %31 = vector.broadcast %cst_17 : f32 to vector<2x128xf32>
    %32 = arith.addf %31, %30 : vector<2x128xf32>
    %33 = arith.divf %31, %32 : vector<2x128xf32>
    %34 = math.tanh %28 : vector<2x128xf32>
    %35 = vector.extract_strided_slice %33 {offsets = [0, 0], sizes = [2, 32], strides = [1, 1]} : vector<2x128xf32> to vector<2x32xf32>
    %36 = vector.extract_strided_slice %33 {offsets = [0, 32], sizes = [2, 32], strides = [1, 1]} : vector<2x128xf32> to vector<2x32xf32>
    %37 = vector.extract_strided_slice %34 {offsets = [0, 64], sizes = [2, 32], strides = [1, 1]} : vector<2x128xf32> to vector<2x32xf32>
    %38 = vector.extract_strided_slice %33 {offsets = [0, 96], sizes = [2, 32], strides = [1, 1]} : vector<2x128xf32> to vector<2x32xf32>
    %39 = arith.mulf %36, %22 : vector<2x32xf32>
    %40 = arith.mulf %35, %37 : vector<2x32xf32>
    %41 = arith.addf %39, %40 : vector<2x32xf32>
    %42 = math.tanh %41 : vector<2x32xf32>
    %43 = arith.mulf %38, %42 : vector<2x32xf32>
    %c0_18 = arith.constant 0 : index
    %c0_19 = arith.constant 0 : index
    %44 = vector.load %arg13[%c0_18, %c0_19] : memref<2x64xf32, #tpu.memory_space<vmem>>, vector<2x32xf32>
    tpu.vector_store %arg13[%c0_18, %c0_19], %43 {strides = array<i32>} : memref<2x64xf32, #tpu.memory_space<vmem>>, vector<2x32xf32>,
    %c0_20 = arith.constant 0 : index
    %c32 = arith.constant 32 : index
    %45 = vector.load %arg13[%c0_20, %c32] : memref<2x64xf32, #tpu.memory_space<vmem>>, vector<2x32xf32>
    tpu.vector_store %arg13[%c0_20, %c32], %22 {strides = array<i32>} : memref<2x64xf32, #tpu.memory_space<vmem>>, vector<2x32xf32>,
    %c0_21 = arith.constant 0 : index
    %c0_22 = arith.constant 0 : index
    %46 = vector.load %arg13[%c0_21, %c0_22] : memref<2x64xf32, #tpu.memory_space<vmem>>, vector<2x64xf32>
    %c0_23 = arith.constant 0 : index
    %c0_24 = arith.constant 0 : index
    %47 = vector.load %arg6[%c0_23, %c0_24] : memref<64x128xf32, #tpu.memory_space<vmem>>, vector<64x128xf32>
    %cst_25 = arith.constant dense<0.000000e+00> : vector<2x128xf32>
    %48 = tpu.matmul %46, %47, %cst_25 {dimension_numbers = #tpu.dot_dimension_numbers<[1], [0], [0], [1], [0, 0, 1, 1], [], []>} : vector<2x64xf32>, vector<64x128xf32>, vector<2x128xf32> -> vector<2x128xf32>
    %c0_26 = arith.constant 0 : index
    %c0_27 = arith.constant 0 : index
    %49 = vector.load %arg7[%c0_26, %c0_27] : memref<1x128xf32, #tpu.memory_space<vmem>>, vector<1x128xf32>
    %50 = vector.broadcast %49 : vector<1x128xf32> to vector<2x128xf32>
    %51 = arith.addf %48, %50 : vector<2x128xf32>
    %52 = arith.negf %51 : vector<2x128xf32>
    %53 = math.exp %52 : vector<2x128xf32>
    %cst_28 = arith.constant 1.000000e+00 : f32
    %54 = vector.broadcast %cst_28 : f32 to vector<2x128xf32>
    %55 = arith.addf %54, %53 : vector<2x128xf32>
    %56 = arith.divf %54, %55 : vector<2x128xf32>
    %57 = math.tanh %51 : vector<2x128xf32>
    %58 = vector.extract_strided_slice %56 {offsets = [0, 0], sizes = [2, 32], strides = [1, 1]} : vector<2x128xf32> to vector<2x32xf32>
    %59 = vector.extract_strided_slice %56 {offsets = [0, 32], sizes = [2, 32], strides = [1, 1]} : vector<2x128xf32> to vector<2x32xf32>
    %60 = vector.extract_strided_slice %57 {offsets = [0, 64], sizes = [2, 32], strides = [1, 1]} : vector<2x128xf32> to vector<2x32xf32>
    %61 = vector.extract_strided_slice %56 {offsets = [0, 96], sizes = [2, 32], strides = [1, 1]} : vector<2x128xf32> to vector<2x32xf32>
    %62 = arith.mulf %59, %22 : vector<2x32xf32>
    %63 = arith.mulf %58, %60 : vector<2x32xf32>
    %64 = arith.addf %62, %63 : vector<2x32xf32>
    %65 = math.tanh %64 : vector<2x32xf32>
    %66 = arith.mulf %61, %65 : vector<2x32xf32>
    %c0_i32 = arith.constant 0 : i32
    %67 = vector.broadcast %c0_i32 : i32 to vector<2x8x32xi32>
    %68 = arith.cmpi eq, %24, %67 : vector<2x8x32xi32>
    %69 = vector.shape_cast %66 : vector<2x32xf32> to vector<2x1x32xf32>
    %70 = vector.shape_cast %69 : vector<2x1x32xf32> to vector<2x1x32xf32>
    %71 = vector.broadcast %70 : vector<2x1x32xf32> to vector<2x8x32xf32>
    %72 = arith.select %68, %71, %23 : vector<2x8x32xi1>, vector<2x8x32xf32>
    %73 = vector.extract_strided_slice %10 {offsets = [2, 0], sizes = [2, 128], strides = [1, 1]} : vector<16x128xf32> to vector<2x128xf32>
    %c0_29 = arith.constant 0 : index
    %c0_30 = arith.constant 0 : index
    %74 = vector.load %arg5[%c0_29, %c0_30] : memref<32x128xf32, #tpu.memory_space<vmem>>, vector<32x128xf32>
    %cst_31 = arith.constant dense<0.000000e+00> : vector<2x128xf32>
    %75 = tpu.matmul %43, %74, %cst_31 {dimension_numbers = #tpu.dot_dimension_numbers<[1], [0], [0], [1], [0, 0, 1, 1], [], []>} : vector<2x32xf32>, vector<32x128xf32>, vector<2x128xf32> -> vector<2x128xf32>
    %76 = arith.addf %73, %75 : vector<2x128xf32>
    %77 = arith.negf %76 : vector<2x128xf32>
    %78 = math.exp %77 : vector<2x128xf32>
    %cst_32 = arith.constant 1.000000e+00 : f32
    %79 = vector.broadcast %cst_32 : f32 to vector<2x128xf32>
    %80 = arith.addf %79, %78 : vector<2x128xf32>
    %81 = arith.divf %79, %80 : vector<2x128xf32>
    %82 = math.tanh %76 : vector<2x128xf32>
    %83 = vector.extract_strided_slice %81 {offsets = [0, 0], sizes = [2, 32], strides = [1, 1]} : vector<2x128xf32> to vector<2x32xf32>
    %84 = vector.extract_strided_slice %81 {offsets = [0, 32], sizes = [2, 32], strides = [1, 1]} : vector<2x128xf32> to vector<2x32xf32>
    %85 = vector.extract_strided_slice %82 {offsets = [0, 64], sizes = [2, 32], strides = [1, 1]} : vector<2x128xf32> to vector<2x32xf32>
    %86 = vector.extract_strided_slice %81 {offsets = [0, 96], sizes = [2, 32], strides = [1, 1]} : vector<2x128xf32> to vector<2x32xf32>
    %87 = arith.mulf %84, %41 : vector<2x32xf32>
    %88 = arith.mulf %83, %85 : vector<2x32xf32>
    %89 = arith.addf %87, %88 : vector<2x32xf32>
    %90 = math.tanh %89 : vector<2x32xf32>
    %91 = arith.mulf %86, %90 : vector<2x32xf32>
    %c0_33 = arith.constant 0 : index
    %c0_34 = arith.constant 0 : index
    %92 = vector.load %arg13[%c0_33, %c0_34] : memref<2x64xf32, #tpu.memory_space<vmem>>, vector<2x32xf32>
    tpu.vector_store %arg13[%c0_33, %c0_34], %91 {strides = array<i32>} : memref<2x64xf32, #tpu.memory_space<vmem>>, vector<2x32xf32>,
    %c0_35 = arith.constant 0 : index
    %c32_36 = arith.constant 32 : index
    %93 = vector.load %arg13[%c0_35, %c32_36] : memref<2x64xf32, #tpu.memory_space<vmem>>, vector<2x32xf32>
    tpu.vector_store %arg13[%c0_35, %c32_36], %66 {strides = array<i32>} : memref<2x64xf32, #tpu.memory_space<vmem>>, vector<2x32xf32>,
    %c0_37 = arith.constant 0 : index
    %c0_38 = arith.constant 0 : index
    %94 = vector.load %arg13[%c0_37, %c0_38] : memref<2x64xf32, #tpu.memory_space<vmem>>, vector<2x64xf32>
    %c0_39 = arith.constant 0 : index
    %c0_40 = arith.constant 0 : index
    %95 = vector.load %arg6[%c0_39, %c0_40] : memref<64x128xf32, #tpu.memory_space<vmem>>, vector<64x128xf32>
    %cst_41 = arith.constant dense<0.000000e+00> : vector<2x128xf32>
    %96 = tpu.matmul %94, %95, %cst_41 {dimension_numbers = #tpu.dot_dimension_numbers<[1], [0], [0], [1], [0, 0, 1, 1], [], []>} : vector<2x64xf32>, vector<64x128xf32>, vector<2x128xf32> -> vector<2x128xf32>
    %c0_42 = arith.constant 0 : index
    %c0_43 = arith.constant 0 : index
    %97 = vector.load %arg7[%c0_42, %c0_43] : memref<1x128xf32, #tpu.memory_space<vmem>>, vector<1x128xf32>
    %98 = vector.broadcast %97 : vector<1x128xf32> to vector<2x128xf32>
    %99 = arith.addf %96, %98 : vector<2x128xf32>
    %100 = arith.negf %99 : vector<2x128xf32>
    %101 = math.exp %100 : vector<2x128xf32>
    %cst_44 = arith.constant 1.000000e+00 : f32
    %102 = vector.broadcast %cst_44 : f32 to vector<2x128xf32>
    %103 = arith.addf %102, %101 : vector<2x128xf32>
    %104 = arith.divf %102, %103 : vector<2x128xf32>
    %105 = math.tanh %99 : vector<2x128xf32>
    %106 = vector.extract_strided_slice %104 {offsets = [0, 0], sizes = [2, 32], strides = [1, 1]} : vector<2x128xf32> to vector<2x32xf32>
    %107 = vector.extract_strided_slice %104 {offsets = [0, 32], sizes = [2, 32], strides = [1, 1]} : vector<2x128xf32> to vector<2x32xf32>
    %108 = vector.extract_strided_slice %105 {offsets = [0, 64], sizes = [2, 32], strides = [1, 1]} : vector<2x128xf32> to vector<2x32xf32>
    %109 = vector.extract_strided_slice %104 {offsets = [0, 96], sizes = [2, 32], strides = [1, 1]} : vector<2x128xf32> to vector<2x32xf32>
    %110 = arith.mulf %107, %64 : vector<2x32xf32>
    %111 = arith.mulf %106, %108 : vector<2x32xf32>
    %112 = arith.addf %110, %111 : vector<2x32xf32>
    %113 = math.tanh %112 : vector<2x32xf32>
    %114 = arith.mulf %109, %113 : vector<2x32xf32>
    %c1_i32 = arith.constant 1 : i32
    %115 = vector.broadcast %c1_i32 : i32 to vector<2x8x32xi32>
    %116 = arith.cmpi eq, %24, %115 : vector<2x8x32xi32>
    %117 = vector.shape_cast %114 : vector<2x32xf32> to vector<2x1x32xf32>
    %118 = vector.shape_cast %117 : vector<2x1x32xf32> to vector<2x1x32xf32>
    %119 = vector.broadcast %118 : vector<2x1x32xf32> to vector<2x8x32xf32>
    %120 = arith.select %116, %119, %72 : vector<2x8x32xi1>, vector<2x8x32xf32>
    %121 = vector.extract_strided_slice %10 {offsets = [4, 0], sizes = [2, 128], strides = [1, 1]} : vector<16x128xf32> to vector<2x128xf32>
    %c0_45 = arith.constant 0 : index
    %c0_46 = arith.constant 0 : index
    %122 = vector.load %arg5[%c0_45, %c0_46] : memref<32x128xf32, #tpu.memory_space<vmem>>, vector<32x128xf32>
    %cst_47 = arith.constant dense<0.000000e+00> : vector<2x128xf32>
    %123 = tpu.matmul %91, %122, %cst_47 {dimension_numbers = #tpu.dot_dimension_numbers<[1], [0], [0], [1], [0, 0, 1, 1], [], []>} : vector<2x32xf32>, vector<32x128xf32>, vector<2x128xf32> -> vector<2x128xf32>
    %124 = arith.addf %121, %123 : vector<2x128xf32>
    %125 = arith.negf %124 : vector<2x128xf32>
    %126 = math.exp %125 : vector<2x128xf32>
    %cst_48 = arith.constant 1.000000e+00 : f32
    %127 = vector.broadcast %cst_48 : f32 to vector<2x128xf32>
    %128 = arith.addf %127, %126 : vector<2x128xf32>
    %129 = arith.divf %127, %128 : vector<2x128xf32>
    %130 = math.tanh %124 : vector<2x128xf32>
    %131 = vector.extract_strided_slice %129 {offsets = [0, 0], sizes = [2, 32], strides = [1, 1]} : vector<2x128xf32> to vector<2x32xf32>
    %132 = vector.extract_strided_slice %129 {offsets = [0, 32], sizes = [2, 32], strides = [1, 1]} : vector<2x128xf32> to vector<2x32xf32>
    %133 = vector.extract_strided_slice %130 {offsets = [0, 64], sizes = [2, 32], strides = [1, 1]} : vector<2x128xf32> to vector<2x32xf32>
    %134 = vector.extract_strided_slice %129 {offsets = [0, 96], sizes = [2, 32], strides = [1, 1]} : vector<2x128xf32> to vector<2x32xf32>
    %135 = arith.mulf %132, %89 : vector<2x32xf32>
    %136 = arith.mulf %131, %133 : vector<2x32xf32>
    %137 = arith.addf %135, %136 : vector<2x32xf32>
    %138 = math.tanh %137 : vector<2x32xf32>
    %139 = arith.mulf %134, %138 : vector<2x32xf32>
    %c0_49 = arith.constant 0 : index
    %c0_50 = arith.constant 0 : index
    %140 = vector.load %arg13[%c0_49, %c0_50] : memref<2x64xf32, #tpu.memory_space<vmem>>, vector<2x32xf32>
    tpu.vector_store %arg13[%c0_49, %c0_50], %139 {strides = array<i32>} : memref<2x64xf32, #tpu.memory_space<vmem>>, vector<2x32xf32>,
    %c0_51 = arith.constant 0 : index
    %c32_52 = arith.constant 32 : index
    %141 = vector.load %arg13[%c0_51, %c32_52] : memref<2x64xf32, #tpu.memory_space<vmem>>, vector<2x32xf32>
    tpu.vector_store %arg13[%c0_51, %c32_52], %114 {strides = array<i32>} : memref<2x64xf32, #tpu.memory_space<vmem>>, vector<2x32xf32>,
    %c0_53 = arith.constant 0 : index
    %c0_54 = arith.constant 0 : index
    %142 = vector.load %arg13[%c0_53, %c0_54] : memref<2x64xf32, #tpu.memory_space<vmem>>, vector<2x64xf32>
    %c0_55 = arith.constant 0 : index
    %c0_56 = arith.constant 0 : index
    %143 = vector.load %arg6[%c0_55, %c0_56] : memref<64x128xf32, #tpu.memory_space<vmem>>, vector<64x128xf32>
    %cst_57 = arith.constant dense<0.000000e+00> : vector<2x128xf32>
    %144 = tpu.matmul %142, %143, %cst_57 {dimension_numbers = #tpu.dot_dimension_numbers<[1], [0], [0], [1], [0, 0, 1, 1], [], []>} : vector<2x64xf32>, vector<64x128xf32>, vector<2x128xf32> -> vector<2x128xf32>
    %c0_58 = arith.constant 0 : index
    %c0_59 = arith.constant 0 : index
    %145 = vector.load %arg7[%c0_58, %c0_59] : memref<1x128xf32, #tpu.memory_space<vmem>>, vector<1x128xf32>
    %146 = vector.broadcast %145 : vector<1x128xf32> to vector<2x128xf32>
    %147 = arith.addf %144, %146 : vector<2x128xf32>
    %148 = arith.negf %147 : vector<2x128xf32>
    %149 = math.exp %148 : vector<2x128xf32>
    %cst_60 = arith.constant 1.000000e+00 : f32
    %150 = vector.broadcast %cst_60 : f32 to vector<2x128xf32>
    %151 = arith.addf %150, %149 : vector<2x128xf32>
    %152 = arith.divf %150, %151 : vector<2x128xf32>
    %153 = math.tanh %147 : vector<2x128xf32>
    %154 = vector.extract_strided_slice %152 {offsets = [0, 0], sizes = [2, 32], strides = [1, 1]} : vector<2x128xf32> to vector<2x32xf32>
    %155 = vector.extract_strided_slice %152 {offsets = [0, 32], sizes = [2, 32], strides = [1, 1]} : vector<2x128xf32> to vector<2x32xf32>
    %156 = vector.extract_strided_slice %153 {offsets = [0, 64], sizes = [2, 32], strides = [1, 1]} : vector<2x128xf32> to vector<2x32xf32>
    %157 = vector.extract_strided_slice %152 {offsets = [0, 96], sizes = [2, 32], strides = [1, 1]} : vector<2x128xf32> to vector<2x32xf32>
    %158 = arith.mulf %155, %112 : vector<2x32xf32>
    %159 = arith.mulf %154, %156 : vector<2x32xf32>
    %160 = arith.addf %158, %159 : vector<2x32xf32>
    %161 = math.tanh %160 : vector<2x32xf32>
    %162 = arith.mulf %157, %161 : vector<2x32xf32>
    %c2_i32 = arith.constant 2 : i32
    %163 = vector.broadcast %c2_i32 : i32 to vector<2x8x32xi32>
    %164 = arith.cmpi eq, %24, %163 : vector<2x8x32xi32>
    %165 = vector.shape_cast %162 : vector<2x32xf32> to vector<2x1x32xf32>
    %166 = vector.shape_cast %165 : vector<2x1x32xf32> to vector<2x1x32xf32>
    %167 = vector.broadcast %166 : vector<2x1x32xf32> to vector<2x8x32xf32>
    %168 = arith.select %164, %167, %120 : vector<2x8x32xi1>, vector<2x8x32xf32>
    %169 = vector.extract_strided_slice %10 {offsets = [6, 0], sizes = [2, 128], strides = [1, 1]} : vector<16x128xf32> to vector<2x128xf32>
    %c0_61 = arith.constant 0 : index
    %c0_62 = arith.constant 0 : index
    %170 = vector.load %arg5[%c0_61, %c0_62] : memref<32x128xf32, #tpu.memory_space<vmem>>, vector<32x128xf32>
    %cst_63 = arith.constant dense<0.000000e+00> : vector<2x128xf32>
    %171 = tpu.matmul %139, %170, %cst_63 {dimension_numbers = #tpu.dot_dimension_numbers<[1], [0], [0], [1], [0, 0, 1, 1], [], []>} : vector<2x32xf32>, vector<32x128xf32>, vector<2x128xf32> -> vector<2x128xf32>
    %172 = arith.addf %169, %171 : vector<2x128xf32>
    %173 = arith.negf %172 : vector<2x128xf32>
    %174 = math.exp %173 : vector<2x128xf32>
    %cst_64 = arith.constant 1.000000e+00 : f32
    %175 = vector.broadcast %cst_64 : f32 to vector<2x128xf32>
    %176 = arith.addf %175, %174 : vector<2x128xf32>
    %177 = arith.divf %175, %176 : vector<2x128xf32>
    %178 = math.tanh %172 : vector<2x128xf32>
    %179 = vector.extract_strided_slice %177 {offsets = [0, 0], sizes = [2, 32], strides = [1, 1]} : vector<2x128xf32> to vector<2x32xf32>
    %180 = vector.extract_strided_slice %177 {offsets = [0, 32], sizes = [2, 32], strides = [1, 1]} : vector<2x128xf32> to vector<2x32xf32>
    %181 = vector.extract_strided_slice %178 {offsets = [0, 64], sizes = [2, 32], strides = [1, 1]} : vector<2x128xf32> to vector<2x32xf32>
    %182 = vector.extract_strided_slice %177 {offsets = [0, 96], sizes = [2, 32], strides = [1, 1]} : vector<2x128xf32> to vector<2x32xf32>
    %183 = arith.mulf %180, %137 : vector<2x32xf32>
    %184 = arith.mulf %179, %181 : vector<2x32xf32>
    %185 = arith.addf %183, %184 : vector<2x32xf32>
    %186 = math.tanh %185 : vector<2x32xf32>
    %187 = arith.mulf %182, %186 : vector<2x32xf32>
    %c0_65 = arith.constant 0 : index
    %c0_66 = arith.constant 0 : index
    %188 = vector.load %arg13[%c0_65, %c0_66] : memref<2x64xf32, #tpu.memory_space<vmem>>, vector<2x32xf32>
    tpu.vector_store %arg13[%c0_65, %c0_66], %187 {strides = array<i32>} : memref<2x64xf32, #tpu.memory_space<vmem>>, vector<2x32xf32>,
    %c0_67 = arith.constant 0 : index
    %c32_68 = arith.constant 32 : index
    %189 = vector.load %arg13[%c0_67, %c32_68] : memref<2x64xf32, #tpu.memory_space<vmem>>, vector<2x32xf32>
    tpu.vector_store %arg13[%c0_67, %c32_68], %162 {strides = array<i32>} : memref<2x64xf32, #tpu.memory_space<vmem>>, vector<2x32xf32>,
    %c0_69 = arith.constant 0 : index
    %c0_70 = arith.constant 0 : index
    %190 = vector.load %arg13[%c0_69, %c0_70] : memref<2x64xf32, #tpu.memory_space<vmem>>, vector<2x64xf32>
    %c0_71 = arith.constant 0 : index
    %c0_72 = arith.constant 0 : index
    %191 = vector.load %arg6[%c0_71, %c0_72] : memref<64x128xf32, #tpu.memory_space<vmem>>, vector<64x128xf32>
    %cst_73 = arith.constant dense<0.000000e+00> : vector<2x128xf32>
    %192 = tpu.matmul %190, %191, %cst_73 {dimension_numbers = #tpu.dot_dimension_numbers<[1], [0], [0], [1], [0, 0, 1, 1], [], []>} : vector<2x64xf32>, vector<64x128xf32>, vector<2x128xf32> -> vector<2x128xf32>
    %c0_74 = arith.constant 0 : index
    %c0_75 = arith.constant 0 : index
    %193 = vector.load %arg7[%c0_74, %c0_75] : memref<1x128xf32, #tpu.memory_space<vmem>>, vector<1x128xf32>
    %194 = vector.broadcast %193 : vector<1x128xf32> to vector<2x128xf32>
    %195 = arith.addf %192, %194 : vector<2x128xf32>
    %196 = arith.negf %195 : vector<2x128xf32>
    %197 = math.exp %196 : vector<2x128xf32>
    %cst_76 = arith.constant 1.000000e+00 : f32
    %198 = vector.broadcast %cst_76 : f32 to vector<2x128xf32>
    %199 = arith.addf %198, %197 : vector<2x128xf32>
    %200 = arith.divf %198, %199 : vector<2x128xf32>
    %201 = math.tanh %195 : vector<2x128xf32>
    %202 = vector.extract_strided_slice %200 {offsets = [0, 0], sizes = [2, 32], strides = [1, 1]} : vector<2x128xf32> to vector<2x32xf32>
    %203 = vector.extract_strided_slice %200 {offsets = [0, 32], sizes = [2, 32], strides = [1, 1]} : vector<2x128xf32> to vector<2x32xf32>
    %204 = vector.extract_strided_slice %201 {offsets = [0, 64], sizes = [2, 32], strides = [1, 1]} : vector<2x128xf32> to vector<2x32xf32>
    %205 = vector.extract_strided_slice %200 {offsets = [0, 96], sizes = [2, 32], strides = [1, 1]} : vector<2x128xf32> to vector<2x32xf32>
    %206 = arith.mulf %203, %160 : vector<2x32xf32>
    %207 = arith.mulf %202, %204 : vector<2x32xf32>
    %208 = arith.addf %206, %207 : vector<2x32xf32>
    %209 = math.tanh %208 : vector<2x32xf32>
    %210 = arith.mulf %205, %209 : vector<2x32xf32>
    %c3_i32 = arith.constant 3 : i32
    %211 = vector.broadcast %c3_i32 : i32 to vector<2x8x32xi32>
    %212 = arith.cmpi eq, %24, %211 : vector<2x8x32xi32>
    %213 = vector.shape_cast %210 : vector<2x32xf32> to vector<2x1x32xf32>
    %214 = vector.shape_cast %213 : vector<2x1x32xf32> to vector<2x1x32xf32>
    %215 = vector.broadcast %214 : vector<2x1x32xf32> to vector<2x8x32xf32>
    %216 = arith.select %212, %215, %168 : vector<2x8x32xi1>, vector<2x8x32xf32>
    %217 = vector.extract_strided_slice %10 {offsets = [8, 0], sizes = [2, 128], strides = [1, 1]} : vector<16x128xf32> to vector<2x128xf32>
    %c0_77 = arith.constant 0 : index
    %c0_78 = arith.constant 0 : index
    %218 = vector.load %arg5[%c0_77, %c0_78] : memref<32x128xf32, #tpu.memory_space<vmem>>, vector<32x128xf32>
    %cst_79 = arith.constant dense<0.000000e+00> : vector<2x128xf32>
    %219 = tpu.matmul %187, %218, %cst_79 {dimension_numbers = #tpu.dot_dimension_numbers<[1], [0], [0], [1], [0, 0, 1, 1], [], []>} : vector<2x32xf32>, vector<32x128xf32>, vector<2x128xf32> -> vector<2x128xf32>
    %220 = arith.addf %217, %219 : vector<2x128xf32>
    %221 = arith.negf %220 : vector<2x128xf32>
    %222 = math.exp %221 : vector<2x128xf32>
    %cst_80 = arith.constant 1.000000e+00 : f32
    %223 = vector.broadcast %cst_80 : f32 to vector<2x128xf32>
    %224 = arith.addf %223, %222 : vector<2x128xf32>
    %225 = arith.divf %223, %224 : vector<2x128xf32>
    %226 = math.tanh %220 : vector<2x128xf32>
    %227 = vector.extract_strided_slice %225 {offsets = [0, 0], sizes = [2, 32], strides = [1, 1]} : vector<2x128xf32> to vector<2x32xf32>
    %228 = vector.extract_strided_slice %225 {offsets = [0, 32], sizes = [2, 32], strides = [1, 1]} : vector<2x128xf32> to vector<2x32xf32>
    %229 = vector.extract_strided_slice %226 {offsets = [0, 64], sizes = [2, 32], strides = [1, 1]} : vector<2x128xf32> to vector<2x32xf32>
    %230 = vector.extract_strided_slice %225 {offsets = [0, 96], sizes = [2, 32], strides = [1, 1]} : vector<2x128xf32> to vector<2x32xf32>
    %231 = arith.mulf %228, %185 : vector<2x32xf32>
    %232 = arith.mulf %227, %229 : vector<2x32xf32>
    %233 = arith.addf %231, %232 : vector<2x32xf32>
    %234 = math.tanh %233 : vector<2x32xf32>
    %235 = arith.mulf %230, %234 : vector<2x32xf32>
    %c0_81 = arith.constant 0 : index
    %c0_82 = arith.constant 0 : index
    %236 = vector.load %arg13[%c0_81, %c0_82] : memref<2x64xf32, #tpu.memory_space<vmem>>, vector<2x32xf32>
    tpu.vector_store %arg13[%c0_81, %c0_82], %235 {strides = array<i32>} : memref<2x64xf32, #tpu.memory_space<vmem>>, vector<2x32xf32>,
    %c0_83 = arith.constant 0 : index
    %c32_84 = arith.constant 32 : index
    %237 = vector.load %arg13[%c0_83, %c32_84] : memref<2x64xf32, #tpu.memory_space<vmem>>, vector<2x32xf32>
    tpu.vector_store %arg13[%c0_83, %c32_84], %210 {strides = array<i32>} : memref<2x64xf32, #tpu.memory_space<vmem>>, vector<2x32xf32>,
    %c0_85 = arith.constant 0 : index
    %c0_86 = arith.constant 0 : index
    %238 = vector.load %arg13[%c0_85, %c0_86] : memref<2x64xf32, #tpu.memory_space<vmem>>, vector<2x64xf32>
    %c0_87 = arith.constant 0 : index
    %c0_88 = arith.constant 0 : index
    %239 = vector.load %arg6[%c0_87, %c0_88] : memref<64x128xf32, #tpu.memory_space<vmem>>, vector<64x128xf32>
    %cst_89 = arith.constant dense<0.000000e+00> : vector<2x128xf32>
    %240 = tpu.matmul %238, %239, %cst_89 {dimension_numbers = #tpu.dot_dimension_numbers<[1], [0], [0], [1], [0, 0, 1, 1], [], []>} : vector<2x64xf32>, vector<64x128xf32>, vector<2x128xf32> -> vector<2x128xf32>
    %c0_90 = arith.constant 0 : index
    %c0_91 = arith.constant 0 : index
    %241 = vector.load %arg7[%c0_90, %c0_91] : memref<1x128xf32, #tpu.memory_space<vmem>>, vector<1x128xf32>
    %242 = vector.broadcast %241 : vector<1x128xf32> to vector<2x128xf32>
    %243 = arith.addf %240, %242 : vector<2x128xf32>
    %244 = arith.negf %243 : vector<2x128xf32>
    %245 = math.exp %244 : vector<2x128xf32>
    %cst_92 = arith.constant 1.000000e+00 : f32
    %246 = vector.broadcast %cst_92 : f32 to vector<2x128xf32>
    %247 = arith.addf %246, %245 : vector<2x128xf32>
    %248 = arith.divf %246, %247 : vector<2x128xf32>
    %249 = math.tanh %243 : vector<2x128xf32>
    %250 = vector.extract_strided_slice %248 {offsets = [0, 0], sizes = [2, 32], strides = [1, 1]} : vector<2x128xf32> to vector<2x32xf32>
    %251 = vector.extract_strided_slice %248 {offsets = [0, 32], sizes = [2, 32], strides = [1, 1]} : vector<2x128xf32> to vector<2x32xf32>
    %252 = vector.extract_strided_slice %249 {offsets = [0, 64], sizes = [2, 32], strides = [1, 1]} : vector<2x128xf32> to vector<2x32xf32>
    %253 = vector.extract_strided_slice %248 {offsets = [0, 96], sizes = [2, 32], strides = [1, 1]} : vector<2x128xf32> to vector<2x32xf32>
    %254 = arith.mulf %251, %208 : vector<2x32xf32>
    %255 = arith.mulf %250, %252 : vector<2x32xf32>
    %256 = arith.addf %254, %255 : vector<2x32xf32>
    %257 = math.tanh %256 : vector<2x32xf32>
    %258 = arith.mulf %253, %257 : vector<2x32xf32>
    %c4_i32 = arith.constant 4 : i32
    %259 = vector.broadcast %c4_i32 : i32 to vector<2x8x32xi32>
    %260 = arith.cmpi eq, %24, %259 : vector<2x8x32xi32>
    %261 = vector.shape_cast %258 : vector<2x32xf32> to vector<2x1x32xf32>
    %262 = vector.shape_cast %261 : vector<2x1x32xf32> to vector<2x1x32xf32>
    %263 = vector.broadcast %262 : vector<2x1x32xf32> to vector<2x8x32xf32>
    %264 = arith.select %260, %263, %216 : vector<2x8x32xi1>, vector<2x8x32xf32>
    %265 = vector.extract_strided_slice %10 {offsets = [10, 0], sizes = [2, 128], strides = [1, 1]} : vector<16x128xf32> to vector<2x128xf32>
    %c0_93 = arith.constant 0 : index
    %c0_94 = arith.constant 0 : index
    %266 = vector.load %arg5[%c0_93, %c0_94] : memref<32x128xf32, #tpu.memory_space<vmem>>, vector<32x128xf32>
    %cst_95 = arith.constant dense<0.000000e+00> : vector<2x128xf32>
    %267 = tpu.matmul %235, %266, %cst_95 {dimension_numbers = #tpu.dot_dimension_numbers<[1], [0], [0], [1], [0, 0, 1, 1], [], []>} : vector<2x32xf32>, vector<32x128xf32>, vector<2x128xf32> -> vector<2x128xf32>
    %268 = arith.addf %265, %267 : vector<2x128xf32>
    %269 = arith.negf %268 : vector<2x128xf32>
    %270 = math.exp %269 : vector<2x128xf32>
    %cst_96 = arith.constant 1.000000e+00 : f32
    %271 = vector.broadcast %cst_96 : f32 to vector<2x128xf32>
    %272 = arith.addf %271, %270 : vector<2x128xf32>
    %273 = arith.divf %271, %272 : vector<2x128xf32>
    %274 = math.tanh %268 : vector<2x128xf32>
    %275 = vector.extract_strided_slice %273 {offsets = [0, 0], sizes = [2, 32], strides = [1, 1]} : vector<2x128xf32> to vector<2x32xf32>
    %276 = vector.extract_strided_slice %273 {offsets = [0, 32], sizes = [2, 32], strides = [1, 1]} : vector<2x128xf32> to vector<2x32xf32>
    %277 = vector.extract_strided_slice %274 {offsets = [0, 64], sizes = [2, 32], strides = [1, 1]} : vector<2x128xf32> to vector<2x32xf32>
    %278 = vector.extract_strided_slice %273 {offsets = [0, 96], sizes = [2, 32], strides = [1, 1]} : vector<2x128xf32> to vector<2x32xf32>
    %279 = arith.mulf %276, %233 : vector<2x32xf32>
    %280 = arith.mulf %275, %277 : vector<2x32xf32>
    %281 = arith.addf %279, %280 : vector<2x32xf32>
    %282 = math.tanh %281 : vector<2x32xf32>
    %283 = arith.mulf %278, %282 : vector<2x32xf32>
    %c0_97 = arith.constant 0 : index
    %c0_98 = arith.constant 0 : index
    %284 = vector.load %arg13[%c0_97, %c0_98] : memref<2x64xf32, #tpu.memory_space<vmem>>, vector<2x32xf32>
    tpu.vector_store %arg13[%c0_97, %c0_98], %283 {strides = array<i32>} : memref<2x64xf32, #tpu.memory_space<vmem>>, vector<2x32xf32>,
    %c0_99 = arith.constant 0 : index
    %c32_100 = arith.constant 32 : index
    %285 = vector.load %arg13[%c0_99, %c32_100] : memref<2x64xf32, #tpu.memory_space<vmem>>, vector<2x32xf32>
    tpu.vector_store %arg13[%c0_99, %c32_100], %258 {strides = array<i32>} : memref<2x64xf32, #tpu.memory_space<vmem>>, vector<2x32xf32>,
    %c0_101 = arith.constant 0 : index
    %c0_102 = arith.constant 0 : index
    %286 = vector.load %arg13[%c0_101, %c0_102] : memref<2x64xf32, #tpu.memory_space<vmem>>, vector<2x64xf32>
    %c0_103 = arith.constant 0 : index
    %c0_104 = arith.constant 0 : index
    %287 = vector.load %arg6[%c0_103, %c0_104] : memref<64x128xf32, #tpu.memory_space<vmem>>, vector<64x128xf32>
    %cst_105 = arith.constant dense<0.000000e+00> : vector<2x128xf32>
    %288 = tpu.matmul %286, %287, %cst_105 {dimension_numbers = #tpu.dot_dimension_numbers<[1], [0], [0], [1], [0, 0, 1, 1], [], []>} : vector<2x64xf32>, vector<64x128xf32>, vector<2x128xf32> -> vector<2x128xf32>
    %c0_106 = arith.constant 0 : index
    %c0_107 = arith.constant 0 : index
    %289 = vector.load %arg7[%c0_106, %c0_107] : memref<1x128xf32, #tpu.memory_space<vmem>>, vector<1x128xf32>
    %290 = vector.broadcast %289 : vector<1x128xf32> to vector<2x128xf32>
    %291 = arith.addf %288, %290 : vector<2x128xf32>
    %292 = arith.negf %291 : vector<2x128xf32>
    %293 = math.exp %292 : vector<2x128xf32>
    %cst_108 = arith.constant 1.000000e+00 : f32
    %294 = vector.broadcast %cst_108 : f32 to vector<2x128xf32>
    %295 = arith.addf %294, %293 : vector<2x128xf32>
    %296 = arith.divf %294, %295 : vector<2x128xf32>
    %297 = math.tanh %291 : vector<2x128xf32>
    %298 = vector.extract_strided_slice %296 {offsets = [0, 0], sizes = [2, 32], strides = [1, 1]} : vector<2x128xf32> to vector<2x32xf32>
    %299 = vector.extract_strided_slice %296 {offsets = [0, 32], sizes = [2, 32], strides = [1, 1]} : vector<2x128xf32> to vector<2x32xf32>
    %300 = vector.extract_strided_slice %297 {offsets = [0, 64], sizes = [2, 32], strides = [1, 1]} : vector<2x128xf32> to vector<2x32xf32>
    %301 = vector.extract_strided_slice %296 {offsets = [0, 96], sizes = [2, 32], strides = [1, 1]} : vector<2x128xf32> to vector<2x32xf32>
    %302 = arith.mulf %299, %256 : vector<2x32xf32>
    %303 = arith.mulf %298, %300 : vector<2x32xf32>
    %304 = arith.addf %302, %303 : vector<2x32xf32>
    %305 = math.tanh %304 : vector<2x32xf32>
    %306 = arith.mulf %301, %305 : vector<2x32xf32>
    %c5_i32 = arith.constant 5 : i32
    %307 = vector.broadcast %c5_i32 : i32 to vector<2x8x32xi32>
    %308 = arith.cmpi eq, %24, %307 : vector<2x8x32xi32>
    %309 = vector.shape_cast %306 : vector<2x32xf32> to vector<2x1x32xf32>
    %310 = vector.shape_cast %309 : vector<2x1x32xf32> to vector<2x1x32xf32>
    %311 = vector.broadcast %310 : vector<2x1x32xf32> to vector<2x8x32xf32>
    %312 = arith.select %308, %311, %264 : vector<2x8x32xi1>, vector<2x8x32xf32>
    %313 = vector.extract_strided_slice %10 {offsets = [12, 0], sizes = [2, 128], strides = [1, 1]} : vector<16x128xf32> to vector<2x128xf32>
    %c0_109 = arith.constant 0 : index
    %c0_110 = arith.constant 0 : index
    %314 = vector.load %arg5[%c0_109, %c0_110] : memref<32x128xf32, #tpu.memory_space<vmem>>, vector<32x128xf32>
    %cst_111 = arith.constant dense<0.000000e+00> : vector<2x128xf32>
    %315 = tpu.matmul %283, %314, %cst_111 {dimension_numbers = #tpu.dot_dimension_numbers<[1], [0], [0], [1], [0, 0, 1, 1], [], []>} : vector<2x32xf32>, vector<32x128xf32>, vector<2x128xf32> -> vector<2x128xf32>
    %316 = arith.addf %313, %315 : vector<2x128xf32>
    %317 = arith.negf %316 : vector<2x128xf32>
    %318 = math.exp %317 : vector<2x128xf32>
    %cst_112 = arith.constant 1.000000e+00 : f32
    %319 = vector.broadcast %cst_112 : f32 to vector<2x128xf32>
    %320 = arith.addf %319, %318 : vector<2x128xf32>
    %321 = arith.divf %319, %320 : vector<2x128xf32>
    %322 = math.tanh %316 : vector<2x128xf32>
    %323 = vector.extract_strided_slice %321 {offsets = [0, 0], sizes = [2, 32], strides = [1, 1]} : vector<2x128xf32> to vector<2x32xf32>
    %324 = vector.extract_strided_slice %321 {offsets = [0, 32], sizes = [2, 32], strides = [1, 1]} : vector<2x128xf32> to vector<2x32xf32>
    %325 = vector.extract_strided_slice %322 {offsets = [0, 64], sizes = [2, 32], strides = [1, 1]} : vector<2x128xf32> to vector<2x32xf32>
    %326 = vector.extract_strided_slice %321 {offsets = [0, 96], sizes = [2, 32], strides = [1, 1]} : vector<2x128xf32> to vector<2x32xf32>
    %327 = arith.mulf %324, %281 : vector<2x32xf32>
    %328 = arith.mulf %323, %325 : vector<2x32xf32>
    %329 = arith.addf %327, %328 : vector<2x32xf32>
    %330 = math.tanh %329 : vector<2x32xf32>
    %331 = arith.mulf %326, %330 : vector<2x32xf32>
    %c0_113 = arith.constant 0 : index
    %c0_114 = arith.constant 0 : index
    %332 = vector.load %arg13[%c0_113, %c0_114] : memref<2x64xf32, #tpu.memory_space<vmem>>, vector<2x32xf32>
    tpu.vector_store %arg13[%c0_113, %c0_114], %331 {strides = array<i32>} : memref<2x64xf32, #tpu.memory_space<vmem>>, vector<2x32xf32>,
    %c0_115 = arith.constant 0 : index
    %c32_116 = arith.constant 32 : index
    %333 = vector.load %arg13[%c0_115, %c32_116] : memref<2x64xf32, #tpu.memory_space<vmem>>, vector<2x32xf32>
    tpu.vector_store %arg13[%c0_115, %c32_116], %306 {strides = array<i32>} : memref<2x64xf32, #tpu.memory_space<vmem>>, vector<2x32xf32>,
    %c0_117 = arith.constant 0 : index
    %c0_118 = arith.constant 0 : index
    %334 = vector.load %arg13[%c0_117, %c0_118] : memref<2x64xf32, #tpu.memory_space<vmem>>, vector<2x64xf32>
    %c0_119 = arith.constant 0 : index
    %c0_120 = arith.constant 0 : index
    %335 = vector.load %arg6[%c0_119, %c0_120] : memref<64x128xf32, #tpu.memory_space<vmem>>, vector<64x128xf32>
    %cst_121 = arith.constant dense<0.000000e+00> : vector<2x128xf32>
    %336 = tpu.matmul %334, %335, %cst_121 {dimension_numbers = #tpu.dot_dimension_numbers<[1], [0], [0], [1], [0, 0, 1, 1], [], []>} : vector<2x64xf32>, vector<64x128xf32>, vector<2x128xf32> -> vector<2x128xf32>
    %c0_122 = arith.constant 0 : index
    %c0_123 = arith.constant 0 : index
    %337 = vector.load %arg7[%c0_122, %c0_123] : memref<1x128xf32, #tpu.memory_space<vmem>>, vector<1x128xf32>
    %338 = vector.broadcast %337 : vector<1x128xf32> to vector<2x128xf32>
    %339 = arith.addf %336, %338 : vector<2x128xf32>
    %340 = arith.negf %339 : vector<2x128xf32>
    %341 = math.exp %340 : vector<2x128xf32>
    %cst_124 = arith.constant 1.000000e+00 : f32
    %342 = vector.broadcast %cst_124 : f32 to vector<2x128xf32>
    %343 = arith.addf %342, %341 : vector<2x128xf32>
    %344 = arith.divf %342, %343 : vector<2x128xf32>
    %345 = math.tanh %339 : vector<2x128xf32>
    %346 = vector.extract_strided_slice %344 {offsets = [0, 0], sizes = [2, 32], strides = [1, 1]} : vector<2x128xf32> to vector<2x32xf32>
    %347 = vector.extract_strided_slice %344 {offsets = [0, 32], sizes = [2, 32], strides = [1, 1]} : vector<2x128xf32> to vector<2x32xf32>
    %348 = vector.extract_strided_slice %345 {offsets = [0, 64], sizes = [2, 32], strides = [1, 1]} : vector<2x128xf32> to vector<2x32xf32>
    %349 = vector.extract_strided_slice %344 {offsets = [0, 96], sizes = [2, 32], strides = [1, 1]} : vector<2x128xf32> to vector<2x32xf32>
    %350 = arith.mulf %347, %304 : vector<2x32xf32>
    %351 = arith.mulf %346, %348 : vector<2x32xf32>
    %352 = arith.addf %350, %351 : vector<2x32xf32>
    %353 = math.tanh %352 : vector<2x32xf32>
    %354 = arith.mulf %349, %353 : vector<2x32xf32>
    %c6_i32 = arith.constant 6 : i32
    %355 = vector.broadcast %c6_i32 : i32 to vector<2x8x32xi32>
    %356 = arith.cmpi eq, %24, %355 : vector<2x8x32xi32>
    %357 = vector.shape_cast %354 : vector<2x32xf32> to vector<2x1x32xf32>
    %358 = vector.shape_cast %357 : vector<2x1x32xf32> to vector<2x1x32xf32>
    %359 = vector.broadcast %358 : vector<2x1x32xf32> to vector<2x8x32xf32>
    %360 = arith.select %356, %359, %312 : vector<2x8x32xi1>, vector<2x8x32xf32>
    %361 = vector.extract_strided_slice %10 {offsets = [14, 0], sizes = [2, 128], strides = [1, 1]} : vector<16x128xf32> to vector<2x128xf32>
    %c0_125 = arith.constant 0 : index
    %c0_126 = arith.constant 0 : index
    %362 = vector.load %arg5[%c0_125, %c0_126] : memref<32x128xf32, #tpu.memory_space<vmem>>, vector<32x128xf32>
    %cst_127 = arith.constant dense<0.000000e+00> : vector<2x128xf32>
    %363 = tpu.matmul %331, %362, %cst_127 {dimension_numbers = #tpu.dot_dimension_numbers<[1], [0], [0], [1], [0, 0, 1, 1], [], []>} : vector<2x32xf32>, vector<32x128xf32>, vector<2x128xf32> -> vector<2x128xf32>
    %364 = arith.addf %361, %363 : vector<2x128xf32>
    %365 = arith.negf %364 : vector<2x128xf32>
    %366 = math.exp %365 : vector<2x128xf32>
    %cst_128 = arith.constant 1.000000e+00 : f32
    %367 = vector.broadcast %cst_128 : f32 to vector<2x128xf32>
    %368 = arith.addf %367, %366 : vector<2x128xf32>
    %369 = arith.divf %367, %368 : vector<2x128xf32>
    %370 = math.tanh %364 : vector<2x128xf32>
    %371 = vector.extract_strided_slice %369 {offsets = [0, 0], sizes = [2, 32], strides = [1, 1]} : vector<2x128xf32> to vector<2x32xf32>
    %372 = vector.extract_strided_slice %369 {offsets = [0, 32], sizes = [2, 32], strides = [1, 1]} : vector<2x128xf32> to vector<2x32xf32>
    %373 = vector.extract_strided_slice %370 {offsets = [0, 64], sizes = [2, 32], strides = [1, 1]} : vector<2x128xf32> to vector<2x32xf32>
    %374 = vector.extract_strided_slice %369 {offsets = [0, 96], sizes = [2, 32], strides = [1, 1]} : vector<2x128xf32> to vector<2x32xf32>
    %375 = arith.mulf %372, %329 : vector<2x32xf32>
    %376 = arith.mulf %371, %373 : vector<2x32xf32>
    %377 = arith.addf %375, %376 : vector<2x32xf32>
    %378 = math.tanh %377 : vector<2x32xf32>
    %379 = arith.mulf %374, %378 : vector<2x32xf32>
    %c0_129 = arith.constant 0 : index
    %c0_130 = arith.constant 0 : index
    %380 = vector.load %arg13[%c0_129, %c0_130] : memref<2x64xf32, #tpu.memory_space<vmem>>, vector<2x32xf32>
    tpu.vector_store %arg13[%c0_129, %c0_130], %379 {strides = array<i32>} : memref<2x64xf32, #tpu.memory_space<vmem>>, vector<2x32xf32>,
    %c0_131 = arith.constant 0 : index
    %c32_132 = arith.constant 32 : index
    %381 = vector.load %arg13[%c0_131, %c32_132] : memref<2x64xf32, #tpu.memory_space<vmem>>, vector<2x32xf32>
    tpu.vector_store %arg13[%c0_131, %c32_132], %354 {strides = array<i32>} : memref<2x64xf32, #tpu.memory_space<vmem>>, vector<2x32xf32>,
    %c0_133 = arith.constant 0 : index
    %c0_134 = arith.constant 0 : index
    %382 = vector.load %arg13[%c0_133, %c0_134] : memref<2x64xf32, #tpu.memory_space<vmem>>, vector<2x64xf32>
    %c0_135 = arith.constant 0 : index
    %c0_136 = arith.constant 0 : index
    %383 = vector.load %arg6[%c0_135, %c0_136] : memref<64x128xf32, #tpu.memory_space<vmem>>, vector<64x128xf32>
    %cst_137 = arith.constant dense<0.000000e+00> : vector<2x128xf32>
    %384 = tpu.matmul %382, %383, %cst_137 {dimension_numbers = #tpu.dot_dimension_numbers<[1], [0], [0], [1], [0, 0, 1, 1], [], []>} : vector<2x64xf32>, vector<64x128xf32>, vector<2x128xf32> -> vector<2x128xf32>
    %c0_138 = arith.constant 0 : index
    %c0_139 = arith.constant 0 : index
    %385 = vector.load %arg7[%c0_138, %c0_139] : memref<1x128xf32, #tpu.memory_space<vmem>>, vector<1x128xf32>
    %386 = vector.broadcast %385 : vector<1x128xf32> to vector<2x128xf32>
    %387 = arith.addf %384, %386 : vector<2x128xf32>
    %388 = arith.negf %387 : vector<2x128xf32>
    %389 = math.exp %388 : vector<2x128xf32>
    %cst_140 = arith.constant 1.000000e+00 : f32
    %390 = vector.broadcast %cst_140 : f32 to vector<2x128xf32>
    %391 = arith.addf %390, %389 : vector<2x128xf32>
    %392 = arith.divf %390, %391 : vector<2x128xf32>
    %393 = math.tanh %387 : vector<2x128xf32>
    %394 = vector.extract_strided_slice %392 {offsets = [0, 0], sizes = [2, 32], strides = [1, 1]} : vector<2x128xf32> to vector<2x32xf32>
    %395 = vector.extract_strided_slice %392 {offsets = [0, 32], sizes = [2, 32], strides = [1, 1]} : vector<2x128xf32> to vector<2x32xf32>
    %396 = vector.extract_strided_slice %393 {offsets = [0, 64], sizes = [2, 32], strides = [1, 1]} : vector<2x128xf32> to vector<2x32xf32>
    %397 = vector.extract_strided_slice %392 {offsets = [0, 96], sizes = [2, 32], strides = [1, 1]} : vector<2x128xf32> to vector<2x32xf32>
    %398 = arith.mulf %395, %352 : vector<2x32xf32>
    %399 = arith.mulf %394, %396 : vector<2x32xf32>
    %400 = arith.addf %398, %399 : vector<2x32xf32>
    %401 = math.tanh %400 : vector<2x32xf32>
    %402 = arith.mulf %397, %401 : vector<2x32xf32>
    %c7_i32 = arith.constant 7 : i32
    %403 = vector.broadcast %c7_i32 : i32 to vector<2x8x32xi32>
    %404 = arith.cmpi eq, %24, %403 : vector<2x8x32xi32>
    %405 = vector.shape_cast %402 : vector<2x32xf32> to vector<2x1x32xf32>
    %406 = vector.shape_cast %405 : vector<2x1x32xf32> to vector<2x1x32xf32>
    %407 = vector.broadcast %406 : vector<2x1x32xf32> to vector<2x8x32xf32>
    %408 = arith.select %404, %407, %360 : vector<2x8x32xi1>, vector<2x8x32xf32>
    %409 = arith.mulf %408, %408 : vector<2x8x32xf32>
    %cst_141 = arith.constant dense<0.000000e+00> : vector<2x8xf32>
    %410 = vector.multi_reduction <add>, %409, %cst_141 [2] : vector<2x8x32xf32> to vector<2x8xf32>
    %411 = math.sqrt %410 : vector<2x8xf32>
    %412 = vector.shape_cast %22 : vector<2x32xf32> to vector<2x1x32xf32>
    %413 = vector.broadcast %412 : vector<2x1x32xf32> to vector<2x8x32xf32>
    %414 = arith.mulf %408, %413 : vector<2x8x32xf32>
    %cst_142 = arith.constant dense<0.000000e+00> : vector<2x8xf32>
    %415 = vector.multi_reduction <add>, %414, %cst_142 [2] : vector<2x8x32xf32> to vector<2x8xf32>
    %416 = arith.mulf %22, %22 : vector<2x32xf32>
    %cst_143 = arith.constant dense<0.000000e+00> : vector<2xf32>
    %417 = vector.multi_reduction <add>, %416, %cst_143 [1] : vector<2x32xf32> to vector<2xf32>
    %418 = vector.shape_cast %417 : vector<2xf32> to vector<2x1xf32>
    %419 = math.sqrt %418 : vector<2x1xf32>
    %420 = vector.broadcast %419 : vector<2x1xf32> to vector<2x8xf32>
    %421 = arith.mulf %420, %411 : vector<2x8xf32>
    %cst_144 = arith.constant 9.99999993E-9 : f32
    %422 = vector.broadcast %cst_144 : f32 to vector<2x8xf32>
    %423 = arith.maximumf %421, %422 : vector<2x8xf32>
    %424 = arith.divf %415, %423 : vector<2x8xf32>
    %cst_145 = arith.constant dense<0xFF800000> : vector<2xf32>
    %425 = vector.multi_reduction <maximumf>, %424, %cst_145 [1] : vector<2x8xf32> to vector<2xf32>
    %426 = vector.shape_cast %425 : vector<2xf32> to vector<2x1xf32>
    %427 = vector.broadcast %426 : vector<2x1xf32> to vector<2x8xf32>
    %428 = arith.subf %424, %427 : vector<2x8xf32>
    %429 = math.exp %428 : vector<2x8xf32>
    %cst_146 = arith.constant dense<0.000000e+00> : vector<2xf32>
    %430 = vector.multi_reduction <add>, %429, %cst_146 [1] : vector<2x8xf32> to vector<2xf32>
    %431 = vector.shape_cast %430 : vector<2xf32> to vector<2x1xf32>
    %432 = vector.broadcast %431 : vector<2x1xf32> to vector<2x8xf32>
    %433 = arith.divf %429, %432 : vector<2x8xf32>
    %434 = vector.shape_cast %433 : vector<2x8xf32> to vector<2x8x1xf32>
    %435 = vector.broadcast %434 : vector<2x8x1xf32> to vector<2x8x32xf32>
    %436 = arith.mulf %435, %408 : vector<2x8x32xf32>
    %cst_147 = arith.constant dense<0.000000e+00> : vector<2x32xf32>
    %437 = vector.multi_reduction <add>, %436, %cst_147 [1] : vector<2x8x32xf32> to vector<2x32xf32>
    %c0_148 = arith.constant 0 : index
    %c0_149 = arith.constant 0 : index
    %438 = vector.load %arg13[%c0_148, %c0_149] : memref<2x64xf32, #tpu.memory_space<vmem>>, vector<2x32xf32>
    tpu.vector_store %arg13[%c0_148, %c0_149], %437 {strides = array<i32>} : memref<2x64xf32, #tpu.memory_space<vmem>>, vector<2x32xf32>,
    %c0_150 = arith.constant 0 : index
    %c32_151 = arith.constant 32 : index
    %439 = vector.load %arg13[%c0_150, %c32_151] : memref<2x64xf32, #tpu.memory_space<vmem>>, vector<2x32xf32>
    tpu.vector_store %arg13[%c0_150, %c32_151], %22 {strides = array<i32>} : memref<2x64xf32, #tpu.memory_space<vmem>>, vector<2x32xf32>,
    %c0_152 = arith.constant 0 : index
    %c0_153 = arith.constant 0 : index
    %440 = vector.load %arg13[%c0_152, %c0_153] : memref<2x64xf32, #tpu.memory_space<vmem>>, vector<2x64xf32>
    %c0_154 = arith.constant 0 : index
    %c0_155 = arith.constant 0 : index
    %441 = vector.load %arg10[%c0_154, %c0_155] : memref<64x256xf32, #tpu.memory_space<vmem>>, vector<64x256xf32>
    %cst_156 = arith.constant dense<0.000000e+00> : vector<2x256xf32>
    %442 = tpu.matmul %440, %441, %cst_156 {dimension_numbers = #tpu.dot_dimension_numbers<[1], [0], [0], [1], [0, 0, 1, 1], [], []>} : vector<2x64xf32>, vector<64x256xf32>, vector<2x256xf32> -> vector<2x256xf32>
    %443 = vector.extract_strided_slice %21 {offsets = [0, 0], sizes = [2, 128], strides = [1, 1]} : vector<10x128xf32> to vector<2x128xf32>
    %444 = vector.extract_strided_slice %442 {offsets = [0, 0], sizes = [2, 128], strides = [1, 1]} : vector<2x256xf32> to vector<2x128xf32>
    %445 = arith.addf %443, %444 : vector<2x128xf32>
    %446 = arith.negf %445 : vector<2x128xf32>
    %447 = math.exp %446 : vector<2x128xf32>
    %cst_157 = arith.constant 1.000000e+00 : f32
    %448 = vector.broadcast %cst_157 : f32 to vector<2x128xf32>
    %449 = arith.addf %448, %447 : vector<2x128xf32>
    %450 = arith.divf %448, %449 : vector<2x128xf32>
    %451 = math.tanh %445 : vector<2x128xf32>
    %452 = vector.extract_strided_slice %450 {offsets = [0, 0], sizes = [2, 32], strides = [1, 1]} : vector<2x128xf32> to vector<2x32xf32>
    %453 = vector.extract_strided_slice %450 {offsets = [0, 32], sizes = [2, 32], strides = [1, 1]} : vector<2x128xf32> to vector<2x32xf32>
    %454 = vector.extract_strided_slice %451 {offsets = [0, 64], sizes = [2, 32], strides = [1, 1]} : vector<2x128xf32> to vector<2x32xf32>
    %455 = vector.extract_strided_slice %450 {offsets = [0, 96], sizes = [2, 32], strides = [1, 1]} : vector<2x128xf32> to vector<2x32xf32>
    %456 = arith.mulf %453, %22 : vector<2x32xf32>
    %457 = arith.mulf %452, %454 : vector<2x32xf32>
    %458 = arith.addf %456, %457 : vector<2x32xf32>
    %459 = math.tanh %458 : vector<2x32xf32>
    %460 = arith.mulf %455, %459 : vector<2x32xf32>
    %461 = vector.shape_cast %460 : vector<2x32xf32> to vector<2x1x32xf32>
    %462 = vector.broadcast %461 : vector<2x1x32xf32> to vector<2x8x32xf32>
    %463 = arith.mulf %408, %462 : vector<2x8x32xf32>
    %cst_158 = arith.constant dense<0.000000e+00> : vector<2x8xf32>
    %464 = vector.multi_reduction <add>, %463, %cst_158 [2] : vector<2x8x32xf32> to vector<2x8xf32>
    %465 = arith.mulf %460, %460 : vector<2x32xf32>
    %cst_159 = arith.constant dense<0.000000e+00> : vector<2xf32>
    %466 = vector.multi_reduction <add>, %465, %cst_159 [1] : vector<2x32xf32> to vector<2xf32>
    %467 = vector.shape_cast %466 : vector<2xf32> to vector<2x1xf32>
    %468 = math.sqrt %467 : vector<2x1xf32>
    %469 = vector.broadcast %468 : vector<2x1xf32> to vector<2x8xf32>
    %470 = arith.mulf %469, %411 : vector<2x8xf32>
    %cst_160 = arith.constant 9.99999993E-9 : f32
    %471 = vector.broadcast %cst_160 : f32 to vector<2x8xf32>
    %472 = arith.maximumf %470, %471 : vector<2x8xf32>
    %473 = arith.divf %464, %472 : vector<2x8xf32>
    %cst_161 = arith.constant dense<0xFF800000> : vector<2xf32>
    %474 = vector.multi_reduction <maximumf>, %473, %cst_161 [1] : vector<2x8xf32> to vector<2xf32>
    %475 = vector.shape_cast %474 : vector<2xf32> to vector<2x1xf32>
    %476 = vector.broadcast %475 : vector<2x1xf32> to vector<2x8xf32>
    %477 = arith.subf %473, %476 : vector<2x8xf32>
    %478 = math.exp %477 : vector<2x8xf32>
    %cst_162 = arith.constant dense<0.000000e+00> : vector<2xf32>
    %479 = vector.multi_reduction <add>, %478, %cst_162 [1] : vector<2x8xf32> to vector<2xf32>
    %480 = vector.shape_cast %479 : vector<2xf32> to vector<2x1xf32>
    %481 = vector.broadcast %480 : vector<2x1xf32> to vector<2x8xf32>
    %482 = arith.divf %478, %481 : vector<2x8xf32>
    %483 = vector.shape_cast %482 : vector<2x8xf32> to vector<2x8x1xf32>
    %484 = vector.broadcast %483 : vector<2x8x1xf32> to vector<2x8x32xf32>
    %485 = arith.mulf %484, %408 : vector<2x8x32xf32>
    %cst_163 = arith.constant dense<0.000000e+00> : vector<2x32xf32>
    %486 = vector.multi_reduction <add>, %485, %cst_163 [1] : vector<2x8x32xf32> to vector<2x32xf32>
    %c0_164 = arith.constant 0 : index
    %c0_165 = arith.constant 0 : index
    %487 = vector.load %arg13[%c0_164, %c0_165] : memref<2x64xf32, #tpu.memory_space<vmem>>, vector<2x32xf32>
    tpu.vector_store %arg13[%c0_164, %c0_165], %486 {strides = array<i32>} : memref<2x64xf32, #tpu.memory_space<vmem>>, vector<2x32xf32>,
    %c0_166 = arith.constant 0 : index
    %c32_167 = arith.constant 32 : index
    %488 = vector.load %arg13[%c0_166, %c32_167] : memref<2x64xf32, #tpu.memory_space<vmem>>, vector<2x32xf32>
    tpu.vector_store %arg13[%c0_166, %c32_167], %460 {strides = array<i32>} : memref<2x64xf32, #tpu.memory_space<vmem>>, vector<2x32xf32>,
    %c0_168 = arith.constant 0 : index
    %c0_169 = arith.constant 0 : index
    %489 = vector.load %arg13[%c0_168, %c0_169] : memref<2x64xf32, #tpu.memory_space<vmem>>, vector<2x64xf32>
    %c0_170 = arith.constant 0 : index
    %c0_171 = arith.constant 0 : index
    %490 = vector.load %arg10[%c0_170, %c0_171] : memref<64x256xf32, #tpu.memory_space<vmem>>, vector<64x256xf32>
    %cst_172 = arith.constant dense<0.000000e+00> : vector<2x256xf32>
    %491 = tpu.matmul %489, %490, %cst_172 {dimension_numbers = #tpu.dot_dimension_numbers<[1], [0], [0], [1], [0, 0, 1, 1], [], []>} : vector<2x64xf32>, vector<64x256xf32>, vector<2x256xf32> -> vector<2x256xf32>
    %492 = vector.extract_strided_slice %491 {offsets = [0, 128], sizes = [2, 128], strides = [1, 1]} : vector<2x256xf32> to vector<2x128xf32>
    %c0_173 = arith.constant 0 : index
    %c0_174 = arith.constant 0 : index
    %493 = vector.load %arg11[%c0_173, %c0_174] : memref<1x128xf32, #tpu.memory_space<vmem>>, vector<1x128xf32>
    %494 = vector.broadcast %493 : vector<1x128xf32> to vector<2x128xf32>
    %495 = arith.addf %492, %494 : vector<2x128xf32>
    %c0_175 = arith.constant 0 : index
    %c0_176 = arith.constant 0 : index
    %c0_177 = arith.constant 0 : index
    %496 = vector.load %arg12[%c0_175, %c0_176, %c0_177] : memref<5x2x128xf32, #tpu.memory_space<vmem>>, vector<1x2x128xf32>
    %497 = vector.shape_cast %496 : vector<1x2x128xf32> to vector<2x128xf32>
    %498 = vector.shape_cast %495 : vector<2x128xf32> to vector<1x2x128xf32>
    tpu.vector_store %arg12[%c0_175, %c0_176, %c0_177], %498 {strides = array<i32>} : memref<5x2x128xf32, #tpu.memory_space<vmem>>, vector<1x2x128xf32>,
    %499 = vector.extract_strided_slice %21 {offsets = [2, 0], sizes = [2, 128], strides = [1, 1]} : vector<10x128xf32> to vector<2x128xf32>
    %500 = vector.extract_strided_slice %491 {offsets = [0, 0], sizes = [2, 128], strides = [1, 1]} : vector<2x256xf32> to vector<2x128xf32>
    %501 = arith.addf %499, %500 : vector<2x128xf32>
    %502 = arith.negf %501 : vector<2x128xf32>
    %503 = math.exp %502 : vector<2x128xf32>
    %cst_178 = arith.constant 1.000000e+00 : f32
    %504 = vector.broadcast %cst_178 : f32 to vector<2x128xf32>
    %505 = arith.addf %504, %503 : vector<2x128xf32>
    %506 = arith.divf %504, %505 : vector<2x128xf32>
    %507 = math.tanh %501 : vector<2x128xf32>
    %508 = vector.extract_strided_slice %506 {offsets = [0, 0], sizes = [2, 32], strides = [1, 1]} : vector<2x128xf32> to vector<2x32xf32>
    %509 = vector.extract_strided_slice %506 {offsets = [0, 32], sizes = [2, 32], strides = [1, 1]} : vector<2x128xf32> to vector<2x32xf32>
    %510 = vector.extract_strided_slice %507 {offsets = [0, 64], sizes = [2, 32], strides = [1, 1]} : vector<2x128xf32> to vector<2x32xf32>
    %511 = vector.extract_strided_slice %506 {offsets = [0, 96], sizes = [2, 32], strides = [1, 1]} : vector<2x128xf32> to vector<2x32xf32>
    %512 = arith.mulf %509, %458 : vector<2x32xf32>
    %513 = arith.mulf %508, %510 : vector<2x32xf32>
    %514 = arith.addf %512, %513 : vector<2x32xf32>
    %515 = math.tanh %514 : vector<2x32xf32>
    %516 = arith.mulf %511, %515 : vector<2x32xf32>
    %517 = vector.shape_cast %516 : vector<2x32xf32> to vector<2x1x32xf32>
    %518 = vector.broadcast %517 : vector<2x1x32xf32> to vector<2x8x32xf32>
    %519 = arith.mulf %408, %518 : vector<2x8x32xf32>
    %cst_179 = arith.constant dense<0.000000e+00> : vector<2x8xf32>
    %520 = vector.multi_reduction <add>, %519, %cst_179 [2] : vector<2x8x32xf32> to vector<2x8xf32>
    %521 = arith.mulf %516, %516 : vector<2x32xf32>
    %cst_180 = arith.constant dense<0.000000e+00> : vector<2xf32>
    %522 = vector.multi_reduction <add>, %521, %cst_180 [1] : vector<2x32xf32> to vector<2xf32>
    %523 = vector.shape_cast %522 : vector<2xf32> to vector<2x1xf32>
    %524 = math.sqrt %523 : vector<2x1xf32>
    %525 = vector.broadcast %524 : vector<2x1xf32> to vector<2x8xf32>
    %526 = arith.mulf %525, %411 : vector<2x8xf32>
    %cst_181 = arith.constant 9.99999993E-9 : f32
    %527 = vector.broadcast %cst_181 : f32 to vector<2x8xf32>
    %528 = arith.maximumf %526, %527 : vector<2x8xf32>
    %529 = arith.divf %520, %528 : vector<2x8xf32>
    %cst_182 = arith.constant dense<0xFF800000> : vector<2xf32>
    %530 = vector.multi_reduction <maximumf>, %529, %cst_182 [1] : vector<2x8xf32> to vector<2xf32>
    %531 = vector.shape_cast %530 : vector<2xf32> to vector<2x1xf32>
    %532 = vector.broadcast %531 : vector<2x1xf32> to vector<2x8xf32>
    %533 = arith.subf %529, %532 : vector<2x8xf32>
    %534 = math.exp %533 : vector<2x8xf32>
    %cst_183 = arith.constant dense<0.000000e+00> : vector<2xf32>
    %535 = vector.multi_reduction <add>, %534, %cst_183 [1] : vector<2x8xf32> to vector<2xf32>
    %536 = vector.shape_cast %535 : vector<2xf32> to vector<2x1xf32>
    %537 = vector.broadcast %536 : vector<2x1xf32> to vector<2x8xf32>
    %538 = arith.divf %534, %537 : vector<2x8xf32>
    %539 = vector.shape_cast %538 : vector<2x8xf32> to vector<2x8x1xf32>
    %540 = vector.broadcast %539 : vector<2x8x1xf32> to vector<2x8x32xf32>
    %541 = arith.mulf %540, %408 : vector<2x8x32xf32>
    %cst_184 = arith.constant dense<0.000000e+00> : vector<2x32xf32>
    %542 = vector.multi_reduction <add>, %541, %cst_184 [1] : vector<2x8x32xf32> to vector<2x32xf32>
    %c0_185 = arith.constant 0 : index
    %c0_186 = arith.constant 0 : index
    %543 = vector.load %arg13[%c0_185, %c0_186] : memref<2x64xf32, #tpu.memory_space<vmem>>, vector<2x32xf32>
    tpu.vector_store %arg13[%c0_185, %c0_186], %542 {strides = array<i32>} : memref<2x64xf32, #tpu.memory_space<vmem>>, vector<2x32xf32>,
    %c0_187 = arith.constant 0 : index
    %c32_188 = arith.constant 32 : index
    %544 = vector.load %arg13[%c0_187, %c32_188] : memref<2x64xf32, #tpu.memory_space<vmem>>, vector<2x32xf32>
    tpu.vector_store %arg13[%c0_187, %c32_188], %516 {strides = array<i32>} : memref<2x64xf32, #tpu.memory_space<vmem>>, vector<2x32xf32>,
    %c0_189 = arith.constant 0 : index
    %c0_190 = arith.constant 0 : index
    %545 = vector.load %arg13[%c0_189, %c0_190] : memref<2x64xf32, #tpu.memory_space<vmem>>, vector<2x64xf32>
    %c0_191 = arith.constant 0 : index
    %c0_192 = arith.constant 0 : index
    %546 = vector.load %arg10[%c0_191, %c0_192] : memref<64x256xf32, #tpu.memory_space<vmem>>, vector<64x256xf32>
    %cst_193 = arith.constant dense<0.000000e+00> : vector<2x256xf32>
    %547 = tpu.matmul %545, %546, %cst_193 {dimension_numbers = #tpu.dot_dimension_numbers<[1], [0], [0], [1], [0, 0, 1, 1], [], []>} : vector<2x64xf32>, vector<64x256xf32>, vector<2x256xf32> -> vector<2x256xf32>
    %548 = vector.extract_strided_slice %547 {offsets = [0, 128], sizes = [2, 128], strides = [1, 1]} : vector<2x256xf32> to vector<2x128xf32>
    %c0_194 = arith.constant 0 : index
    %c0_195 = arith.constant 0 : index
    %549 = vector.load %arg11[%c0_194, %c0_195] : memref<1x128xf32, #tpu.memory_space<vmem>>, vector<1x128xf32>
    %550 = vector.broadcast %549 : vector<1x128xf32> to vector<2x128xf32>
    %551 = arith.addf %548, %550 : vector<2x128xf32>
    %c1 = arith.constant 1 : index
    %c0_196 = arith.constant 0 : index
    %c0_197 = arith.constant 0 : index
    %552 = vector.load %arg12[%c1, %c0_196, %c0_197] : memref<5x2x128xf32, #tpu.memory_space<vmem>>, vector<1x2x128xf32>
    %553 = vector.shape_cast %552 : vector<1x2x128xf32> to vector<2x128xf32>
    %554 = vector.shape_cast %551 : vector<2x128xf32> to vector<1x2x128xf32>
    tpu.vector_store %arg12[%c1, %c0_196, %c0_197], %554 {strides = array<i32>} : memref<5x2x128xf32, #tpu.memory_space<vmem>>, vector<1x2x128xf32>,
    %555 = vector.extract_strided_slice %21 {offsets = [4, 0], sizes = [2, 128], strides = [1, 1]} : vector<10x128xf32> to vector<2x128xf32>
    %556 = vector.extract_strided_slice %547 {offsets = [0, 0], sizes = [2, 128], strides = [1, 1]} : vector<2x256xf32> to vector<2x128xf32>
    %557 = arith.addf %555, %556 : vector<2x128xf32>
    %558 = arith.negf %557 : vector<2x128xf32>
    %559 = math.exp %558 : vector<2x128xf32>
    %cst_198 = arith.constant 1.000000e+00 : f32
    %560 = vector.broadcast %cst_198 : f32 to vector<2x128xf32>
    %561 = arith.addf %560, %559 : vector<2x128xf32>
    %562 = arith.divf %560, %561 : vector<2x128xf32>
    %563 = math.tanh %557 : vector<2x128xf32>
    %564 = vector.extract_strided_slice %562 {offsets = [0, 0], sizes = [2, 32], strides = [1, 1]} : vector<2x128xf32> to vector<2x32xf32>
    %565 = vector.extract_strided_slice %562 {offsets = [0, 32], sizes = [2, 32], strides = [1, 1]} : vector<2x128xf32> to vector<2x32xf32>
    %566 = vector.extract_strided_slice %563 {offsets = [0, 64], sizes = [2, 32], strides = [1, 1]} : vector<2x128xf32> to vector<2x32xf32>
    %567 = vector.extract_strided_slice %562 {offsets = [0, 96], sizes = [2, 32], strides = [1, 1]} : vector<2x128xf32> to vector<2x32xf32>
    %568 = arith.mulf %565, %514 : vector<2x32xf32>
    %569 = arith.mulf %564, %566 : vector<2x32xf32>
    %570 = arith.addf %568, %569 : vector<2x32xf32>
    %571 = math.tanh %570 : vector<2x32xf32>
    %572 = arith.mulf %567, %571 : vector<2x32xf32>
    %573 = vector.shape_cast %572 : vector<2x32xf32> to vector<2x1x32xf32>
    %574 = vector.broadcast %573 : vector<2x1x32xf32> to vector<2x8x32xf32>
    %575 = arith.mulf %408, %574 : vector<2x8x32xf32>
    %cst_199 = arith.constant dense<0.000000e+00> : vector<2x8xf32>
    %576 = vector.multi_reduction <add>, %575, %cst_199 [2] : vector<2x8x32xf32> to vector<2x8xf32>
    %577 = arith.mulf %572, %572 : vector<2x32xf32>
    %cst_200 = arith.constant dense<0.000000e+00> : vector<2xf32>
    %578 = vector.multi_reduction <add>, %577, %cst_200 [1] : vector<2x32xf32> to vector<2xf32>
    %579 = vector.shape_cast %578 : vector<2xf32> to vector<2x1xf32>
    %580 = math.sqrt %579 : vector<2x1xf32>
    %581 = vector.broadcast %580 : vector<2x1xf32> to vector<2x8xf32>
    %582 = arith.mulf %581, %411 : vector<2x8xf32>
    %cst_201 = arith.constant 9.99999993E-9 : f32
    %583 = vector.broadcast %cst_201 : f32 to vector<2x8xf32>
    %584 = arith.maximumf %582, %583 : vector<2x8xf32>
    %585 = arith.divf %576, %584 : vector<2x8xf32>
    %cst_202 = arith.constant dense<0xFF800000> : vector<2xf32>
    %586 = vector.multi_reduction <maximumf>, %585, %cst_202 [1] : vector<2x8xf32> to vector<2xf32>
    %587 = vector.shape_cast %586 : vector<2xf32> to vector<2x1xf32>
    %588 = vector.broadcast %587 : vector<2x1xf32> to vector<2x8xf32>
    %589 = arith.subf %585, %588 : vector<2x8xf32>
    %590 = math.exp %589 : vector<2x8xf32>
    %cst_203 = arith.constant dense<0.000000e+00> : vector<2xf32>
    %591 = vector.multi_reduction <add>, %590, %cst_203 [1] : vector<2x8xf32> to vector<2xf32>
    %592 = vector.shape_cast %591 : vector<2xf32> to vector<2x1xf32>
    %593 = vector.broadcast %592 : vector<2x1xf32> to vector<2x8xf32>
    %594 = arith.divf %590, %593 : vector<2x8xf32>
    %595 = vector.shape_cast %594 : vector<2x8xf32> to vector<2x8x1xf32>
    %596 = vector.broadcast %595 : vector<2x8x1xf32> to vector<2x8x32xf32>
    %597 = arith.mulf %596, %408 : vector<2x8x32xf32>
    %cst_204 = arith.constant dense<0.000000e+00> : vector<2x32xf32>
    %598 = vector.multi_reduction <add>, %597, %cst_204 [1] : vector<2x8x32xf32> to vector<2x32xf32>
    %c0_205 = arith.constant 0 : index
    %c0_206 = arith.constant 0 : index
    %599 = vector.load %arg13[%c0_205, %c0_206] : memref<2x64xf32, #tpu.memory_space<vmem>>, vector<2x32xf32>
    tpu.vector_store %arg13[%c0_205, %c0_206], %598 {strides = array<i32>} : memref<2x64xf32, #tpu.memory_space<vmem>>, vector<2x32xf32>,
    %c0_207 = arith.constant 0 : index
    %c32_208 = arith.constant 32 : index
    %600 = vector.load %arg13[%c0_207, %c32_208] : memref<2x64xf32, #tpu.memory_space<vmem>>, vector<2x32xf32>
    tpu.vector_store %arg13[%c0_207, %c32_208], %572 {strides = array<i32>} : memref<2x64xf32, #tpu.memory_space<vmem>>, vector<2x32xf32>,
    %c0_209 = arith.constant 0 : index
    %c0_210 = arith.constant 0 : index
    %601 = vector.load %arg13[%c0_209, %c0_210] : memref<2x64xf32, #tpu.memory_space<vmem>>, vector<2x64xf32>
    %c0_211 = arith.constant 0 : index
    %c0_212 = arith.constant 0 : index
    %602 = vector.load %arg10[%c0_211, %c0_212] : memref<64x256xf32, #tpu.memory_space<vmem>>, vector<64x256xf32>
    %cst_213 = arith.constant dense<0.000000e+00> : vector<2x256xf32>
    %603 = tpu.matmul %601, %602, %cst_213 {dimension_numbers = #tpu.dot_dimension_numbers<[1], [0], [0], [1], [0, 0, 1, 1], [], []>} : vector<2x64xf32>, vector<64x256xf32>, vector<2x256xf32> -> vector<2x256xf32>
    %604 = vector.extract_strided_slice %603 {offsets = [0, 128], sizes = [2, 128], strides = [1, 1]} : vector<2x256xf32> to vector<2x128xf32>
    %c0_214 = arith.constant 0 : index
    %c0_215 = arith.constant 0 : index
    %605 = vector.load %arg11[%c0_214, %c0_215] : memref<1x128xf32, #tpu.memory_space<vmem>>, vector<1x128xf32>
    %606 = vector.broadcast %605 : vector<1x128xf32> to vector<2x128xf32>
    %607 = arith.addf %604, %606 : vector<2x128xf32>
    %c2 = arith.constant 2 : index
    %c0_216 = arith.constant 0 : index
    %c0_217 = arith.constant 0 : index
    %608 = vector.load %arg12[%c2, %c0_216, %c0_217] : memref<5x2x128xf32, #tpu.memory_space<vmem>>, vector<1x2x128xf32>
    %609 = vector.shape_cast %608 : vector<1x2x128xf32> to vector<2x128xf32>
    %610 = vector.shape_cast %607 : vector<2x128xf32> to vector<1x2x128xf32>
    tpu.vector_store %arg12[%c2, %c0_216, %c0_217], %610 {strides = array<i32>} : memref<5x2x128xf32, #tpu.memory_space<vmem>>, vector<1x2x128xf32>,
    %611 = vector.extract_strided_slice %21 {offsets = [6, 0], sizes = [2, 128], strides = [1, 1]} : vector<10x128xf32> to vector<2x128xf32>
    %612 = vector.extract_strided_slice %603 {offsets = [0, 0], sizes = [2, 128], strides = [1, 1]} : vector<2x256xf32> to vector<2x128xf32>
    %613 = arith.addf %611, %612 : vector<2x128xf32>
    %614 = arith.negf %613 : vector<2x128xf32>
    %615 = math.exp %614 : vector<2x128xf32>
    %cst_218 = arith.constant 1.000000e+00 : f32
    %616 = vector.broadcast %cst_218 : f32 to vector<2x128xf32>
    %617 = arith.addf %616, %615 : vector<2x128xf32>
    %618 = arith.divf %616, %617 : vector<2x128xf32>
    %619 = math.tanh %613 : vector<2x128xf32>
    %620 = vector.extract_strided_slice %618 {offsets = [0, 0], sizes = [2, 32], strides = [1, 1]} : vector<2x128xf32> to vector<2x32xf32>
    %621 = vector.extract_strided_slice %618 {offsets = [0, 32], sizes = [2, 32], strides = [1, 1]} : vector<2x128xf32> to vector<2x32xf32>
    %622 = vector.extract_strided_slice %619 {offsets = [0, 64], sizes = [2, 32], strides = [1, 1]} : vector<2x128xf32> to vector<2x32xf32>
    %623 = vector.extract_strided_slice %618 {offsets = [0, 96], sizes = [2, 32], strides = [1, 1]} : vector<2x128xf32> to vector<2x32xf32>
    %624 = arith.mulf %621, %570 : vector<2x32xf32>
    %625 = arith.mulf %620, %622 : vector<2x32xf32>
    %626 = arith.addf %624, %625 : vector<2x32xf32>
    %627 = math.tanh %626 : vector<2x32xf32>
    %628 = arith.mulf %623, %627 : vector<2x32xf32>
    %629 = vector.shape_cast %628 : vector<2x32xf32> to vector<2x1x32xf32>
    %630 = vector.broadcast %629 : vector<2x1x32xf32> to vector<2x8x32xf32>
    %631 = arith.mulf %408, %630 : vector<2x8x32xf32>
    %cst_219 = arith.constant dense<0.000000e+00> : vector<2x8xf32>
    %632 = vector.multi_reduction <add>, %631, %cst_219 [2] : vector<2x8x32xf32> to vector<2x8xf32>
    %633 = arith.mulf %628, %628 : vector<2x32xf32>
    %cst_220 = arith.constant dense<0.000000e+00> : vector<2xf32>
    %634 = vector.multi_reduction <add>, %633, %cst_220 [1] : vector<2x32xf32> to vector<2xf32>
    %635 = vector.shape_cast %634 : vector<2xf32> to vector<2x1xf32>
    %636 = math.sqrt %635 : vector<2x1xf32>
    %637 = vector.broadcast %636 : vector<2x1xf32> to vector<2x8xf32>
    %638 = arith.mulf %637, %411 : vector<2x8xf32>
    %cst_221 = arith.constant 9.99999993E-9 : f32
    %639 = vector.broadcast %cst_221 : f32 to vector<2x8xf32>
    %640 = arith.maximumf %638, %639 : vector<2x8xf32>
    %641 = arith.divf %632, %640 : vector<2x8xf32>
    %cst_222 = arith.constant dense<0xFF800000> : vector<2xf32>
    %642 = vector.multi_reduction <maximumf>, %641, %cst_222 [1] : vector<2x8xf32> to vector<2xf32>
    %643 = vector.shape_cast %642 : vector<2xf32> to vector<2x1xf32>
    %644 = vector.broadcast %643 : vector<2x1xf32> to vector<2x8xf32>
    %645 = arith.subf %641, %644 : vector<2x8xf32>
    %646 = math.exp %645 : vector<2x8xf32>
    %cst_223 = arith.constant dense<0.000000e+00> : vector<2xf32>
    %647 = vector.multi_reduction <add>, %646, %cst_223 [1] : vector<2x8xf32> to vector<2xf32>
    %648 = vector.shape_cast %647 : vector<2xf32> to vector<2x1xf32>
    %649 = vector.broadcast %648 : vector<2x1xf32> to vector<2x8xf32>
    %650 = arith.divf %646, %649 : vector<2x8xf32>
    %651 = vector.shape_cast %650 : vector<2x8xf32> to vector<2x8x1xf32>
    %652 = vector.broadcast %651 : vector<2x8x1xf32> to vector<2x8x32xf32>
    %653 = arith.mulf %652, %408 : vector<2x8x32xf32>
    %cst_224 = arith.constant dense<0.000000e+00> : vector<2x32xf32>
    %654 = vector.multi_reduction <add>, %653, %cst_224 [1] : vector<2x8x32xf32> to vector<2x32xf32>
    %c0_225 = arith.constant 0 : index
    %c0_226 = arith.constant 0 : index
    %655 = vector.load %arg13[%c0_225, %c0_226] : memref<2x64xf32, #tpu.memory_space<vmem>>, vector<2x32xf32>
    tpu.vector_store %arg13[%c0_225, %c0_226], %654 {strides = array<i32>} : memref<2x64xf32, #tpu.memory_space<vmem>>, vector<2x32xf32>,
    %c0_227 = arith.constant 0 : index
    %c32_228 = arith.constant 32 : index
    %656 = vector.load %arg13[%c0_227, %c32_228] : memref<2x64xf32, #tpu.memory_space<vmem>>, vector<2x32xf32>
    tpu.vector_store %arg13[%c0_227, %c32_228], %628 {strides = array<i32>} : memref<2x64xf32, #tpu.memory_space<vmem>>, vector<2x32xf32>,
    %c0_229 = arith.constant 0 : index
    %c0_230 = arith.constant 0 : index
    %657 = vector.load %arg13[%c0_229, %c0_230] : memref<2x64xf32, #tpu.memory_space<vmem>>, vector<2x64xf32>
    %c0_231 = arith.constant 0 : index
    %c0_232 = arith.constant 0 : index
    %658 = vector.load %arg10[%c0_231, %c0_232] : memref<64x256xf32, #tpu.memory_space<vmem>>, vector<64x256xf32>
    %cst_233 = arith.constant dense<0.000000e+00> : vector<2x256xf32>
    %659 = tpu.matmul %657, %658, %cst_233 {dimension_numbers = #tpu.dot_dimension_numbers<[1], [0], [0], [1], [0, 0, 1, 1], [], []>} : vector<2x64xf32>, vector<64x256xf32>, vector<2x256xf32> -> vector<2x256xf32>
    %660 = vector.extract_strided_slice %659 {offsets = [0, 128], sizes = [2, 128], strides = [1, 1]} : vector<2x256xf32> to vector<2x128xf32>
    %c0_234 = arith.constant 0 : index
    %c0_235 = arith.constant 0 : index
    %661 = vector.load %arg11[%c0_234, %c0_235] : memref<1x128xf32, #tpu.memory_space<vmem>>, vector<1x128xf32>
    %662 = vector.broadcast %661 : vector<1x128xf32> to vector<2x128xf32>
    %663 = arith.addf %660, %662 : vector<2x128xf32>
    %c3 = arith.constant 3 : index
    %c0_236 = arith.constant 0 : index
    %c0_237 = arith.constant 0 : index
    %664 = vector.load %arg12[%c3, %c0_236, %c0_237] : memref<5x2x128xf32, #tpu.memory_space<vmem>>, vector<1x2x128xf32>
    %665 = vector.shape_cast %664 : vector<1x2x128xf32> to vector<2x128xf32>
    %666 = vector.shape_cast %663 : vector<2x128xf32> to vector<1x2x128xf32>
    tpu.vector_store %arg12[%c3, %c0_236, %c0_237], %666 {strides = array<i32>} : memref<5x2x128xf32, #tpu.memory_space<vmem>>, vector<1x2x128xf32>,
    %667 = vector.extract_strided_slice %21 {offsets = [8, 0], sizes = [2, 128], strides = [1, 1]} : vector<10x128xf32> to vector<2x128xf32>
    %668 = vector.extract_strided_slice %659 {offsets = [0, 0], sizes = [2, 128], strides = [1, 1]} : vector<2x256xf32> to vector<2x128xf32>
    %669 = arith.addf %667, %668 : vector<2x128xf32>
    %670 = arith.negf %669 : vector<2x128xf32>
    %671 = math.exp %670 : vector<2x128xf32>
    %cst_238 = arith.constant 1.000000e+00 : f32
    %672 = vector.broadcast %cst_238 : f32 to vector<2x128xf32>
    %673 = arith.addf %672, %671 : vector<2x128xf32>
    %674 = arith.divf %672, %673 : vector<2x128xf32>
    %675 = math.tanh %669 : vector<2x128xf32>
    %676 = vector.extract_strided_slice %674 {offsets = [0, 0], sizes = [2, 32], strides = [1, 1]} : vector<2x128xf32> to vector<2x32xf32>
    %677 = vector.extract_strided_slice %674 {offsets = [0, 32], sizes = [2, 32], strides = [1, 1]} : vector<2x128xf32> to vector<2x32xf32>
    %678 = vector.extract_strided_slice %675 {offsets = [0, 64], sizes = [2, 32], strides = [1, 1]} : vector<2x128xf32> to vector<2x32xf32>
    %679 = vector.extract_strided_slice %674 {offsets = [0, 96], sizes = [2, 32], strides = [1, 1]} : vector<2x128xf32> to vector<2x32xf32>
    %680 = arith.mulf %677, %626 : vector<2x32xf32>
    %681 = arith.mulf %676, %678 : vector<2x32xf32>
    %682 = arith.addf %680, %681 : vector<2x32xf32>
    %683 = math.tanh %682 : vector<2x32xf32>
    %684 = arith.mulf %679, %683 : vector<2x32xf32>
    %c32_239 = arith.constant 32 : index
    %c128 = arith.constant 128 : index
    %685 = vector.load %arg10[%c32_239, %c128] : memref<64x256xf32, #tpu.memory_space<vmem>>, vector<32x128xf32>
    %cst_240 = arith.constant dense<0.000000e+00> : vector<2x128xf32>
    %686 = tpu.matmul %684, %685, %cst_240 {dimension_numbers = #tpu.dot_dimension_numbers<[1], [0], [0], [1], [0, 0, 1, 1], [], []>} : vector<2x32xf32>, vector<32x128xf32>, vector<2x128xf32> -> vector<2x128xf32>
    %c0_241 = arith.constant 0 : index
    %c0_242 = arith.constant 0 : index
    %687 = vector.load %arg11[%c0_241, %c0_242] : memref<1x128xf32, #tpu.memory_space<vmem>>, vector<1x128xf32>
    %688 = vector.broadcast %687 : vector<1x128xf32> to vector<2x128xf32>
    %689 = arith.addf %686, %688 : vector<2x128xf32>
    %c4 = arith.constant 4 : index
    %c0_243 = arith.constant 0 : index
    %c0_244 = arith.constant 0 : index
    %690 = vector.load %arg12[%c4, %c0_243, %c0_244] : memref<5x2x128xf32, #tpu.memory_space<vmem>>, vector<1x2x128xf32>
    %691 = vector.shape_cast %690 : vector<1x2x128xf32> to vector<2x128xf32>
    %692 = vector.shape_cast %689 : vector<2x128xf32> to vector<1x2x128xf32>
    tpu.vector_store %arg12[%c4, %c0_243, %c0_244], %692 {strides = array<i32>} : memref<5x2x128xf32, #tpu.memory_space<vmem>>, vector<1x2x128xf32>,
    return
  }
  func.func @transform_0(%arg0: i32) -> (i32, i32) {
    %c0_i32 = arith.constant 0 : i32
    %c0_i32_0 = arith.constant 0 : i32
    %c0_i32_1 = arith.constant 0 : i32
    return %c0_i32, %c0_i32_0 : i32, i32
  }
  func.func @transform_1(%arg0: i32) -> (i32, i32) {
    %c0_i32 = arith.constant 0 : i32
    %c0_i32_0 = arith.constant 0 : i32
    %c0_i32_1 = arith.constant 0 : i32
    return %c0_i32, %c0_i32_0 : i32, i32
  }
  func.func @transform_2(%arg0: i32) -> (i32, i32) {
    %c0_i32 = arith.constant 0 : i32
    %c0_i32_0 = arith.constant 0 : i32
    %c0_i32_1 = arith.constant 0 : i32
    return %c0_i32, %c0_i32_0 : i32, i32
  }
  func.func @transform_3(%arg0: i32) -> (i32, i32) {
    %c0_i32 = arith.constant 0 : i32
    %c0_i32_0 = arith.constant 0 : i32
    %c0_i32_1 = arith.constant 0 : i32
    return %c0_i32, %c0_i32_0 : i32, i32
  }
  func.func @transform_4(%arg0: i32) -> (i32, i32) {
    %c0_i32 = arith.constant 0 : i32
    %c0_i32_0 = arith.constant 0 : i32
    %c0_i32_1 = arith.constant 0 : i32
    return %c0_i32, %c0_i32_0 : i32, i32
  }
  func.func @transform_5(%arg0: i32) -> (i32, i32) {
    %c0_i32 = arith.constant 0 : i32
    %c0_i32_0 = arith.constant 0 : i32
    %c0_i32_1 = arith.constant 0 : i32
    return %c0_i32, %c0_i32_0 : i32, i32
  }
  func.func @transform_6(%arg0: i32) -> (i32, i32) {
    %c0_i32 = arith.constant 0 : i32
    %c0_i32_0 = arith.constant 0 : i32
    %c0_i32_1 = arith.constant 0 : i32
    return %c0_i32, %c0_i32_0 : i32, i32
  }
  func.func @transform_7(%arg0: i32) -> (i32, i32) {
    %c0_i32 = arith.constant 0 : i32
    %c0_i32_0 = arith.constant 0 : i32
    %c0_i32_1 = arith.constant 0 : i32
    return %c0_i32, %c0_i32_0 : i32, i32
  }
  func.func @transform_8(%arg0: i32) -> (i32, i32) {
    %c0_i32 = arith.constant 0 : i32
    %c0_i32_0 = arith.constant 0 : i32
    %c0_i32_1 = arith.constant 0 : i32
    return %c0_i32, %c0_i32_0 : i32, i32
  }
  func.func @transform_9(%arg0: i32) -> (i32, i32) {
    %c0_i32 = arith.constant 0 : i32
    %c0_i32_0 = arith.constant 0 : i32
    %c0_i32_1 = arith.constant 0 : i32
    return %c0_i32, %c0_i32_0 : i32, i32
  }
  func.func @transform_10(%arg0: i32) -> (i32, i32) {
    %c0_i32 = arith.constant 0 : i32
    %c0_i32_0 = arith.constant 0 : i32
    %c0_i32_1 = arith.constant 0 : i32
    return %c0_i32, %c0_i32_0 : i32, i32
  }
  func.func @transform_11(%arg0: i32) -> (i32, i32, i32) {
    %c0_i32 = arith.constant 0 : i32
    %c0_i32_0 = arith.constant 0 : i32
    %c0_i32_1 = arith.constant 0 : i32
    %c0_i32_2 = arith.constant 0 : i32
    return %c0_i32, %c0_i32_0, %c0_i32_1 : i32, i32, i32
  }
}

</mosaic_0001>

<llo_original>
// kernel: encoder_decoder_forward.1
$region0: #{encoder_decoder_forward.1}
  #allocation0 [shape = 'u32[]', space=smem, size = 0x4, offset = 0x4, fixed_abs, tag = 'smem constant byte address 0x4 - core index']
  #allocation1 [shape = 'u32[144,128]{1,0:T(1,128)}', space=vmem, size = 0x12000, scoped, tag = 'internal scratch']
  #allocation2 [shape = 'f32[2,64]{1,0:T(2,128)}', space=vmem, size = 0x400, scoped, tag = 'scratch operand']
  %s0 = inlined_call_operand.vmem [shape: s32[16,1], index: 0, kind: input, shape index: {}]
  %s1 = inlined_call_operand.vmem [shape: s32[10,1], index: 1, kind: input, shape index: {}]
  %s2 = inlined_call_operand.vmem [shape: f32[20,128], index: 2, kind: input, shape index: {}]
  %s3 = inlined_call_operand.vmem [shape: f32[1,128], index: 3, kind: input, shape index: {}]
  %s4 = inlined_call_operand.vmem [shape: f32[32,128], index: 4, kind: input, shape index: {}]
  %s5 = inlined_call_operand.vmem [shape: f32[64,128], index: 5, kind: input, shape index: {}]
  %s6 = inlined_call_operand.vmem [shape: f32[1,128], index: 6, kind: input, shape index: {}]
  %s7 = inlined_call_operand.vmem [shape: f32[20,128], index: 7, kind: input, shape index: {}]
  %s8 = inlined_call_operand.vmem [shape: f32[1,128], index: 8, kind: input, shape index: {}]
  %s9 = inlined_call_operand.vmem [shape: f32[64,256], index: 9, kind: input, shape index: {}]
  %s10 = inlined_call_operand.vmem [shape: f32[1,128], index: 10, kind: input, shape index: {}]
  %s11 = inlined_call_operand.hbm [shape: f32[5,2,128], index: 11, kind: output, shape index: {}]
  %s12 = sld [smem:[#allocation0]]
  $region54: #{encoder_decoder_forward.1} parent=0
    _
  %s14 = ssub.s32 1, %s12
  %s15 = scalar_select 0, %s14, %s12
  $region1: #{encoder_decoder_forward.1} parent=0
    #allocation3 [shape = 'u8[5120]{0}', space=vmem, size = 0x1400, scoped, tag = 'output window, operand 0, single buffered']
    #allocation4 [shape = 's32[1]{0}', space=sflag, size = 0x4, scoped, tag = 'scoped memory for encoder_decoder_forward.1']
    %16 = vsyncpa [#allocation4], 0
    // Predicated region
    $region2: #{encoder_decoder_forward.1} parent=1 // pred_check
      _
    $region3: #{encoder_decoder_forward.1} parent=1 // pred_check_branch
      %18 = sbr.rel (0) target = $region5
    $region4: #{encoder_decoder_forward.1} parent=1 // pred_region
      _
    $region5: #{encoder_decoder_forward.1} parent=1 // pred_fallthru
      _
    // Predicated region
    $region6: #{encoder_decoder_forward.1} parent=1 // pred_check
      _
    $region7: #{encoder_decoder_forward.1} parent=1 // pred_check_branch
      %20 = sbr.rel (0) target = $region9
    $region8: #{encoder_decoder_forward.1} parent=1 // pred_region
      _
    $region9: #{encoder_decoder_forward.1} parent=1 // pred_fallthru
      _
    // Predicated region
    $region10: #{encoder_decoder_forward.1} parent=1 // pred_check
      _
    $region11: #{encoder_decoder_forward.1} parent=1 // pred_check_branch
      %22 = sbr.rel (0) target = $region13
    $region12: #{encoder_decoder_forward.1} parent=1 // pred_region
      _
    $region13: #{encoder_decoder_forward.1} parent=1 // pred_fallthru
      _
    // Predicated region
    $region14: #{encoder_decoder_forward.1} parent=1 // pred_check
      _
    $region15: #{encoder_decoder_forward.1} parent=1 // pred_check_branch
      %24 = sbr.rel (0) target = $region17
    $region16: #{encoder_decoder_forward.1} parent=1 // pred_region
      _
    $region17: #{encoder_decoder_forward.1} parent=1 // pred_fallthru
      _
    // Predicated region
    $region18: #{encoder_decoder_forward.1} parent=1 // pred_check
      _
    $region19: #{encoder_decoder_forward.1} parent=1 // pred_check_branch
      %26 = sbr.rel (0) target = $region21
    $region20: #{encoder_decoder_forward.1} parent=1 // pred_region
      _
    $region21: #{encoder_decoder_forward.1} parent=1 // pred_fallthru
      _
    // Predicated region
    $region22: #{encoder_decoder_forward.1} parent=1 // pred_check
      _
    $region23: #{encoder_decoder_forward.1} parent=1 // pred_check_branch
      %28 = sbr.rel (0) target = $region25
    $region24: #{encoder_decoder_forward.1} parent=1 // pred_region
      _
    $region25: #{encoder_decoder_forward.1} parent=1 // pred_fallthru
      _
    // Predicated region
    $region26: #{encoder_decoder_forward.1} parent=1 // pred_check
      _
    $region27: #{encoder_decoder_forward.1} parent=1 // pred_check_branch
      %30 = sbr.rel (0) target = $region29
    $region28: #{encoder_decoder_forward.1} parent=1 // pred_region
      _
    $region29: #{encoder_decoder_forward.1} parent=1 // pred_fallthru
      _
    // Predicated region
    $region30: #{encoder_decoder_forward.1} parent=1 // pred_check
      _
    $region31: #{encoder_decoder_forward.1} parent=1 // pred_check_branch
      %32 = sbr.rel (0) target = $region33
    $region32: #{encoder_decoder_forward.1} parent=1 // pred_region
      _
    $region33: #{encoder_decoder_forward.1} parent=1 // pred_fallthru
      _
    // Predicated region
    $region34: #{encoder_decoder_forward.1} parent=1 // pred_check
      _
    $region35: #{encoder_decoder_forward.1} parent=1 // pred_check_branch
      %34 = sbr.rel (0) target = $region37
    $region36: #{encoder_decoder_forward.1} parent=1 // pred_region
      _
    $region37: #{encoder_decoder_forward.1} parent=1 // pred_fallthru
      _
    // Predicated region
    $region38: #{encoder_decoder_forward.1} parent=1 // pred_check
      _
    $region39: #{encoder_decoder_forward.1} parent=1 // pred_check_branch
      %36 = sbr.rel (0) target = $region41
    $region40: #{encoder_decoder_forward.1} parent=1 // pred_region
      _
    $region41: #{encoder_decoder_forward.1} parent=1 // pred_fallthru
      _
    // Predicated region
    $region42: #{encoder_decoder_forward.1} parent=1 // pred_check
      _
    $region43: #{encoder_decoder_forward.1} parent=1 // pred_check_branch
      %38 = sbr.rel (0) target = $region45
    $region44: #{encoder_decoder_forward.1} parent=1 // pred_region
      _
    $region45: #{encoder_decoder_forward.1} parent=1 // pred_fallthru
      _
    %v39 = vlaneseq
    %v40 = vand.u32 %v39, 127
    %v41 = vld [vmem:[%s0] sm:$0xff]
    %v42 = vld [vmem:[%s0 + $0x8] sm:$0xff]
    %43 = vset.pattern.permute.xlu0 0
    %44 = vperm.xlu0 %43, %v41
    %v45 = vpop.permute.xlu0 %44
    %46 = vset.pattern.permute.xlu0 0
    %47 = vperm.xlu0 %46, %v42
    %v48 = vpop.permute.xlu0 %47
    %vm49 = vcmp.eq.s32.totalorder %v45, %v40
    %vm50 = vcmp.eq.s32.totalorder %v48, %v40
    %v51 = vsel %vm49, 1, 0
    %v52 = vsel %vm50, 1, 0
    %v53 = vcvt.s32.f32 %v51
    %v54 = vcvt.s32.f32 %v52
    %v55 = vld [vmem:[%s2] sm:$0xff]
    %v56 = vld [vmem:[%s2 + $0x8] sm:$0xff]
    %v57 = vld [vmem:[%s2 + $0x10] sm:$0xf]
    %v58 = vld [vmem:[%s3] sm:$0x1]
    %v60 = vlaneseq
    %v61 = vshrl.u32 %v60, 7
    %v62 = vsub.s32 0, %v61
    %v63 = vrot.slane %v58, %v62
    %vm65 = vcmask 162816
    %v67 = vsel %vm65, %v53, 0
    %v70 = vsel %vm65, %v54, 0
    %vm72 = vcmask 1043456
    %v74 = vsel %vm72, %v57, 0
    %76 = vmatprep.subr.mxu0 0.0
    %77 = vmatpush1.msra.mxu0 %v55
    %78 = vmatprep.subr.mxu0 0.0
    %79 = vmatpush1.msra.mxu0 %v56
    %80 = vmatprep.subr.mxu0 0.0
    %81 = vmatpush1.msra.mxu0 %v74
    %82 = vmatprep.subr.mxu0 0.0
    %83 = vmatpush1.msra.mxu0 0.0
    %84 = vmatprep.subr.mxu0 0.0
    %85 = vmatpush1.msra.mxu0 0.0
    %86 = vmatprep.subr.mxu0 0.0
    %87 = vmatpush1.msra.mxu0 0.0
    %88 = vmatprep.subr.mxu0 0.0
    %89 = vmatpush1.msra.mxu0 0.0
    %90 = vmatprep.subr.mxu0 0.0
    %91 = vmatpush1.msra.mxu0 0.0
    %92 = vmatprep.subr.mxu0 0.0
    %93 = vmatpush1.msra.mxu0 0.0
    %94 = vmatprep.subr.mxu0 0.0
    %95 = vmatpush1.msra.mxu0 0.0
    %96 = vmatprep.subr.mxu0 0.0
    %97 = vmatpush1.msra.mxu0 0.0
    %98 = vmatprep.subr.mxu0 0.0
    %99 = vmatpush1.msra.mxu0 0.0
    %100 = vmatprep.subr.mxu0 0.0
    %101 = vmatpush1.msra.mxu0 0.0
    %102 = vmatprep.subr.mxu0 0.0
    %103 = vmatpush1.msra.mxu0 0.0
    %104 = vmatprep.subr.mxu0 0.0
    %105 = vmatpush1.msra.mxu0 0.0
    %106 = vmatprep.subr.mxu0 0.0
    %107 = vmatpush1.msra.mxu0 0.0
    %108 = vmatprep.subr.mxu0 0.0
    %109 = vmatpush1.msra.mxu0 0.0
    %110 = vmatprep.subr.mxu0 0.0
    %111 = vmatpush1.msra.mxu0 0.0
    %112 = vmatprep.subr.mxu0 0.0
    %113 = vmatpush1.msra.mxu0 0.0
    %114 = vmatprep.subr.mxu0 0.0
    %115 = vmatpush1.msra.mxu0 0.0
    %116 = vmatprep.subr.mxu0 0.0
    %117 = vmatpush1.msra.mxu0 0.0
    %118 = vmatprep.subr.mxu0 0.0
    %119 = vmatpush1.msra.mxu0 0.0
    %120 = vmatprep.subr.mxu0 0.0
    %121 = vmatpush1.msra.mxu0 0.0
    %122 = vmatprep.subr.mxu0 0.0
    %123 = vmatpush1.msra.mxu0 0.0
    %124 = vmatprep.subr.mxu0 0.0
    %125 = vmatpush1.msra.mxu0 0.0
    %126 = vmatprep.subr.mxu0 0.0
    %127 = vmatpush1.msra.mxu0 0.0
    %128 = vmatprep.subr.mxu0 0.0
    %129 = vmatpush1.msra.mxu0 0.0
    %130 = vmatprep.subr.mxu0 0.0
    %131 = vmatpush1.msra.mxu0 0.0
    %132 = vmatprep.subr.mxu0 0.0
    %133 = vmatpush1.msra.mxu0 0.0
    %134 = vmatprep.subr.mxu0 0.0
    %135 = vmatpush1.msra.mxu0 0.0
    %136 = vmatprep.subr.mxu0 0.0
    %137 = vmatpush1.msra.mxu0 0.0
    %138 = vmatprep.subr.mxu0 0.0
    %139 = vmatpush1.msra.mxu0 0.0
    %140 = vmatprep.mubr.f32.mxu0 0.0
    %141 = vmatmul.mubr.f32.gmra.mrb[0].mxu0 %v67
    %v142 = vpop.f32.mrb[0].mxu0
    %v143 = vadd.f32 %v63, %v142
    %v144 = vpop.f32.mrb[0].mxu0
    %145 = vmatprep.mubr.f32.mxu0 0.0
    %146 = vmatmul.mubr.f32.gmra.mrb[0].mxu0 %v70
    %v147 = vpop.f32.mrb[0].mxu0
    %v148 = vadd.f32 %v63, %v147
    %v149 = vpop.f32.mrb[0].mxu0
    %150 = vdwg.mxu0
    %v151 = vld [vmem:[%s1] sm:$0xff]
    %v152 = vld [vmem:[%s1 + $0x8] sm:$0x3]
    %153 = vset.pattern.permute.xlu0 0
    %154 = vperm.xlu0 %153, %v151
    %v155 = vpop.permute.xlu0 %154
    %156 = vset.pattern.permute.xlu0 0
    %157 = vperm.xlu0 %156, %v152
    %v158 = vpop.permute.xlu0 %157
    %vm159 = vcmp.eq.s32.totalorder %v155, %v40
    %vm160 = vcmp.eq.s32.totalorder %v158, %v40
    %v161 = vsel %vm159, 1, 0
    %v162 = vsel %vm160, 1, 0
    %v163 = vcvt.s32.f32 %v161
    %v164 = vcvt.s32.f32 %v162
    %v165 = vld [vmem:[%s7] sm:$0xff]
    %v166 = vld [vmem:[%s7 + $0x8] sm:$0xff]
    %v167 = vld [vmem:[%s7 + $0x10] sm:$0xf]
    %v168 = vld [vmem:[%s8] sm:$0x1]
    %v170 = vlaneseq
    %v171 = vshrl.u32 %v170, 7
    %v172 = vsub.s32 0, %v171
    %v173 = vrot.slane %v168, %v172
    %v176 = vsel %vm65, %v163, 0
    %v179 = vsel %vm65, %v164, 0
    %v182 = vsel %vm72, %v167, 0
    %184 = vmatprep.subr.mxu0 0.0
    %185 = vmatpush1.msra.mxu0 %v165
    %186 = vmatprep.subr.mxu0 0.0
    %187 = vmatpush1.msra.mxu0 %v166
    %188 = vmatprep.subr.mxu0 0.0
    %189 = vmatpush1.msra.mxu0 %v182
    %190 = vmatprep.subr.mxu0 0.0
    %191 = vmatpush1.msra.mxu0 0.0
    %192 = vmatprep.subr.mxu0 0.0
    %193 = vmatpush1.msra.mxu0 0.0
    %194 = vmatprep.subr.mxu0 0.0
    %195 = vmatpush1.msra.mxu0 0.0
    %196 = vmatprep.subr.mxu0 0.0
    %197 = vmatpush1.msra.mxu0 0.0
    %198 = vmatprep.subr.mxu0 0.0
    %199 = vmatpush1.msra.mxu0 0.0
    %200 = vmatprep.subr.mxu0 0.0
    %201 = vmatpush1.msra.mxu0 0.0
    %202 = vmatprep.subr.mxu0 0.0
    %203 = vmatpush1.msra.mxu0 0.0
    %204 = vmatprep.subr.mxu0 0.0
    %205 = vmatpush1.msra.mxu0 0.0
    %206 = vmatprep.subr.mxu0 0.0
    %207 = vmatpush1.msra.mxu0 0.0
    %208 = vmatprep.subr.mxu0 0.0
    %209 = vmatpush1.msra.mxu0 0.0
    %210 = vmatprep.subr.mxu0 0.0
    %211 = vmatpush1.msra.mxu0 0.0
    %212 = vmatprep.subr.mxu0 0.0
    %213 = vmatpush1.msra.mxu0 0.0
    %214 = vmatprep.subr.mxu0 0.0
    %215 = vmatpush1.msra.mxu0 0.0
    %216 = vmatprep.subr.mxu0 0.0
    %217 = vmatpush1.msra.mxu0 0.0
    %218 = vmatprep.subr.mxu0 0.0
    %219 = vmatpush1.msra.mxu0 0.0
    %220 = vmatprep.subr.mxu0 0.0
    %221 = vmatpush1.msra.mxu0 0.0
    %222 = vmatprep.subr.mxu0 0.0
    %223 = vmatpush1.msra.mxu0 0.0
    %224 = vmatprep.subr.mxu0 0.0
    %225 = vmatpush1.msra.mxu0 0.0
    %226 = vmatprep.subr.mxu0 0.0
    %227 = vmatpush1.msra.mxu0 0.0
    %228 = vmatprep.subr.mxu0 0.0
    %229 = vmatpush1.msra.mxu0 0.0
    %230 = vmatprep.subr.mxu0 0.0
    %231 = vmatpush1.msra.mxu0 0.0
    %232 = vmatprep.subr.mxu0 0.0
    %233 = vmatpush1.msra.mxu0 0.0
    %234 = vmatprep.subr.mxu0 0.0
    %235 = vmatpush1.msra.mxu0 0.0
    %236 = vmatprep.subr.mxu0 0.0
    %237 = vmatpush1.msra.mxu0 0.0
    %238 = vmatprep.subr.mxu0 0.0
    %239 = vmatpush1.msra.mxu0 0.0
    %240 = vmatprep.subr.mxu0 0.0
    %241 = vmatpush1.msra.mxu0 0.0
    %242 = vmatprep.subr.mxu0 0.0
    %243 = vmatpush1.msra.mxu0 0.0
    %244 = vmatprep.subr.mxu0 0.0
    %245 = vmatpush1.msra.mxu0 0.0
    %246 = vmatprep.subr.mxu0 0.0
    %247 = vmatpush1.msra.mxu0 0.0
    %248 = vmatprep.mubr.f32.mxu0 0.0
    %249 = vmatmul.mubr.f32.gmra.mrb[0].mxu0 %v176
    %v250 = vpop.f32.mrb[0].mxu0
    %v251 = vadd.f32 %v173, %v250
    %v252 = vpop.f32.mrb[0].mxu0
    %253 = vmatprep.mubr.f32.mxu0 0.0
    %254 = vmatmul.mubr.f32.gmra.mrb[0].mxu0 %v179
    %v255 = vpop.f32.mrb[0].mxu0
    %v256 = vadd.f32 %v173, %v255
    %v257 = vpop.f32.mrb[0].mxu0
    %258 = vdwg.mxu0
    %v259 = vlaneseq
    %v260 = vshrl.u32 %v259, 7
    %v261 = vld [vmem:[%s4] sm:$0xff]
    %v262 = vld [vmem:[%s4 + $0x8] sm:$0xff]
    %v263 = vld [vmem:[%s4 + $0x10] sm:$0xff]
    %v264 = vld [vmem:[%s4 + $0x18] sm:$0xff]
    %vm265 = vcmask 261120
    %v267 = vsel %vm265, 0.0, 0
    %269 = vmatprep.subr.mxu0 0.0
    %270 = vmatpush1.msra.mxu0 %v261
    %271 = vmatprep.subr.mxu0 0.0
    %272 = vmatpush1.msra.mxu0 %v262
    %273 = vmatprep.subr.mxu0 0.0
    %274 = vmatpush1.msra.mxu0 %v263
    %275 = vmatprep.subr.mxu0 0.0
    %276 = vmatpush1.msra.mxu0 %v264
    %277 = vmatprep.subr.mxu0 0.0
    %278 = vmatpush1.msra.mxu0 0.0
    %279 = vmatprep.subr.mxu0 0.0
    %280 = vmatpush1.msra.mxu0 0.0
    %281 = vmatprep.subr.mxu0 0.0
    %282 = vmatpush1.msra.mxu0 0.0
    %283 = vmatprep.subr.mxu0 0.0
    %284 = vmatpush1.msra.mxu0 0.0
    %285 = vmatprep.subr.mxu0 0.0
    %286 = vmatpush1.msra.mxu0 0.0
    %287 = vmatprep.subr.mxu0 0.0
    %288 = vmatpush1.msra.mxu0 0.0
    %289 = vmatprep.subr.mxu0 0.0
    %290 = vmatpush1.msra.mxu0 0.0
    %291 = vmatprep.subr.mxu0 0.0
    %292 = vmatpush1.msra.mxu0 0.0
    %293 = vmatprep.subr.mxu0 0.0
    %294 = vmatpush1.msra.mxu0 0.0
    %295 = vmatprep.subr.mxu0 0.0
    %296 = vmatpush1.msra.mxu0 0.0
    %297 = vmatprep.subr.mxu0 0.0
    %298 = vmatpush1.msra.mxu0 0.0
    %299 = vmatprep.subr.mxu0 0.0
    %300 = vmatpush1.msra.mxu0 0.0
    %301 = vmatprep.subr.mxu0 0.0
    %302 = vmatpush1.msra.mxu0 0.0
    %303 = vmatprep.subr.mxu0 0.0
    %304 = vmatpush1.msra.mxu0 0.0
    %305 = vmatprep.subr.mxu0 0.0
    %306 = vmatpush1.msra.mxu0 0.0
    %307 = vmatprep.subr.mxu0 0.0
    %308 = vmatpush1.msra.mxu0 0.0
    %309 = vmatprep.subr.mxu0 0.0
    %310 = vmatpush1.msra.mxu0 0.0
    %311 = vmatprep.subr.mxu0 0.0
    %312 = vmatpush1.msra.mxu0 0.0
    %313 = vmatprep.subr.mxu0 0.0
    %314 = vmatpush1.msra.mxu0 0.0
    %315 = vmatprep.subr.mxu0 0.0
    %316 = vmatpush1.msra.mxu0 0.0
    %317 = vmatprep.subr.mxu0 0.0
    %318 = vmatpush1.msra.mxu0 0.0
    %319 = vmatprep.subr.mxu0 0.0
    %320 = vmatpush1.msra.mxu0 0.0
    %321 = vmatprep.subr.mxu0 0.0
    %322 = vmatpush1.msra.mxu0 0.0
    %323 = vmatprep.subr.mxu0 0.0
    %324 = vmatpush1.msra.mxu0 0.0
    %325 = vmatprep.subr.mxu0 0.0
    %326 = vmatpush1.msra.mxu0 0.0
    %327 = vmatprep.subr.mxu0 0.0
    %328 = vmatpush1.msra.mxu0 0.0
    %329 = vmatprep.subr.mxu0 0.0
    %330 = vmatpush1.msra.mxu0 0.0
    %331 = vmatprep.subr.mxu0 0.0
    %332 = vmatpush1.msra.mxu0 0.0
    %333 = vmatprep.mubr.f32.mxu0 0.0
    %334 = vmatmul.mubr.f32.gmra.mrb[0].mxu0 %v267
    %v335 = vpop.f32.mrb[0].mxu0
    %v336 = vadd.f32 0.0, %v335
    %v337 = vpop.f32.mrb[0].mxu0
    %338 = vdwg.mxu0
    %v339 = vadd.f32 %v143, %v336
    %v340 = vxor.u32 %v339, 2147483648
    %v341 = vmul.f32 %v340, 1.442695
    %v342 = vpow.pop %v341
    %v343 = vadd.f32 %v342, 1.0
    %v344 = vrcp.pop %v343
    %v345 = vmul.f32 1.0, %v344
    %v346 = vtanh.pop %v339
    %v347 = vmul.f32 %v345, 0.0
    %349 = vrot.lane.b32.xlu0 %v346, 64
    %v350 = vpop.permute.xlu0 %349
    %v352 = vmul.f32 %v345, %v350
    %354 = vrot.lane.b32.xlu0 %v352, 32
    %v355 = vpop.permute.xlu0 %354
    %v357 = vadd.f32 %v347, %v355
    %v358 = vtanh.pop %v357
    %360 = vrot.lane.b32.xlu0 %v358, 64
    %v361 = vpop.permute.xlu0 %360
    %v363 = vmul.f32 %v345, %v361
    %365 = vrot.lane.b32.xlu0 %v363, 32
    %v366 = vpop.permute.xlu0 %365
    %vm368 = vcmask 254976
    %369 = vst.msk [vmem:[#allocation2] sm:$0x3] %vm368, %v366
    %vm370 = vcmask 517376
    %371 = vst.msk [vmem:[#allocation2] sm:$0x3] %vm370, 0.0
    %v372 = vld [vmem:[#allocation2] sm:$0x3]
    %v373 = vld [vmem:[%s5] sm:$0xff]
    %v374 = vld [vmem:[%s5 + $0x8] sm:$0xff]
    %v375 = vld [vmem:[%s5 + $0x10] sm:$0xff]
    %v376 = vld [vmem:[%s5 + $0x18] sm:$0xff]
    %v377 = vld [vmem:[%s5 + $0x20] sm:$0xff]
    %v378 = vld [vmem:[%s5 + $0x28] sm:$0xff]
    %v379 = vld [vmem:[%s5 + $0x30] sm:$0xff]
    %v380 = vld [vmem:[%s5 + $0x38] sm:$0xff]
    %v381 = vld [vmem:[%s6] sm:$0x1]
    %v383 = vlaneseq
    %v384 = vshrl.u32 %v383, 7
    %v385 = vsub.s32 0, %v384
    %v386 = vrot.slane %v381, %v385
    %vm388 = vcmask 523264
    %v390 = vsel %vm388, %v372, 0
    %392 = vmatprep.subr.mxu0 0.0
    %393 = vmatpush1.msra.mxu0 %v373
    %394 = vmatprep.subr.mxu0 0.0
    %395 = vmatpush1.msra.mxu0 %v374
    %396 = vmatprep.subr.mxu0 0.0
    %397 = vmatpush1.msra.mxu0 %v375
    %398 = vmatprep.subr.mxu0 0.0
    %399 = vmatpush1.msra.mxu0 %v376
    %400 = vmatprep.subr.mxu0 0.0
    %401 = vmatpush1.msra.mxu0 %v377
    %402 = vmatprep.subr.mxu0 0.0
    %403 = vmatpush1.msra.mxu0 %v378
    %404 = vmatprep.subr.mxu0 0.0
    %405 = vmatpush1.msra.mxu0 %v379
    %406 = vmatprep.subr.mxu0 0.0
    %407 = vmatpush1.msra.mxu0 %v380
    %408 = vmatprep.subr.mxu0 0.0
    %409 = vmatpush1.msra.mxu0 0.0
    %410 = vmatprep.subr.mxu0 0.0
    %411 = vmatpush1.msra.mxu0 0.0
    %412 = vmatprep.subr.mxu0 0.0
    %413 = vmatpush1.msra.mxu0 0.0
    %414 = vmatprep.subr.mxu0 0.0
    %415 = vmatpush1.msra.mxu0 0.0
    %416 = vmatprep.subr.mxu0 0.0
    %417 = vmatpush1.msra.mxu0 0.0
    %418 = vmatprep.subr.mxu0 0.0
    %419 = vmatpush1.msra.mxu0 0.0
    %420 = vmatprep.subr.mxu0 0.0
    %421 = vmatpush1.msra.mxu0 0.0
    %422 = vmatprep.subr.mxu0 0.0
    %423 = vmatpush1.msra.mxu0 0.0
    %424 = vmatprep.subr.mxu0 0.0
    %425 = vmatpush1.msra.mxu0 0.0
    %426 = vmatprep.subr.mxu0 0.0
    %427 = vmatpush1.msra.mxu0 0.0
    %428 = vmatprep.subr.mxu0 0.0
    %429 = vmatpush1.msra.mxu0 0.0
    %430 = vmatprep.subr.mxu0 0.0
    %431 = vmatpush1.msra.mxu0 0.0
    %432 = vmatprep.subr.mxu0 0.0
    %433 = vmatpush1.msra.mxu0 0.0
    %434 = vmatprep.subr.mxu0 0.0
    %435 = vmatpush1.msra.mxu0 0.0
    %436 = vmatprep.subr.mxu0 0.0
    %437 = vmatpush1.msra.mxu0 0.0
    %438 = vmatprep.subr.mxu0 0.0
    %439 = vmatpush1.msra.mxu0 0.0
    %440 = vmatprep.subr.mxu0 0.0
    %441 = vmatpush1.msra.mxu0 0.0
    %442 = vmatprep.subr.mxu0 0.0
    %443 = vmatpush1.msra.mxu0 0.0
    %444 = vmatprep.subr.mxu0 0.0
    %445 = vmatpush1.msra.mxu0 0.0
    %446 = vmatprep.subr.mxu0 0.0
    %447 = vmatpush1.msra.mxu0 0.0
    %448 = vmatprep.subr.mxu0 0.0
    %449 = vmatpush1.msra.mxu0 0.0
    %450 = vmatprep.subr.mxu0 0.0
    %451 = vmatpush1.msra.mxu0 0.0
    %452 = vmatprep.subr.mxu0 0.0
    %453 = vmatpush1.msra.mxu0 0.0
    %454 = vmatprep.subr.mxu0 0.0
    %455 = vmatpush1.msra.mxu0 0.0
    %456 = vmatprep.mubr.f32.mxu0 0.0
    %457 = vmatmul.mubr.f32.gmra.mrb[0].mxu0 %v390
    %v458 = vpop.f32.mrb[0].mxu0
    %v459 = vadd.f32 %v386, %v458
    %v460 = vpop.f32.mrb[0].mxu0
    %461 = vdwg.mxu0
    %v462 = vxor.u32 %v459, 2147483648
    %v463 = vmul.f32 %v462, 1.442695
    %v464 = vpow.pop %v463
    %v465 = vadd.f32 %v464, 1.0
    %v466 = vrcp.pop %v465
    %v467 = vmul.f32 1.0, %v466
    %v468 = vtanh.pop %v459
    %v469 = vmul.f32 %v467, 0.0
    %471 = vrot.lane.b32.xlu0 %v468, 64
    %v472 = vpop.permute.xlu0 %471
    %v474 = vmul.f32 %v467, %v472
    %476 = vrot.lane.b32.xlu0 %v474, 32
    %v477 = vpop.permute.xlu0 %476
    %v479 = vadd.f32 %v469, %v477
    %v480 = vtanh.pop %v479
    %482 = vrot.lane.b32.xlu0 %v480, 64
    %v483 = vpop.permute.xlu0 %482
    %v485 = vmul.f32 %v467, %v483
    %vm486 = vcmp.eq.s32.totalorder %v260, 0
    %v489 = vunpack.c.l.s4 1966171168
    %v490 = vunpack.c.0.s8 %v489
    %v491 = vlaneseq
    %v492 = vshrl.u32 %v491, 7
    %v493 = vsub.s32 %v490, %v492
    %v494 = vrot.slane %v485, %v493
    %v495 = vcombine.high %v494, %v494
    %v497 = vunpack.c.l.s4 1966171168
    %v498 = vunpack.c.0.s8 %v497
    %v499 = vlaneseq
    %v500 = vshrl.u32 %v499, 7
    %v501 = vsub.s32 %v498, %v500
    %v502 = vrot.slane %v494, %v501
    %v504 = vunpack.c.l.s4 1966171168
    %v505 = vunpack.c.0.s8 %v504
    %v506 = vlaneseq
    %v507 = vshrl.u32 %v506, 7
    %v508 = vsub.s32 %v505, %v507
    %v509 = vrot.slane %v495, %v508
    %v510 = vlaneseq
    %v511 = vshrl.u32 %v510, 7
    %v512 = vsub.s32 0, %v511
    %v513 = vrot.slane %v502, %v512
    %v514 = vlaneseq
    %v515 = vshrl.u32 %v514, 7
    %v516 = vsub.s32 0, %v515
    %v517 = vrot.slane %v509, %v516
    %v520 = vsel %vm486, %v513, 0.0
    %v521 = vsel %vm486, %v517, 0.0
    %v522 = vld [vmem:[%s4] sm:$0xff]
    %v523 = vld [vmem:[%s4 + $0x8] sm:$0xff]
    %v524 = vld [vmem:[%s4 + $0x10] sm:$0xff]
    %v525 = vld [vmem:[%s4 + $0x18] sm:$0xff]
    %v526 = vsel %vm265, %v366, 0
    %528 = vmatprep.subr.mxu0 0.0
    %529 = vmatpush1.msra.mxu0 %v522
    %530 = vmatprep.subr.mxu0 0.0
    %531 = vmatpush1.msra.mxu0 %v523
    %532 = vmatprep.subr.mxu0 0.0
    %533 = vmatpush1.msra.mxu0 %v524
    %534 = vmatprep.subr.mxu0 0.0
    %535 = vmatpush1.msra.mxu0 %v525
    %536 = vmatprep.subr.mxu0 0.0
    %537 = vmatpush1.msra.mxu0 0.0
    %538 = vmatprep.subr.mxu0 0.0
    %539 = vmatpush1.msra.mxu0 0.0
    %540 = vmatprep.subr.mxu0 0.0
    %541 = vmatpush1.msra.mxu0 0.0
    %542 = vmatprep.subr.mxu0 0.0
    %543 = vmatpush1.msra.mxu0 0.0
    %544 = vmatprep.subr.mxu0 0.0
    %545 = vmatpush1.msra.mxu0 0.0
    %546 = vmatprep.subr.mxu0 0.0
    %547 = vmatpush1.msra.mxu0 0.0
    %548 = vmatprep.subr.mxu0 0.0
    %549 = vmatpush1.msra.mxu0 0.0
    %550 = vmatprep.subr.mxu0 0.0
    %551 = vmatpush1.msra.mxu0 0.0
    %552 = vmatprep.subr.mxu0 0.0
    %553 = vmatpush1.msra.mxu0 0.0
    %554 = vmatprep.subr.mxu0 0.0
    %555 = vmatpush1.msra.mxu0 0.0
    %556 = vmatprep.subr.mxu0 0.0
    %557 = vmatpush1.msra.mxu0 0.0
    %558 = vmatprep.subr.mxu0 0.0
    %559 = vmatpush1.msra.mxu0 0.0
    %560 = vmatprep.subr.mxu0 0.0
    %561 = vmatpush1.msra.mxu0 0.0
    %562 = vmatprep.subr.mxu0 0.0
    %563 = vmatpush1.msra.mxu0 0.0
    %564 = vmatprep.subr.mxu0 0.0
    %565 = vmatpush1.msra.mxu0 0.0
    %566 = vmatprep.subr.mxu0 0.0
    %567 = vmatpush1.msra.mxu0 0.0
    %568 = vmatprep.subr.mxu0 0.0
    %569 = vmatpush1.msra.mxu0 0.0
    %570 = vmatprep.subr.mxu0 0.0
    %571 = vmatpush1.msra.mxu0 0.0
    %572 = vmatprep.subr.mxu0 0.0
    %573 = vmatpush1.msra.mxu0 0.0
    %574 = vmatprep.subr.mxu0 0.0
    %575 = vmatpush1.msra.mxu0 0.0
    %576 = vmatprep.subr.mxu0 0.0
    %577 = vmatpush1.msra.mxu0 0.0
    %578 = vmatprep.subr.mxu0 0.0
    %579 = vmatpush1.msra.mxu0 0.0
    %580 = vmatprep.subr.mxu0 0.0
    %581 = vmatpush1.msra.mxu0 0.0
    %582 = vmatprep.subr.mxu0 0.0
    %583 = vmatpush1.msra.mxu0 0.0
    %584 = vmatprep.subr.mxu0 0.0
    %585 = vmatpush1.msra.mxu0 0.0
    %586 = vmatprep.subr.mxu0 0.0
    %587 = vmatpush1.msra.mxu0 0.0
    %588 = vmatprep.subr.mxu0 0.0
    %589 = vmatpush1.msra.mxu0 0.0
    %590 = vmatprep.subr.mxu0 0.0
    %591 = vmatpush1.msra.mxu0 0.0
    %592 = vmatprep.mubr.f32.mxu0 0.0
    %593 = vmatmul.mubr.f32.gmra.mrb[0].mxu0 %v526
    %v594 = vpop.f32.mrb[0].mxu0
    %v595 = vadd.f32 0.0, %v594
    %v596 = vpop.f32.mrb[0].mxu0
    %597 = vdwg.mxu0
    %v599 = vrot.slane %v595, 6
    %v601 = vadd.f32 %v143, %v599
    %v602 = vxor.u32 %v601, 2147483648
    %v603 = vmul.f32 %v602, 1.442695
    %v604 = vpow.pop %v603
    %v605 = vadd.f32 %v604, 1.0
    %v606 = vrcp.pop %v605
    %v607 = vmul.f32 1.0, %v606
    %v608 = vtanh.pop %v601
    %v610 = vrot.slane %v357, 6
    %v612 = vmul.f32 %v607, %v610
    %614 = vrot.lane.b32.xlu0 %v608, 64
    %v615 = vpop.permute.xlu0 %614
    %v617 = vmul.f32 %v607, %v615
    %619 = vrot.lane.b32.xlu0 %v617, 32
    %v620 = vpop.permute.xlu0 %619
    %v622 = vadd.f32 %v612, %v620
    %v623 = vtanh.pop %v622
    %625 = vrot.lane.b32.xlu0 %v623, 64
    %v626 = vpop.permute.xlu0 %625
    %v628 = vmul.f32 %v607, %v626
    %630 = vrot.lane.b32.xlu0 %v628, 32
    %v631 = vpop.permute.xlu0 %630
    %vm633 = vcmask 257026
    %634 = vst.msk [vmem:[#allocation2 - $0x2] sm:$0xc] %vm633, %v631
    %635 = vrot.lane.b32.xlu0 %v485, 64
    %v636 = vpop.permute.xlu0 %635
    %638 = vst.msk [vmem:[#allocation2] sm:$0x3] %vm370, %v636
    %v639 = vld [vmem:[#allocation2] sm:$0x3]
    %v640 = vld [vmem:[%s5] sm:$0xff]
    %v641 = vld [vmem:[%s5 + $0x8] sm:$0xff]
    %v642 = vld [vmem:[%s5 + $0x10] sm:$0xff]
    %v643 = vld [vmem:[%s5 + $0x18] sm:$0xff]
    %v644 = vld [vmem:[%s5 + $0x20] sm:$0xff]
    %v645 = vld [vmem:[%s5 + $0x28] sm:$0xff]
    %v646 = vld [vmem:[%s5 + $0x30] sm:$0xff]
    %v647 = vld [vmem:[%s5 + $0x38] sm:$0xff]
    %v648 = vld [vmem:[%s6] sm:$0x1]
    %v650 = vlaneseq
    %v651 = vshrl.u32 %v650, 7
    %v652 = vsub.s32 0, %v651
    %v653 = vrot.slane %v648, %v652
    %v656 = vsel %vm388, %v639, 0
    %658 = vmatprep.subr.mxu0 0.0
    %659 = vmatpush1.msra.mxu0 %v640
    %660 = vmatprep.subr.mxu0 0.0
    %661 = vmatpush1.msra.mxu0 %v641
    %662 = vmatprep.subr.mxu0 0.0
    %663 = vmatpush1.msra.mxu0 %v642
    %664 = vmatprep.subr.mxu0 0.0
    %665 = vmatpush1.msra.mxu0 %v643
    %666 = vmatprep.subr.mxu0 0.0
    %667 = vmatpush1.msra.mxu0 %v644
    %668 = vmatprep.subr.mxu0 0.0
    %669 = vmatpush1.msra.mxu0 %v645
    %670 = vmatprep.subr.mxu0 0.0
    %671 = vmatpush1.msra.mxu0 %v646
    %672 = vmatprep.subr.mxu0 0.0
    %673 = vmatpush1.msra.mxu0 %v647
    %674 = vmatprep.subr.mxu0 0.0
    %675 = vmatpush1.msra.mxu0 0.0
    %676 = vmatprep.subr.mxu0 0.0
    %677 = vmatpush1.msra.mxu0 0.0
    %678 = vmatprep.subr.mxu0 0.0
    %679 = vmatpush1.msra.mxu0 0.0
    %680 = vmatprep.subr.mxu0 0.0
    %681 = vmatpush1.msra.mxu0 0.0
    %682 = vmatprep.subr.mxu0 0.0
    %683 = vmatpush1.msra.mxu0 0.0
    %684 = vmatprep.subr.mxu0 0.0
    %685 = vmatpush1.msra.mxu0 0.0
    %686 = vmatprep.subr.mxu0 0.0
    %687 = vmatpush1.msra.mxu0 0.0
    %688 = vmatprep.subr.mxu0 0.0
    %689 = vmatpush1.msra.mxu0 0.0
    %690 = vmatprep.subr.mxu0 0.0
    %691 = vmatpush1.msra.mxu0 0.0
    %692 = vmatprep.subr.mxu0 0.0
    %693 = vmatpush1.msra.mxu0 0.0
    %694 = vmatprep.subr.mxu0 0.0
    %695 = vmatpush1.msra.mxu0 0.0
    %696 = vmatprep.subr.mxu0 0.0
    %697 = vmatpush1.msra.mxu0 0.0
    %698 = vmatprep.subr.mxu0 0.0
    %699 = vmatpush1.msra.mxu0 0.0
    %700 = vmatprep.subr.mxu0 0.0
    %701 = vmatpush1.msra.mxu0 0.0
    %702 = vmatprep.subr.mxu0 0.0
    %703 = vmatpush1.msra.mxu0 0.0
    %704 = vmatprep.subr.mxu0 0.0
    %705 = vmatpush1.msra.mxu0 0.0
    %706 = vmatprep.subr.mxu0 0.0
    %707 = vmatpush1.msra.mxu0 0.0
    %708 = vmatprep.subr.mxu0 0.0
    %709 = vmatpush1.msra.mxu0 0.0
    %710 = vmatprep.subr.mxu0 0.0
    %711 = vmatpush1.msra.mxu0 0.0
    %712 = vmatprep.subr.mxu0 0.0
    %713 = vmatpush1.msra.mxu0 0.0
    %714 = vmatprep.subr.mxu0 0.0
    %715 = vmatpush1.msra.mxu0 0.0
    %716 = vmatprep.subr.mxu0 0.0
    %717 = vmatpush1.msra.mxu0 0.0
    %718 = vmatprep.subr.mxu0 0.0
    %719 = vmatpush1.msra.mxu0 0.0
    %720 = vmatprep.subr.mxu0 0.0
    %721 = vmatpush1.msra.mxu0 0.0
    %722 = vmatprep.mubr.f32.mxu0 0.0
    %723 = vmatmul.mubr.f32.gmra.mrb[0].mxu0 %v656
    %v724 = vpop.f32.mrb[0].mxu0
    %v725 = vadd.f32 %v653, %v724
    %v726 = vpop.f32.mrb[0].mxu0
    %727 = vdwg.mxu0
    %v728 = vxor.u32 %v725, 2147483648
    %v729 = vmul.f32 %v728, 1.442695
    %v730 = vpow.pop %v729
    %v731 = vadd.f32 %v730, 1.0
    %v732 = vrcp.pop %v731
    %v733 = vmul.f32 1.0, %v732
    %v734 = vtanh.pop %v725
    %v735 = vmul.f32 %v733, %v479
    %737 = vrot.lane.b32.xlu0 %v734, 64
    %v738 = vpop.permute.xlu0 %737
    %v740 = vmul.f32 %v733, %v738
    %742 = vrot.lane.b32.xlu0 %v740, 32
    %v743 = vpop.permute.xlu0 %742
    %v745 = vadd.f32 %v735, %v743
    %v746 = vtanh.pop %v745
    %748 = vrot.lane.b32.xlu0 %v746, 64
    %v749 = vpop.permute.xlu0 %748
    %v751 = vmul.f32 %v733, %v749
    %vm752 = vcmp.eq.s32.totalorder %v260, 1
    %v755 = vunpack.c.l.s4 1966171168
    %v756 = vunpack.c.0.s8 %v755
    %v757 = vlaneseq
    %v758 = vshrl.u32 %v757, 7
    %v759 = vsub.s32 %v756, %v758
    %v760 = vrot.slane %v751, %v759
    %v761 = vcombine.high %v760, %v760
    %v763 = vunpack.c.l.s4 1966171168
    %v764 = vunpack.c.0.s8 %v763
    %v765 = vlaneseq
    %v766 = vshrl.u32 %v765, 7
    %v767 = vsub.s32 %v764, %v766
    %v768 = vrot.slane %v760, %v767
    %v770 = vunpack.c.l.s4 1966171168
    %v771 = vunpack.c.0.s8 %v770
    %v772 = vlaneseq
    %v773 = vshrl.u32 %v772, 7
    %v774 = vsub.s32 %v771, %v773
    %v775 = vrot.slane %v761, %v774
    %v776 = vlaneseq
    %v777 = vshrl.u32 %v776, 7
    %v778 = vsub.s32 0, %v777
    %v779 = vrot.slane %v768, %v778
    %v780 = vlaneseq
    %v781 = vshrl.u32 %v780, 7
    %v782 = vsub.s32 0, %v781
    %v783 = vrot.slane %v775, %v782
    %v786 = vsel %vm752, %v779, %v520
    %v787 = vsel %vm752, %v783, %v521
    %v788 = vld [vmem:[%s4] sm:$0xff]
    %v789 = vld [vmem:[%s4 + $0x8] sm:$0xff]
    %v790 = vld [vmem:[%s4 + $0x10] sm:$0xff]
    %v791 = vld [vmem:[%s4 + $0x18] sm:$0xff]
    %v792 = vrot.slane %v628, 2
    %793 = vrot.lane.b32.xlu0 %v792, 32
    %v794 = vpop.permute.xlu0 %793
    %v795 = vsel %vm265, %v794, 0
    %797 = vmatprep.subr.mxu0 0.0
    %798 = vmatpush1.msra.mxu0 %v788
    %799 = vmatprep.subr.mxu0 0.0
    %800 = vmatpush1.msra.mxu0 %v789
    %801 = vmatprep.subr.mxu0 0.0
    %802 = vmatpush1.msra.mxu0 %v790
    %803 = vmatprep.subr.mxu0 0.0
    %804 = vmatpush1.msra.mxu0 %v791
    %805 = vmatprep.subr.mxu0 0.0
    %806 = vmatpush1.msra.mxu0 0.0
    %807 = vmatprep.subr.mxu0 0.0
    %808 = vmatpush1.msra.mxu0 0.0
    %809 = vmatprep.subr.mxu0 0.0
    %810 = vmatpush1.msra.mxu0 0.0
    %811 = vmatprep.subr.mxu0 0.0
    %812 = vmatpush1.msra.mxu0 0.0
    %813 = vmatprep.subr.mxu0 0.0
    %814 = vmatpush1.msra.mxu0 0.0
    %815 = vmatprep.subr.mxu0 0.0
    %816 = vmatpush1.msra.mxu0 0.0
    %817 = vmatprep.subr.mxu0 0.0
    %818 = vmatpush1.msra.mxu0 0.0
    %819 = vmatprep.subr.mxu0 0.0
    %820 = vmatpush1.msra.mxu0 0.0
    %821 = vmatprep.subr.mxu0 0.0
    %822 = vmatpush1.msra.mxu0 0.0
    %823 = vmatprep.subr.mxu0 0.0
    %824 = vmatpush1.msra.mxu0 0.0
    %825 = vmatprep.subr.mxu0 0.0
    %826 = vmatpush1.msra.mxu0 0.0
    %827 = vmatprep.subr.mxu0 0.0
    %828 = vmatpush1.msra.mxu0 0.0
    %829 = vmatprep.subr.mxu0 0.0
    %830 = vmatpush1.msra.mxu0 0.0
    %831 = vmatprep.subr.mxu0 0.0
    %832 = vmatpush1.msra.mxu0 0.0
    %833 = vmatprep.subr.mxu0 0.0
    %834 = vmatpush1.msra.mxu0 0.0
    %835 = vmatprep.subr.mxu0 0.0
    %836 = vmatpush1.msra.mxu0 0.0
    %837 = vmatprep.subr.mxu0 0.0
    %838 = vmatpush1.msra.mxu0 0.0
    %839 = vmatprep.subr.mxu0 0.0
    %840 = vmatpush1.msra.mxu0 0.0
    %841 = vmatprep.subr.mxu0 0.0
    %842 = vmatpush1.msra.mxu0 0.0
    %843 = vmatprep.subr.mxu0 0.0
    %844 = vmatpush1.msra.mxu0 0.0
    %845 = vmatprep.subr.mxu0 0.0
    %846 = vmatpush1.msra.mxu0 0.0
    %847 = vmatprep.subr.mxu0 0.0
    %848 = vmatpush1.msra.mxu0 0.0
    %849 = vmatprep.subr.mxu0 0.0
    %850 = vmatpush1.msra.mxu0 0.0
    %851 = vmatprep.subr.mxu0 0.0
    %852 = vmatpush1.msra.mxu0 0.0
    %853 = vmatprep.subr.mxu0 0.0
    %854 = vmatpush1.msra.mxu0 0.0
    %855 = vmatprep.subr.mxu0 0.0
    %856 = vmatpush1.msra.mxu0 0.0
    %857 = vmatprep.subr.mxu0 0.0
    %858 = vmatpush1.msra.mxu0 0.0
    %859 = vmatprep.subr.mxu0 0.0
    %860 = vmatpush1.msra.mxu0 0.0
    %861 = vmatprep.mubr.f32.mxu0 0.0
    %862 = vmatmul.mubr.f32.gmra.mrb[0].mxu0 %v795
    %v863 = vpop.f32.mrb[0].mxu0
    %v864 = vadd.f32 0.0, %v863
    %v865 = vpop.f32.mrb[0].mxu0
    %866 = vdwg.mxu0
    %v868 = vrot.slane %v864, 4
    %v870 = vadd.f32 %v143, %v868
    %v871 = vxor.u32 %v870, 2147483648
    %v872 = vmul.f32 %v871, 1.442695
    %v873 = vpow.pop %v872
    %v874 = vadd.f32 %v873, 1.0
    %v875 = vrcp.pop %v874
    %v876 = vmul.f32 1.0, %v875
    %v877 = vtanh.pop %v870
    %v879 = vrot.slane %v622, 6
    %v881 = vmul.f32 %v876, %v879
    %883 = vrot.lane.b32.xlu0 %v877, 64
    %v884 = vpop.permute.xlu0 %883
    %v886 = vmul.f32 %v876, %v884
    %888 = vrot.lane.b32.xlu0 %v886, 32
    %v889 = vpop.permute.xlu0 %888
    %v891 = vadd.f32 %v881, %v889
    %v892 = vtanh.pop %v891
    %894 = vrot.lane.b32.xlu0 %v892, 64
    %v895 = vpop.permute.xlu0 %894
    %v897 = vmul.f32 %v876, %v895
    %899 = vrot.lane.b32.xlu0 %v897, 32
    %v900 = vpop.permute.xlu0 %899
    %vm902 = vcmask 259076
    %903 = vst.msk [vmem:[#allocation2 - $0x4] sm:$0x30] %vm902, %v900
    %904 = vrot.lane.b32.xlu0 %v751, 64
    %v905 = vpop.permute.xlu0 %904
    %907 = vst.msk [vmem:[#allocation2] sm:$0x3] %vm370, %v905
    %v908 = vld [vmem:[#allocation2] sm:$0x3]
    %v909 = vld [vmem:[%s5] sm:$0xff]
    %v910 = vld [vmem:[%s5 + $0x8] sm:$0xff]
    %v911 = vld [vmem:[%s5 + $0x10] sm:$0xff]
    %v912 = vld [vmem:[%s5 + $0x18] sm:$0xff]
    %v913 = vld [vmem:[%s5 + $0x20] sm:$0xff]
    %v914 = vld [vmem:[%s5 + $0x28] sm:$0xff]
    %v915 = vld [vmem:[%s5 + $0x30] sm:$0xff]
    %v916 = vld [vmem:[%s5 + $0x38] sm:$0xff]
    %v917 = vld [vmem:[%s6] sm:$0x1]
    %v919 = vlaneseq
    %v920 = vshrl.u32 %v919, 7
    %v921 = vsub.s32 0, %v920
    %v922 = vrot.slane %v917, %v921
    %v925 = vsel %vm388, %v908, 0
    %927 = vmatprep.subr.mxu0 0.0
    %928 = vmatpush1.msra.mxu0 %v909
    %929 = vmatprep.subr.mxu0 0.0
    %930 = vmatpush1.msra.mxu0 %v910
    %931 = vmatprep.subr.mxu0 0.0
    %932 = vmatpush1.msra.mxu0 %v911
    %933 = vmatprep.subr.mxu0 0.0
    %934 = vmatpush1.msra.mxu0 %v912
    %935 = vmatprep.subr.mxu0 0.0
    %936 = vmatpush1.msra.mxu0 %v913
    %937 = vmatprep.subr.mxu0 0.0
    %938 = vmatpush1.msra.mxu0 %v914
    %939 = vmatprep.subr.mxu0 0.0
    %940 = vmatpush1.msra.mxu0 %v915
    %941 = vmatprep.subr.mxu0 0.0
    %942 = vmatpush1.msra.mxu0 %v916
    %943 = vmatprep.subr.mxu0 0.0
    %944 = vmatpush1.msra.mxu0 0.0
    %945 = vmatprep.subr.mxu0 0.0
    %946 = vmatpush1.msra.mxu0 0.0
    %947 = vmatprep.subr.mxu0 0.0
    %948 = vmatpush1.msra.mxu0 0.0
    %949 = vmatprep.subr.mxu0 0.0
    %950 = vmatpush1.msra.mxu0 0.0
    %951 = vmatprep.subr.mxu0 0.0
    %952 = vmatpush1.msra.mxu0 0.0
    %953 = vmatprep.subr.mxu0 0.0
    %954 = vmatpush1.msra.mxu0 0.0
    %955 = vmatprep.subr.mxu0 0.0
    %956 = vmatpush1.msra.mxu0 0.0
    %957 = vmatprep.subr.mxu0 0.0
    %958 = vmatpush1.msra.mxu0 0.0
    %959 = vmatprep.subr.mxu0 0.0
    %960 = vmatpush1.msra.mxu0 0.0
    %961 = vmatprep.subr.mxu0 0.0
    %962 = vmatpush1.msra.mxu0 0.0
    %963 = vmatprep.subr.mxu0 0.0
    %964 = vmatpush1.msra.mxu0 0.0
    %965 = vmatprep.subr.mxu0 0.0
    %966 = vmatpush1.msra.mxu0 0.0
    %967 = vmatprep.subr.mxu0 0.0
    %968 = vmatpush1.msra.mxu0 0.0
    %969 = vmatprep.subr.mxu0 0.0
    %970 = vmatpush1.msra.mxu0 0.0
    %971 = vmatprep.subr.mxu0 0.0
    %972 = vmatpush1.msra.mxu0 0.0
    %973 = vmatprep.subr.mxu0 0.0
    %974 = vmatpush1.msra.mxu0 0.0
    %975 = vmatprep.subr.mxu0 0.0
    %976 = vmatpush1.msra.mxu0 0.0
    %977 = vmatprep.subr.mxu0 0.0
    %978 = vmatpush1.msra.mxu0 0.0
    %979 = vmatprep.subr.mxu0 0.0
    %980 = vmatpush1.msra.mxu0 0.0
    %981 = vmatprep.subr.mxu0 0.0
    %982 = vmatpush1.msra.mxu0 0.0
    %983 = vmatprep.subr.mxu0 0.0
    %984 = vmatpush1.msra.mxu0 0.0
    %985 = vmatprep.subr.mxu0 0.0
    %986 = vmatpush1.msra.mxu0 0.0
    %987 = vmatprep.subr.mxu0 0.0
    %988 = vmatpush1.msra.mxu0 0.0
    %989 = vmatprep.subr.mxu0 0.0
    %990 = vmatpush1.msra.mxu0 0.0
    %991 = vmatprep.mubr.f32.mxu0 0.0
    %992 = vmatmul.mubr.f32.gmra.mrb[0].mxu0 %v925
    %v993 = vpop.f32.mrb[0].mxu0
    %v994 = vadd.f32 %v922, %v993
    %v995 = vpop.f32.mrb[0].mxu0
    %996 = vdwg.mxu0
    %v997 = vxor.u32 %v994, 2147483648
    %v998 = vmul.f32 %v997, 1.442695
    %v999 = vpow.pop %v998
    %v1000 = vadd.f32 %v999, 1.0
    %v1001 = vrcp.pop %v1000
    %v1002 = vmul.f32 1.0, %v1001
    %v1003 = vtanh.pop %v994
    %v1004 = vmul.f32 %v1002, %v745
    %1006 = vrot.lane.b32.xlu0 %v1003, 64
    %v1007 = vpop.permute.xlu0 %1006
    %v1009 = vmul.f32 %v1002, %v1007
    %1011 = vrot.lane.b32.xlu0 %v1009, 32
    %v1012 = vpop.permute.xlu0 %1011
    %v1014 = vadd.f32 %v1004, %v1012
    %v1015 = vtanh.pop %v1014
    %1017 = vrot.lane.b32.xlu0 %v1015, 64
    %v1018 = vpop.permute.xlu0 %1017
    %v1020 = vmul.f32 %v1002, %v1018
    %vm1021 = vcmp.eq.s32.totalorder %v260, 2
    %v1024 = vunpack.c.l.s4 1966171168
    %v1025 = vunpack.c.0.s8 %v1024
    %v1026 = vlaneseq
    %v1027 = vshrl.u32 %v1026, 7
    %v1028 = vsub.s32 %v1025, %v1027
    %v1029 = vrot.slane %v1020, %v1028
    %v1030 = vcombine.high %v1029, %v1029
    %v1032 = vunpack.c.l.s4 1966171168
    %v1033 = vunpack.c.0.s8 %v1032
    %v1034 = vlaneseq
    %v1035 = vshrl.u32 %v1034, 7
    %v1036 = vsub.s32 %v1033, %v1035
    %v1037 = vrot.slane %v1029, %v1036
    %v1039 = vunpack.c.l.s4 1966171168
    %v1040 = vunpack.c.0.s8 %v1039
    %v1041 = vlaneseq
    %v1042 = vshrl.u32 %v1041, 7
    %v1043 = vsub.s32 %v1040, %v1042
    %v1044 = vrot.slane %v1030, %v1043
    %v1045 = vlaneseq
    %v1046 = vshrl.u32 %v1045, 7
    %v1047 = vsub.s32 0, %v1046
    %v1048 = vrot.slane %v1037, %v1047
    %v1049 = vlaneseq
    %v1050 = vshrl.u32 %v1049, 7
    %v1051 = vsub.s32 0, %v1050
    %v1052 = vrot.slane %v1044, %v1051
    %v1055 = vsel %vm1021, %v1048, %v786
    %v1056 = vsel %vm1021, %v1052, %v787
    %v1057 = vld [vmem:[%s4] sm:$0xff]
    %v1058 = vld [vmem:[%s4 + $0x8] sm:$0xff]
    %v1059 = vld [vmem:[%s4 + $0x10] sm:$0xff]
    %v1060 = vld [vmem:[%s4 + $0x18] sm:$0xff]
    %v1061 = vrot.slane %v897, 4
    %1062 = vrot.lane.b32.xlu0 %v1061, 32
    %v1063 = vpop.permute.xlu0 %1062
    %v1064 = vsel %vm265, %v1063, 0
    %1066 = vmatprep.subr.mxu0 0.0
    %1067 = vmatpush1.msra.mxu0 %v1057
    %1068 = vmatprep.subr.mxu0 0.0
    %1069 = vmatpush1.msra.mxu0 %v1058
    %1070 = vmatprep.subr.mxu0 0.0
    %1071 = vmatpush1.msra.mxu0 %v1059
    %1072 = vmatprep.subr.mxu0 0.0
    %1073 = vmatpush1.msra.mxu0 %v1060
    %1074 = vmatprep.subr.mxu0 0.0
    %1075 = vmatpush1.msra.mxu0 0.0
    %1076 = vmatprep.subr.mxu0 0.0
    %1077 = vmatpush1.msra.mxu0 0.0
    %1078 = vmatprep.subr.mxu0 0.0
    %1079 = vmatpush1.msra.mxu0 0.0
    %1080 = vmatprep.subr.mxu0 0.0
    %1081 = vmatpush1.msra.mxu0 0.0
    %1082 = vmatprep.subr.mxu0 0.0
    %1083 = vmatpush1.msra.mxu0 0.0
    %1084 = vmatprep.subr.mxu0 0.0
    %1085 = vmatpush1.msra.mxu0 0.0
    %1086 = vmatprep.subr.mxu0 0.0
    %1087 = vmatpush1.msra.mxu0 0.0
    %1088 = vmatprep.subr.mxu0 0.0
    %1089 = vmatpush1.msra.mxu0 0.0
    %1090 = vmatprep.subr.mxu0 0.0
    %1091 = vmatpush1.msra.mxu0 0.0
    %1092 = vmatprep.subr.mxu0 0.0
    %1093 = vmatpush1.msra.mxu0 0.0
    %1094 = vmatprep.subr.mxu0 0.0
    %1095 = vmatpush1.msra.mxu0 0.0
    %1096 = vmatprep.subr.mxu0 0.0
    %1097 = vmatpush1.msra.mxu0 0.0
    %1098 = vmatprep.subr.mxu0 0.0
    %1099 = vmatpush1.msra.mxu0 0.0
    %1100 = vmatprep.subr.mxu0 0.0
    %1101 = vmatpush1.msra.mxu0 0.0
    %1102 = vmatprep.subr.mxu0 0.0
    %1103 = vmatpush1.msra.mxu0 0.0
    %1104 = vmatprep.subr.mxu0 0.0
    %1105 = vmatpush1.msra.mxu0 0.0
    %1106 = vmatprep.subr.mxu0 0.0
    %1107 = vmatpush1.msra.mxu0 0.0
    %1108 = vmatprep.subr.mxu0 0.0
    %1109 = vmatpush1.msra.mxu0 0.0
    %1110 = vmatprep.subr.mxu0 0.0
    %1111 = vmatpush1.msra.mxu0 0.0
    %1112 = vmatprep.subr.mxu0 0.0
    %1113 = vmatpush1.msra.mxu0 0.0
    %1114 = vmatprep.subr.mxu0 0.0
    %1115 = vmatpush1.msra.mxu0 0.0
    %1116 = vmatprep.subr.mxu0 0.0
    %1117 = vmatpush1.msra.mxu0 0.0
    %1118 = vmatprep.subr.mxu0 0.0
    %1119 = vmatpush1.msra.mxu0 0.0
    %1120 = vmatprep.subr.mxu0 0.0
    %1121 = vmatpush1.msra.mxu0 0.0
    %1122 = vmatprep.subr.mxu0 0.0
    %1123 = vmatpush1.msra.mxu0 0.0
    %1124 = vmatprep.subr.mxu0 0.0
    %1125 = vmatpush1.msra.mxu0 0.0
    %1126 = vmatprep.subr.mxu0 0.0
    %1127 = vmatpush1.msra.mxu0 0.0
    %1128 = vmatprep.subr.mxu0 0.0
    %1129 = vmatpush1.msra.mxu0 0.0
    %1130 = vmatprep.mubr.f32.mxu0 0.0
    %1131 = vmatmul.mubr.f32.gmra.mrb[0].mxu0 %v1064
    %v1132 = vpop.f32.mrb[0].mxu0
    %v1133 = vadd.f32 0.0, %v1132
    %v1134 = vpop.f32.mrb[0].mxu0
    %1135 = vdwg.mxu0
    %v1137 = vrot.slane %v1133, 2
    %v1139 = vadd.f32 %v143, %v1137
    %v1140 = vxor.u32 %v1139, 2147483648
    %v1141 = vmul.f32 %v1140, 1.442695
    %v1142 = vpow.pop %v1141
    %v1143 = vadd.f32 %v1142, 1.0
    %v1144 = vrcp.pop %v1143
    %v1145 = vmul.f32 1.0, %v1144
    %v1146 = vtanh.pop %v1139
    %v1148 = vrot.slane %v891, 6
    %v1150 = vmul.f32 %v1145, %v1148
    %1152 = vrot.lane.b32.xlu0 %v1146, 64
    %v1153 = vpop.permute.xlu0 %1152
    %v1155 = vmul.f32 %v1145, %v1153
    %1157 = vrot.lane.b32.xlu0 %v1155, 32
    %v1158 = vpop.permute.xlu0 %1157
    %v1160 = vadd.f32 %v1150, %v1158
    %v1161 = vtanh.pop %v1160
    %1163 = vrot.lane.b32.xlu0 %v1161, 64
    %v1164 = vpop.permute.xlu0 %1163
    %v1166 = vmul.f32 %v1145, %v1164
    %1168 = vrot.lane.b32.xlu0 %v1166, 32
    %v1169 = vpop.permute.xlu0 %1168
    %vm1171 = vcmask 261126
    %1172 = vst.msk [vmem:[#allocation2 - $0x6] sm:$0xc0] %vm1171, %v1169
    %1173 = vrot.lane.b32.xlu0 %v1020, 64
    %v1174 = vpop.permute.xlu0 %1173
    %1176 = vst.msk [vmem:[#allocation2] sm:$0x3] %vm370, %v1174
    %v1177 = vld [vmem:[#allocation2] sm:$0x3]
    %v1178 = vld [vmem:[%s5] sm:$0xff]
    %v1179 = vld [vmem:[%s5 + $0x8] sm:$0xff]
    %v1180 = vld [vmem:[%s5 + $0x10] sm:$0xff]
    %v1181 = vld [vmem:[%s5 + $0x18] sm:$0xff]
    %v1182 = vld [vmem:[%s5 + $0x20] sm:$0xff]
    %v1183 = vld [vmem:[%s5 + $0x28] sm:$0xff]
    %v1184 = vld [vmem:[%s5 + $0x30] sm:$0xff]
    %v1185 = vld [vmem:[%s5 + $0x38] sm:$0xff]
    %v1186 = vld [vmem:[%s6] sm:$0x1]
    %v1188 = vlaneseq
    %v1189 = vshrl.u32 %v1188, 7
    %v1190 = vsub.s32 0, %v1189
    %v1191 = vrot.slane %v1186, %v1190
    %v1194 = vsel %vm388, %v1177, 0
    %1196 = vmatprep.subr.mxu0 0.0
    %1197 = vmatpush1.msra.mxu0 %v1178
    %1198 = vmatprep.subr.mxu0 0.0
    %1199 = vmatpush1.msra.mxu0 %v1179
    %1200 = vmatprep.subr.mxu0 0.0
    %1201 = vmatpush1.msra.mxu0 %v1180
    %1202 = vmatprep.subr.mxu0 0.0
    %1203 = vmatpush1.msra.mxu0 %v1181
    %1204 = vmatprep.subr.mxu0 0.0
    %1205 = vmatpush1.msra.mxu0 %v1182
    %1206 = vmatprep.subr.mxu0 0.0
    %1207 = vmatpush1.msra.mxu0 %v1183
    %1208 = vmatprep.subr.mxu0 0.0
    %1209 = vmatpush1.msra.mxu0 %v1184
    %1210 = vmatprep.subr.mxu0 0.0
    %1211 = vmatpush1.msra.mxu0 %v1185
    %1212 = vmatprep.subr.mxu0 0.0
    %1213 = vmatpush1.msra.mxu0 0.0
    %1214 = vmatprep.subr.mxu0 0.0
    %1215 = vmatpush1.msra.mxu0 0.0
    %1216 = vmatprep.subr.mxu0 0.0
    %1217 = vmatpush1.msra.mxu0 0.0
    %1218 = vmatprep.subr.mxu0 0.0
    %1219 = vmatpush1.msra.mxu0 0.0
    %1220 = vmatprep.subr.mxu0 0.0
    %1221 = vmatpush1.msra.mxu0 0.0
    %1222 = vmatprep.subr.mxu0 0.0
    %1223 = vmatpush1.msra.mxu0 0.0
    %1224 = vmatprep.subr.mxu0 0.0
    %1225 = vmatpush1.msra.mxu0 0.0
    %1226 = vmatprep.subr.mxu0 0.0
    %1227 = vmatpush1.msra.mxu0 0.0
    %1228 = vmatprep.subr.mxu0 0.0
    %1229 = vmatpush1.msra.mxu0 0.0
    %1230 = vmatprep.subr.mxu0 0.0
    %1231 = vmatpush1.msra.mxu0 0.0
    %1232 = vmatprep.subr.mxu0 0.0
    %1233 = vmatpush1.msra.mxu0 0.0
    %1234 = vmatprep.subr.mxu0 0.0
    %1235 = vmatpush1.msra.mxu0 0.0
    %1236 = vmatprep.subr.mxu0 0.0
    %1237 = vmatpush1.msra.mxu0 0.0
    %1238 = vmatprep.subr.mxu0 0.0
    %1239 = vmatpush1.msra.mxu0 0.0
    %1240 = vmatprep.subr.mxu0 0.0
    %1241 = vmatpush1.msra.mxu0 0.0
    %1242 = vmatprep.subr.mxu0 0.0
    %1243 = vmatpush1.msra.mxu0 0.0
    %1244 = vmatprep.subr.mxu0 0.0
    %1245 = vmatpush1.msra.mxu0 0.0
    %1246 = vmatprep.subr.mxu0 0.0
    %1247 = vmatpush1.msra.mxu0 0.0
    %1248 = vmatprep.subr.mxu0 0.0
    %1249 = vmatpush1.msra.mxu0 0.0
    %1250 = vmatprep.subr.mxu0 0.0
    %1251 = vmatpush1.msra.mxu0 0.0
    %1252 = vmatprep.subr.mxu0 0.0
    %1253 = vmatpush1.msra.mxu0 0.0
    %1254 = vmatprep.subr.mxu0 0.0
    %1255 = vmatpush1.msra.mxu0 0.0
    %1256 = vmatprep.subr.mxu0 0.0
    %1257 = vmatpush1.msra.mxu0 0.0
    %1258 = vmatprep.subr.mxu0 0.0
    %1259 = vmatpush1.msra.mxu0 0.0
    %1260 = vmatprep.mubr.f32.mxu0 0.0
    %1261 = vmatmul.mubr.f32.gmra.mrb[0].mxu0 %v1194
    %v1262 = vpop.f32.mrb[0].mxu0
    %v1263 = vadd.f32 %v1191, %v1262
    %v1264 = vpop.f32.mrb[0].mxu0
    %1265 = vdwg.mxu0
    %v1266 = vxor.u32 %v1263, 2147483648
    %v1267 = vmul.f32 %v1266, 1.442695
    %v1268 = vpow.pop %v1267
    %v1269 = vadd.f32 %v1268, 1.0
    %v1270 = vrcp.pop %v1269
    %v1271 = vmul.f32 1.0, %v1270
    %v1272 = vtanh.pop %v1263
    %v1273 = vmul.f32 %v1271, %v1014
    %1275 = vrot.lane.b32.xlu0 %v1272, 64
    %v1276 = vpop.permute.xlu0 %1275
    %v1278 = vmul.f32 %v1271, %v1276
    %1280 = vrot.lane.b32.xlu0 %v1278, 32
    %v1281 = vpop.permute.xlu0 %1280
    %v1283 = vadd.f32 %v1273, %v1281
    %v1284 = vtanh.pop %v1283
    %1286 = vrot.lane.b32.xlu0 %v1284, 64
    %v1287 = vpop.permute.xlu0 %1286
    %v1289 = vmul.f32 %v1271, %v1287
    %vm1290 = vcmp.eq.s32.totalorder %v260, 3
    %v1293 = vunpack.c.l.s4 1966171168
    %v1294 = vunpack.c.0.s8 %v1293
    %v1295 = vlaneseq
    %v1296 = vshrl.u32 %v1295, 7
    %v1297 = vsub.s32 %v1294, %v1296
    %v1298 = vrot.slane %v1289, %v1297
    %v1299 = vcombine.high %v1298, %v1298
    %v1301 = vunpack.c.l.s4 1966171168
    %v1302 = vunpack.c.0.s8 %v1301
    %v1303 = vlaneseq
    %v1304 = vshrl.u32 %v1303, 7
    %v1305 = vsub.s32 %v1302, %v1304
    %v1306 = vrot.slane %v1298, %v1305
    %v1308 = vunpack.c.l.s4 1966171168
    %v1309 = vunpack.c.0.s8 %v1308
    %v1310 = vlaneseq
    %v1311 = vshrl.u32 %v1310, 7
    %v1312 = vsub.s32 %v1309, %v1311
    %v1313 = vrot.slane %v1299, %v1312
    %v1314 = vlaneseq
    %v1315 = vshrl.u32 %v1314, 7
    %v1316 = vsub.s32 0, %v1315
    %v1317 = vrot.slane %v1306, %v1316
    %v1318 = vlaneseq
    %v1319 = vshrl.u32 %v1318, 7
    %v1320 = vsub.s32 0, %v1319
    %v1321 = vrot.slane %v1313, %v1320
    %v1324 = vsel %vm1290, %v1317, %v1055
    %v1325 = vsel %vm1290, %v1321, %v1056
    %v1326 = vld [vmem:[%s4] sm:$0xff]
    %v1327 = vld [vmem:[%s4 + $0x8] sm:$0xff]
    %v1328 = vld [vmem:[%s4 + $0x10] sm:$0xff]
    %v1329 = vld [vmem:[%s4 + $0x18] sm:$0xff]
    %v1330 = vrot.slane %v1166, 6
    %1331 = vrot.lane.b32.xlu0 %v1330, 32
    %v1332 = vpop.permute.xlu0 %1331
    %v1333 = vsel %vm265, %v1332, 0
    %1335 = vmatprep.subr.mxu0 0.0
    %1336 = vmatpush1.msra.mxu0 %v1326
    %1337 = vmatprep.subr.mxu0 0.0
    %1338 = vmatpush1.msra.mxu0 %v1327
    %1339 = vmatprep.subr.mxu0 0.0
    %1340 = vmatpush1.msra.mxu0 %v1328
    %1341 = vmatprep.subr.mxu0 0.0
    %1342 = vmatpush1.msra.mxu0 %v1329
    %1343 = vmatprep.subr.mxu0 0.0
    %1344 = vmatpush1.msra.mxu0 0.0
    %1345 = vmatprep.subr.mxu0 0.0
    %1346 = vmatpush1.msra.mxu0 0.0
    %1347 = vmatprep.subr.mxu0 0.0
    %1348 = vmatpush1.msra.mxu0 0.0
    %1349 = vmatprep.subr.mxu0 0.0
    %1350 = vmatpush1.msra.mxu0 0.0
    %1351 = vmatprep.subr.mxu0 0.0
    %1352 = vmatpush1.msra.mxu0 0.0
    %1353 = vmatprep.subr.mxu0 0.0
    %1354 = vmatpush1.msra.mxu0 0.0
    %1355 = vmatprep.subr.mxu0 0.0
    %1356 = vmatpush1.msra.mxu0 0.0
    %1357 = vmatprep.subr.mxu0 0.0
    %1358 = vmatpush1.msra.mxu0 0.0
    %1359 = vmatprep.subr.mxu0 0.0
    %1360 = vmatpush1.msra.mxu0 0.0
    %1361 = vmatprep.subr.mxu0 0.0
    %1362 = vmatpush1.msra.mxu0 0.0
    %1363 = vmatprep.subr.mxu0 0.0
    %1364 = vmatpush1.msra.mxu0 0.0
    %1365 = vmatprep.subr.mxu0 0.0
    %1366 = vmatpush1.msra.mxu0 0.0
    %1367 = vmatprep.subr.mxu0 0.0
    %1368 = vmatpush1.msra.mxu0 0.0
    %1369 = vmatprep.subr.mxu0 0.0
    %1370 = vmatpush1.msra.mxu0 0.0
    %1371 = vmatprep.subr.mxu0 0.0
    %1372 = vmatpush1.msra.mxu0 0.0
    %1373 = vmatprep.subr.mxu0 0.0
    %1374 = vmatpush1.msra.mxu0 0.0
    %1375 = vmatprep.subr.mxu0 0.0
    %1376 = vmatpush1.msra.mxu0 0.0
    %1377 = vmatprep.subr.mxu0 0.0
    %1378 = vmatpush1.msra.mxu0 0.0
    %1379 = vmatprep.subr.mxu0 0.0
    %1380 = vmatpush1.msra.mxu0 0.0
    %1381 = vmatprep.subr.mxu0 0.0
    %1382 = vmatpush1.msra.mxu0 0.0
    %1383 = vmatprep.subr.mxu0 0.0
    %1384 = vmatpush1.msra.mxu0 0.0
    %1385 = vmatprep.subr.mxu0 0.0
    %1386 = vmatpush1.msra.mxu0 0.0
    %1387 = vmatprep.subr.mxu0 0.0
    %1388 = vmatpush1.msra.mxu0 0.0
    %1389 = vmatprep.subr.mxu0 0.0
    %1390 = vmatpush1.msra.mxu0 0.0
    %1391 = vmatprep.subr.mxu0 0.0
    %1392 = vmatpush1.msra.mxu0 0.0
    %1393 = vmatprep.subr.mxu0 0.0
    %1394 = vmatpush1.msra.mxu0 0.0
    %1395 = vmatprep.subr.mxu0 0.0
    %1396 = vmatpush1.msra.mxu0 0.0
    %1397 = vmatprep.subr.mxu0 0.0
    %1398 = vmatpush1.msra.mxu0 0.0
    %1399 = vmatprep.mubr.f32.mxu0 0.0
    %1400 = vmatmul.mubr.f32.gmra.mrb[0].mxu0 %v1333
    %v1401 = vpop.f32.mrb[0].mxu0
    %v1402 = vadd.f32 0.0, %v1401
    %v1403 = vpop.f32.mrb[0].mxu0
    %1404 = vdwg.mxu0
    %v1405 = vadd.f32 %v148, %v1402
    %v1406 = vxor.u32 %v1405, 2147483648
    %v1407 = vmul.f32 %v1406, 1.442695
    %v1408 = vpow.pop %v1407
    %v1409 = vadd.f32 %v1408, 1.0
    %v1410 = vrcp.pop %v1409
    %v1411 = vmul.f32 1.0, %v1410
    %v1412 = vtanh.pop %v1405
    %v1414 = vrot.slane %v1160, 6
    %v1416 = vmul.f32 %v1411, %v1414
    %1418 = vrot.lane.b32.xlu0 %v1412, 64
    %v1419 = vpop.permute.xlu0 %1418
    %v1421 = vmul.f32 %v1411, %v1419
    %1423 = vrot.lane.b32.xlu0 %v1421, 32
    %v1424 = vpop.permute.xlu0 %1423
    %v1426 = vadd.f32 %v1416, %v1424
    %v1427 = vtanh.pop %v1426
    %1429 = vrot.lane.b32.xlu0 %v1427, 64
    %v1430 = vpop.permute.xlu0 %1429
    %v1432 = vmul.f32 %v1411, %v1430
    %1434 = vrot.lane.b32.xlu0 %v1432, 32
    %v1435 = vpop.permute.xlu0 %1434
    %1437 = vst.msk [vmem:[#allocation2] sm:$0x3] %vm368, %v1435
    %1438 = vrot.lane.b32.xlu0 %v1289, 64
    %v1439 = vpop.permute.xlu0 %1438
    %1441 = vst.msk [vmem:[#allocation2] sm:$0x3] %vm370, %v1439
    %v1442 = vld [vmem:[#allocation2] sm:$0x3]
    %v1443 = vld [vmem:[%s5] sm:$0xff]
    %v1444 = vld [vmem:[%s5 + $0x8] sm:$0xff]
    %v1445 = vld [vmem:[%s5 + $0x10] sm:$0xff]
    %v1446 = vld [vmem:[%s5 + $0x18] sm:$0xff]
    %v1447 = vld [vmem:[%s5 + $0x20] sm:$0xff]
    %v1448 = vld [vmem:[%s5 + $0x28] sm:$0xff]
    %v1449 = vld [vmem:[%s5 + $0x30] sm:$0xff]
    %v1450 = vld [vmem:[%s5 + $0x38] sm:$0xff]
    %v1451 = vld [vmem:[%s6] sm:$0x1]
    %v1453 = vlaneseq
    %v1454 = vshrl.u32 %v1453, 7
    %v1455 = vsub.s32 0, %v1454
    %v1456 = vrot.slane %v1451, %v1455
    %v1459 = vsel %vm388, %v1442, 0
    %1461 = vmatprep.subr.mxu0 0.0
    %1462 = vmatpush1.msra.mxu0 %v1443
    %1463 = vmatprep.subr.mxu0 0.0
    %1464 = vmatpush1.msra.mxu0 %v1444
    %1465 = vmatprep.subr.mxu0 0.0
    %1466 = vmatpush1.msra.mxu0 %v1445
    %1467 = vmatprep.subr.mxu0 0.0
    %1468 = vmatpush1.msra.mxu0 %v1446
    %1469 = vmatprep.subr.mxu0 0.0
    %1470 = vmatpush1.msra.mxu0 %v1447
    %1471 = vmatprep.subr.mxu0 0.0
    %1472 = vmatpush1.msra.mxu0 %v1448
    %1473 = vmatprep.subr.mxu0 0.0
    %1474 = vmatpush1.msra.mxu0 %v1449
    %1475 = vmatprep.subr.mxu0 0.0
    %1476 = vmatpush1.msra.mxu0 %v1450
    %1477 = vmatprep.subr.mxu0 0.0
    %1478 = vmatpush1.msra.mxu0 0.0
    %1479 = vmatprep.subr.mxu0 0.0
    %1480 = vmatpush1.msra.mxu0 0.0
    %1481 = vmatprep.subr.mxu0 0.0
    %1482 = vmatpush1.msra.mxu0 0.0
    %1483 = vmatprep.subr.mxu0 0.0
    %1484 = vmatpush1.msra.mxu0 0.0
    %1485 = vmatprep.subr.mxu0 0.0
    %1486 = vmatpush1.msra.mxu0 0.0
    %1487 = vmatprep.subr.mxu0 0.0
    %1488 = vmatpush1.msra.mxu0 0.0
    %1489 = vmatprep.subr.mxu0 0.0
    %1490 = vmatpush1.msra.mxu0 0.0
    %1491 = vmatprep.subr.mxu0 0.0
    %1492 = vmatpush1.msra.mxu0 0.0
    %1493 = vmatprep.subr.mxu0 0.0
    %1494 = vmatpush1.msra.mxu0 0.0
    %1495 = vmatprep.subr.mxu0 0.0
    %1496 = vmatpush1.msra.mxu0 0.0
    %1497 = vmatprep.subr.mxu0 0.0
    %1498 = vmatpush1.msra.mxu0 0.0
    %1499 = vmatprep.subr.mxu0 0.0
    %1500 = vmatpush1.msra.mxu0 0.0
    %1501 = vmatprep.subr.mxu0 0.0
    %1502 = vmatpush1.msra.mxu0 0.0
    %1503 = vmatprep.subr.mxu0 0.0
    %1504 = vmatpush1.msra.mxu0 0.0
    %1505 = vmatprep.subr.mxu0 0.0
    %1506 = vmatpush1.msra.mxu0 0.0
    %1507 = vmatprep.subr.mxu0 0.0
    %1508 = vmatpush1.msra.mxu0 0.0
    %1509 = vmatprep.subr.mxu0 0.0
    %1510 = vmatpush1.msra.mxu0 0.0
    %1511 = vmatprep.subr.mxu0 0.0
    %1512 = vmatpush1.msra.mxu0 0.0
    %1513 = vmatprep.subr.mxu0 0.0
    %1514 = vmatpush1.msra.mxu0 0.0
    %1515 = vmatprep.subr.mxu0 0.0
    %1516 = vmatpush1.msra.mxu0 0.0
    %1517 = vmatprep.subr.mxu0 0.0
    %1518 = vmatpush1.msra.mxu0 0.0
    %1519 = vmatprep.subr.mxu0 0.0
    %1520 = vmatpush1.msra.mxu0 0.0
    %1521 = vmatprep.subr.mxu0 0.0
    %1522 = vmatpush1.msra.mxu0 0.0
    %1523 = vmatprep.subr.mxu0 0.0
    %1524 = vmatpush1.msra.mxu0 0.0
    %1525 = vmatprep.mubr.f32.mxu0 0.0
    %1526 = vmatmul.mubr.f32.gmra.mrb[0].mxu0 %v1459
    %v1527 = vpop.f32.mrb[0].mxu0
    %v1528 = vadd.f32 %v1456, %v1527
    %v1529 = vpop.f32.mrb[0].mxu0
    %1530 = vdwg.mxu0
    %v1531 = vxor.u32 %v1528, 2147483648
    %v1532 = vmul.f32 %v1531, 1.442695
    %v1533 = vpow.pop %v1532
    %v1534 = vadd.f32 %v1533, 1.0
    %v1535 = vrcp.pop %v1534
    %v1536 = vmul.f32 1.0, %v1535
    %v1537 = vtanh.pop %v1528
    %v1538 = vmul.f32 %v1536, %v1283
    %1540 = vrot.lane.b32.xlu0 %v1537, 64
    %v1541 = vpop.permute.xlu0 %1540
    %v1543 = vmul.f32 %v1536, %v1541
    %1545 = vrot.lane.b32.xlu0 %v1543, 32
    %v1546 = vpop.permute.xlu0 %1545
    %v1548 = vadd.f32 %v1538, %v1546
    %v1549 = vtanh.pop %v1548
    %1551 = vrot.lane.b32.xlu0 %v1549, 64
    %v1552 = vpop.permute.xlu0 %1551
    %v1554 = vmul.f32 %v1536, %v1552
    %vm1555 = vcmp.eq.s32.totalorder %v260, 4
    %v1558 = vunpack.c.l.s4 1966171168
    %v1559 = vunpack.c.0.s8 %v1558
    %v1560 = vlaneseq
    %v1561 = vshrl.u32 %v1560, 7
    %v1562 = vsub.s32 %v1559, %v1561
    %v1563 = vrot.slane %v1554, %v1562
    %v1564 = vcombine.high %v1563, %v1563
    %v1566 = vunpack.c.l.s4 1966171168
    %v1567 = vunpack.c.0.s8 %v1566
    %v1568 = vlaneseq
    %v1569 = vshrl.u32 %v1568, 7
    %v1570 = vsub.s32 %v1567, %v1569
    %v1571 = vrot.slane %v1563, %v1570
    %v1573 = vunpack.c.l.s4 1966171168
    %v1574 = vunpack.c.0.s8 %v1573
    %v1575 = vlaneseq
    %v1576 = vshrl.u32 %v1575, 7
    %v1577 = vsub.s32 %v1574, %v1576
    %v1578 = vrot.slane %v1564, %v1577
    %v1579 = vlaneseq
    %v1580 = vshrl.u32 %v1579, 7
    %v1581 = vsub.s32 0, %v1580
    %v1582 = vrot.slane %v1571, %v1581
    %v1583 = vlaneseq
    %v1584 = vshrl.u32 %v1583, 7
    %v1585 = vsub.s32 0, %v1584
    %v1586 = vrot.slane %v1578, %v1585
    %v1589 = vsel %vm1555, %v1582, %v1324
    %v1590 = vsel %vm1555, %v1586, %v1325
    %v1591 = vld [vmem:[%s4] sm:$0xff]
    %v1592 = vld [vmem:[%s4 + $0x8] sm:$0xff]
    %v1593 = vld [vmem:[%s4 + $0x10] sm:$0xff]
    %v1594 = vld [vmem:[%s4 + $0x18] sm:$0xff]
    %v1595 = vsel %vm265, %v1435, 0
    %1597 = vmatprep.subr.mxu0 0.0
    %1598 = vmatpush1.msra.mxu0 %v1591
    %1599 = vmatprep.subr.mxu0 0.0
    %1600 = vmatpush1.msra.mxu0 %v1592
    %1601 = vmatprep.subr.mxu0 0.0
    %1602 = vmatpush1.msra.mxu0 %v1593
    %1603 = vmatprep.subr.mxu0 0.0
    %1604 = vmatpush1.msra.mxu0 %v1594
    %1605 = vmatprep.subr.mxu0 0.0
    %1606 = vmatpush1.msra.mxu0 0.0
    %1607 = vmatprep.subr.mxu0 0.0
    %1608 = vmatpush1.msra.mxu0 0.0
    %1609 = vmatprep.subr.mxu0 0.0
    %1610 = vmatpush1.msra.mxu0 0.0
    %1611 = vmatprep.subr.mxu0 0.0
    %1612 = vmatpush1.msra.mxu0 0.0
    %1613 = vmatprep.subr.mxu0 0.0
    %1614 = vmatpush1.msra.mxu0 0.0
    %1615 = vmatprep.subr.mxu0 0.0
    %1616 = vmatpush1.msra.mxu0 0.0
    %1617 = vmatprep.subr.mxu0 0.0
    %1618 = vmatpush1.msra.mxu0 0.0
    %1619 = vmatprep.subr.mxu0 0.0
    %1620 = vmatpush1.msra.mxu0 0.0
    %1621 = vmatprep.subr.mxu0 0.0
    %1622 = vmatpush1.msra.mxu0 0.0
    %1623 = vmatprep.subr.mxu0 0.0
    %1624 = vmatpush1.msra.mxu0 0.0
    %1625 = vmatprep.subr.mxu0 0.0
    %1626 = vmatpush1.msra.mxu0 0.0
    %1627 = vmatprep.subr.mxu0 0.0
    %1628 = vmatpush1.msra.mxu0 0.0
    %1629 = vmatprep.subr.mxu0 0.0
    %1630 = vmatpush1.msra.mxu0 0.0
    %1631 = vmatprep.subr.mxu0 0.0
    %1632 = vmatpush1.msra.mxu0 0.0
    %1633 = vmatprep.subr.mxu0 0.0
    %1634 = vmatpush1.msra.mxu0 0.0
    %1635 = vmatprep.subr.mxu0 0.0
    %1636 = vmatpush1.msra.mxu0 0.0
    %1637 = vmatprep.subr.mxu0 0.0
    %1638 = vmatpush1.msra.mxu0 0.0
    %1639 = vmatprep.subr.mxu0 0.0
    %1640 = vmatpush1.msra.mxu0 0.0
    %1641 = vmatprep.subr.mxu0 0.0
    %1642 = vmatpush1.msra.mxu0 0.0
    %1643 = vmatprep.subr.mxu0 0.0
    %1644 = vmatpush1.msra.mxu0 0.0
    %1645 = vmatprep.subr.mxu0 0.0
    %1646 = vmatpush1.msra.mxu0 0.0
    %1647 = vmatprep.subr.mxu0 0.0
    %1648 = vmatpush1.msra.mxu0 0.0
    %1649 = vmatprep.subr.mxu0 0.0
    %1650 = vmatpush1.msra.mxu0 0.0
    %1651 = vmatprep.subr.mxu0 0.0
    %1652 = vmatpush1.msra.mxu0 0.0
    %1653 = vmatprep.subr.mxu0 0.0
    %1654 = vmatpush1.msra.mxu0 0.0
    %1655 = vmatprep.subr.mxu0 0.0
    %1656 = vmatpush1.msra.mxu0 0.0
    %1657 = vmatprep.subr.mxu0 0.0
    %1658 = vmatpush1.msra.mxu0 0.0
    %1659 = vmatprep.subr.mxu0 0.0
    %1660 = vmatpush1.msra.mxu0 0.0
    %1661 = vmatprep.mubr.f32.mxu0 0.0
    %1662 = vmatmul.mubr.f32.gmra.mrb[0].mxu0 %v1595
    %v1663 = vpop.f32.mrb[0].mxu0
    %v1664 = vadd.f32 0.0, %v1663
    %v1665 = vpop.f32.mrb[0].mxu0
    %1666 = vdwg.mxu0
    %v1668 = vrot.slane %v1664, 6
    %v1670 = vadd.f32 %v148, %v1668
    %v1671 = vxor.u32 %v1670, 2147483648
    %v1672 = vmul.f32 %v1671, 1.442695
    %v1673 = vpow.pop %v1672
    %v1674 = vadd.f32 %v1673, 1.0
    %v1675 = vrcp.pop %v1674
    %v1676 = vmul.f32 1.0, %v1675
    %v1677 = vtanh.pop %v1670
    %v1679 = vrot.slane %v1426, 6
    %v1681 = vmul.f32 %v1676, %v1679
    %1683 = vrot.lane.b32.xlu0 %v1677, 64
    %v1684 = vpop.permute.xlu0 %1683
    %v1686 = vmul.f32 %v1676, %v1684
    %1688 = vrot.lane.b32.xlu0 %v1686, 32
    %v1689 = vpop.permute.xlu0 %1688
    %v1691 = vadd.f32 %v1681, %v1689
    %v1692 = vtanh.pop %v1691
    %1694 = vrot.lane.b32.xlu0 %v1692, 64
    %v1695 = vpop.permute.xlu0 %1694
    %v1697 = vmul.f32 %v1676, %v1695
    %1699 = vrot.lane.b32.xlu0 %v1697, 32
    %v1700 = vpop.permute.xlu0 %1699
    %1702 = vst.msk [vmem:[#allocation2 - $0x2] sm:$0xc] %vm633, %v1700
    %1703 = vrot.lane.b32.xlu0 %v1554, 64
    %v1704 = vpop.permute.xlu0 %1703
    %1706 = vst.msk [vmem:[#allocation2] sm:$0x3] %vm370, %v1704
    %v1707 = vld [vmem:[#allocation2] sm:$0x3]
    %v1708 = vld [vmem:[%s5] sm:$0xff]
    %v1709 = vld [vmem:[%s5 + $0x8] sm:$0xff]
    %v1710 = vld [vmem:[%s5 + $0x10] sm:$0xff]
    %v1711 = vld [vmem:[%s5 + $0x18] sm:$0xff]
    %v1712 = vld [vmem:[%s5 + $0x20] sm:$0xff]
    %v1713 = vld [vmem:[%s5 + $0x28] sm:$0xff]
    %v1714 = vld [vmem:[%s5 + $0x30] sm:$0xff]
    %v1715 = vld [vmem:[%s5 + $0x38] sm:$0xff]
    %v1716 = vld [vmem:[%s6] sm:$0x1]
    %v1718 = vlaneseq
    %v1719 = vshrl.u32 %v1718, 7
    %v1720 = vsub.s32 0, %v1719
    %v1721 = vrot.slane %v1716, %v1720
    %v1724 = vsel %vm388, %v1707, 0
    %1726 = vmatprep.subr.mxu0 0.0
    %1727 = vmatpush1.msra.mxu0 %v1708
    %1728 = vmatprep.subr.mxu0 0.0
    %1729 = vmatpush1.msra.mxu0 %v1709
    %1730 = vmatprep.subr.mxu0 0.0
    %1731 = vmatpush1.msra.mxu0 %v1710
    %1732 = vmatprep.subr.mxu0 0.0
    %1733 = vmatpush1.msra.mxu0 %v1711
    %1734 = vmatprep.subr.mxu0 0.0
    %1735 = vmatpush1.msra.mxu0 %v1712
    %1736 = vmatprep.subr.mxu0 0.0
    %1737 = vmatpush1.msra.mxu0 %v1713
    %1738 = vmatprep.subr.mxu0 0.0
    %1739 = vmatpush1.msra.mxu0 %v1714
    %1740 = vmatprep.subr.mxu0 0.0
    %1741 = vmatpush1.msra.mxu0 %v1715
    %1742 = vmatprep.subr.mxu0 0.0
    %1743 = vmatpush1.msra.mxu0 0.0
    %1744 = vmatprep.subr.mxu0 0.0
    %1745 = vmatpush1.msra.mxu0 0.0
    %1746 = vmatprep.subr.mxu0 0.0
    %1747 = vmatpush1.msra.mxu0 0.0
    %1748 = vmatprep.subr.mxu0 0.0
    %1749 = vmatpush1.msra.mxu0 0.0
    %1750 = vmatprep.subr.mxu0 0.0
    %1751 = vmatpush1.msra.mxu0 0.0
    %1752 = vmatprep.subr.mxu0 0.0
    %1753 = vmatpush1.msra.mxu0 0.0
    %1754 = vmatprep.subr.mxu0 0.0
    %1755 = vmatpush1.msra.mxu0 0.0
    %1756 = vmatprep.subr.mxu0 0.0
    %1757 = vmatpush1.msra.mxu0 0.0
    %1758 = vmatprep.subr.mxu0 0.0
    %1759 = vmatpush1.msra.mxu0 0.0
    %1760 = vmatprep.subr.mxu0 0.0
    %1761 = vmatpush1.msra.mxu0 0.0
    %1762 = vmatprep.subr.mxu0 0.0
    %1763 = vmatpush1.msra.mxu0 0.0
    %1764 = vmatprep.subr.mxu0 0.0
    %1765 = vmatpush1.msra.mxu0 0.0
    %1766 = vmatprep.subr.mxu0 0.0
    %1767 = vmatpush1.msra.mxu0 0.0
    %1768 = vmatprep.subr.mxu0 0.0
    %1769 = vmatpush1.msra.mxu0 0.0
    %1770 = vmatprep.subr.mxu0 0.0
    %1771 = vmatpush1.msra.mxu0 0.0
    %1772 = vmatprep.subr.mxu0 0.0
    %1773 = vmatpush1.msra.mxu0 0.0
    %1774 = vmatprep.subr.mxu0 0.0
    %1775 = vmatpush1.msra.mxu0 0.0
    %1776 = vmatprep.subr.mxu0 0.0
    %1777 = vmatpush1.msra.mxu0 0.0
    %1778 = vmatprep.subr.mxu0 0.0
    %1779 = vmatpush1.msra.mxu0 0.0
    %1780 = vmatprep.subr.mxu0 0.0
    %1781 = vmatpush1.msra.mxu0 0.0
    %1782 = vmatprep.subr.mxu0 0.0
    %1783 = vmatpush1.msra.mxu0 0.0
    %1784 = vmatprep.subr.mxu0 0.0
    %1785 = vmatpush1.msra.mxu0 0.0
    %1786 = vmatprep.subr.mxu0 0.0
    %1787 = vmatpush1.msra.mxu0 0.0
    %1788 = vmatprep.subr.mxu0 0.0
    %1789 = vmatpush1.msra.mxu0 0.0
    %1790 = vmatprep.mubr.f32.mxu0 0.0
    %1791 = vmatmul.mubr.f32.gmra.mrb[0].mxu0 %v1724
    %v1792 = vpop.f32.mrb[0].mxu0
    %v1793 = vadd.f32 %v1721, %v1792
    %v1794 = vpop.f32.mrb[0].mxu0
    %1795 = vdwg.mxu0
    %v1796 = vxor.u32 %v1793, 2147483648
    %v1797 = vmul.f32 %v1796, 1.442695
    %v1798 = vpow.pop %v1797
    %v1799 = vadd.f32 %v1798, 1.0
    %v1800 = vrcp.pop %v1799
    %v1801 = vmul.f32 1.0, %v1800
    %v1802 = vtanh.pop %v1793
    %v1803 = vmul.f32 %v1801, %v1548
    %1805 = vrot.lane.b32.xlu0 %v1802, 64
    %v1806 = vpop.permute.xlu0 %1805
    %v1808 = vmul.f32 %v1801, %v1806
    %1810 = vrot.lane.b32.xlu0 %v1808, 32
    %v1811 = vpop.permute.xlu0 %1810
    %v1813 = vadd.f32 %v1803, %v1811
    %v1814 = vtanh.pop %v1813
    %1816 = vrot.lane.b32.xlu0 %v1814, 64
    %v1817 = vpop.permute.xlu0 %1816
    %v1819 = vmul.f32 %v1801, %v1817
    %vm1820 = vcmp.eq.s32.totalorder %v260, 5
    %v1823 = vunpack.c.l.s4 1966171168
    %v1824 = vunpack.c.0.s8 %v1823
    %v1825 = vlaneseq
    %v1826 = vshrl.u32 %v1825, 7
    %v1827 = vsub.s32 %v1824, %v1826
    %v1828 = vrot.slane %v1819, %v1827
    %v1829 = vcombine.high %v1828, %v1828
    %v1831 = vunpack.c.l.s4 1966171168
    %v1832 = vunpack.c.0.s8 %v1831
    %v1833 = vlaneseq
    %v1834 = vshrl.u32 %v1833, 7
    %v1835 = vsub.s32 %v1832, %v1834
    %v1836 = vrot.slane %v1828, %v1835
    %v1838 = vunpack.c.l.s4 1966171168
    %v1839 = vunpack.c.0.s8 %v1838
    %v1840 = vlaneseq
    %v1841 = vshrl.u32 %v1840, 7
    %v1842 = vsub.s32 %v1839, %v1841
    %v1843 = vrot.slane %v1829, %v1842
    %v1844 = vlaneseq
    %v1845 = vshrl.u32 %v1844, 7
    %v1846 = vsub.s32 0, %v1845
    %v1847 = vrot.slane %v1836, %v1846
    %v1848 = vlaneseq
    %v1849 = vshrl.u32 %v1848, 7
    %v1850 = vsub.s32 0, %v1849
    %v1851 = vrot.slane %v1843, %v1850
    %v1854 = vsel %vm1820, %v1847, %v1589
    %v1855 = vsel %vm1820, %v1851, %v1590
    %v1856 = vld [vmem:[%s4] sm:$0xff]
    %v1857 = vld [vmem:[%s4 + $0x8] sm:$0xff]
    %v1858 = vld [vmem:[%s4 + $0x10] sm:$0xff]
    %v1859 = vld [vmem:[%s4 + $0x18] sm:$0xff]
    %v1860 = vrot.slane %v1697, 2
    %1861 = vrot.lane.b32.xlu0 %v1860, 32
    %v1862 = vpop.permute.xlu0 %1861
    %v1863 = vsel %vm265, %v1862, 0
    %1865 = vmatprep.subr.mxu0 0.0
    %1866 = vmatpush1.msra.mxu0 %v1856
    %1867 = vmatprep.subr.mxu0 0.0
    %1868 = vmatpush1.msra.mxu0 %v1857
    %1869 = vmatprep.subr.mxu0 0.0
    %1870 = vmatpush1.msra.mxu0 %v1858
    %1871 = vmatprep.subr.mxu0 0.0
    %1872 = vmatpush1.msra.mxu0 %v1859
    %1873 = vmatprep.subr.mxu0 0.0
    %1874 = vmatpush1.msra.mxu0 0.0
    %1875 = vmatprep.subr.mxu0 0.0
    %1876 = vmatpush1.msra.mxu0 0.0
    %1877 = vmatprep.subr.mxu0 0.0
    %1878 = vmatpush1.msra.mxu0 0.0
    %1879 = vmatprep.subr.mxu0 0.0
    %1880 = vmatpush1.msra.mxu0 0.0
    %1881 = vmatprep.subr.mxu0 0.0
    %1882 = vmatpush1.msra.mxu0 0.0
    %1883 = vmatprep.subr.mxu0 0.0
    %1884 = vmatpush1.msra.mxu0 0.0
    %1885 = vmatprep.subr.mxu0 0.0
    %1886 = vmatpush1.msra.mxu0 0.0
    %1887 = vmatprep.subr.mxu0 0.0
    %1888 = vmatpush1.msra.mxu0 0.0
    %1889 = vmatprep.subr.mxu0 0.0
    %1890 = vmatpush1.msra.mxu0 0.0
    %1891 = vmatprep.subr.mxu0 0.0
    %1892 = vmatpush1.msra.mxu0 0.0
    %1893 = vmatprep.subr.mxu0 0.0
    %1894 = vmatpush1.msra.mxu0 0.0
    %1895 = vmatprep.subr.mxu0 0.0
    %1896 = vmatpush1.msra.mxu0 0.0
    %1897 = vmatprep.subr.mxu0 0.0
    %1898 = vmatpush1.msra.mxu0 0.0
    %1899 = vmatprep.subr.mxu0 0.0
    %1900 = vmatpush1.msra.mxu0 0.0
    %1901 = vmatprep.subr.mxu0 0.0
    %1902 = vmatpush1.msra.mxu0 0.0
    %1903 = vmatprep.subr.mxu0 0.0
    %1904 = vmatpush1.msra.mxu0 0.0
    %1905 = vmatprep.subr.mxu0 0.0
    %1906 = vmatpush1.msra.mxu0 0.0
    %1907 = vmatprep.subr.mxu0 0.0
    %1908 = vmatpush1.msra.mxu0 0.0
    %1909 = vmatprep.subr.mxu0 0.0
    %1910 = vmatpush1.msra.mxu0 0.0
    %1911 = vmatprep.subr.mxu0 0.0
    %1912 = vmatpush1.msra.mxu0 0.0
    %1913 = vmatprep.subr.mxu0 0.0
    %1914 = vmatpush1.msra.mxu0 0.0
    %1915 = vmatprep.subr.mxu0 0.0
    %1916 = vmatpush1.msra.mxu0 0.0
    %1917 = vmatprep.subr.mxu0 0.0
    %1918 = vmatpush1.msra.mxu0 0.0
    %1919 = vmatprep.subr.mxu0 0.0
    %1920 = vmatpush1.msra.mxu0 0.0
    %1921 = vmatprep.subr.mxu0 0.0
    %1922 = vmatpush1.msra.mxu0 0.0
    %1923 = vmatprep.subr.mxu0 0.0
    %1924 = vmatpush1.msra.mxu0 0.0
    %1925 = vmatprep.subr.mxu0 0.0
    %1926 = vmatpush1.msra.mxu0 0.0
    %1927 = vmatprep.subr.mxu0 0.0
    %1928 = vmatpush1.msra.mxu0 0.0
    %1929 = vmatprep.mubr.f32.mxu0 0.0
    %1930 = vmatmul.mubr.f32.gmra.mrb[0].mxu0 %v1863
    %v1931 = vpop.f32.mrb[0].mxu0
    %v1932 = vadd.f32 0.0, %v1931
    %v1933 = vpop.f32.mrb[0].mxu0
    %1934 = vdwg.mxu0
    %v1936 = vrot.slane %v1932, 4
    %v1938 = vadd.f32 %v148, %v1936
    %v1939 = vxor.u32 %v1938, 2147483648
    %v1940 = vmul.f32 %v1939, 1.442695
    %v1941 = vpow.pop %v1940
    %v1942 = vadd.f32 %v1941, 1.0
    %v1943 = vrcp.pop %v1942
    %v1944 = vmul.f32 1.0, %v1943
    %v1945 = vtanh.pop %v1938
    %v1947 = vrot.slane %v1691, 6
    %v1949 = vmul.f32 %v1944, %v1947
    %1951 = vrot.lane.b32.xlu0 %v1945, 64
    %v1952 = vpop.permute.xlu0 %1951
    %v1954 = vmul.f32 %v1944, %v1952
    %1956 = vrot.lane.b32.xlu0 %v1954, 32
    %v1957 = vpop.permute.xlu0 %1956
    %v1959 = vadd.f32 %v1949, %v1957
    %v1960 = vtanh.pop %v1959
    %1962 = vrot.lane.b32.xlu0 %v1960, 64
    %v1963 = vpop.permute.xlu0 %1962
    %v1965 = vmul.f32 %v1944, %v1963
    %1967 = vrot.lane.b32.xlu0 %v1965, 32
    %v1968 = vpop.permute.xlu0 %1967
    %1970 = vst.msk [vmem:[#allocation2 - $0x4] sm:$0x30] %vm902, %v1968
    %1971 = vrot.lane.b32.xlu0 %v1819, 64
    %v1972 = vpop.permute.xlu0 %1971
    %1974 = vst.msk [vmem:[#allocation2] sm:$0x3] %vm370, %v1972
    %v1975 = vld [vmem:[#allocation2] sm:$0x3]
    %v1976 = vld [vmem:[%s5] sm:$0xff]
    %v1977 = vld [vmem:[%s5 + $0x8] sm:$0xff]
    %v1978 = vld [vmem:[%s5 + $0x10] sm:$0xff]
    %v1979 = vld [vmem:[%s5 + $0x18] sm:$0xff]
    %v1980 = vld [vmem:[%s5 + $0x20] sm:$0xff]
    %v1981 = vld [vmem:[%s5 + $0x28] sm:$0xff]
    %v1982 = vld [vmem:[%s5 + $0x30] sm:$0xff]
    %v1983 = vld [vmem:[%s5 + $0x38] sm:$0xff]
    %v1984 = vld [vmem:[%s6] sm:$0x1]
    %v1986 = vlaneseq
    %v1987 = vshrl.u32 %v1986, 7
    %v1988 = vsub.s32 0, %v1987
    %v1989 = vrot.slane %v1984, %v1988
    %v1992 = vsel %vm388, %v1975, 0
    %1994 = vmatprep.subr.mxu0 0.0
    %1995 = vmatpush1.msra.mxu0 %v1976
    %1996 = vmatprep.subr.mxu0 0.0
    %1997 = vmatpush1.msra.mxu0 %v1977
    %1998 = vmatprep.subr.mxu0 0.0
    %1999 = vmatpush1.msra.mxu0 %v1978
    %2000 = vmatprep.subr.mxu0 0.0
    %2001 = vmatpush1.msra.mxu0 %v1979
    %2002 = vmatprep.subr.mxu0 0.0
    %2003 = vmatpush1.msra.mxu0 %v1980
    %2004 = vmatprep.subr.mxu0 0.0
    %2005 = vmatpush1.msra.mxu0 %v1981
    %2006 = vmatprep.subr.mxu0 0.0
    %2007 = vmatpush1.msra.mxu0 %v1982
    %2008 = vmatprep.subr.mxu0 0.0
    %2009 = vmatpush1.msra.mxu0 %v1983
    %2010 = vmatprep.subr.mxu0 0.0
    %2011 = vmatpush1.msra.mxu0 0.0
    %2012 = vmatprep.subr.mxu0 0.0
    %2013 = vmatpush1.msra.mxu0 0.0
    %2014 = vmatprep.subr.mxu0 0.0
    %2015 = vmatpush1.msra.mxu0 0.0
    %2016 = vmatprep.subr.mxu0 0.0
    %2017 = vmatpush1.msra.mxu0 0.0
    %2018 = vmatprep.subr.mxu0 0.0
    %2019 = vmatpush1.msra.mxu0 0.0
    %2020 = vmatprep.subr.mxu0 0.0
    %2021 = vmatpush1.msra.mxu0 0.0
    %2022 = vmatprep.subr.mxu0 0.0
    %2023 = vmatpush1.msra.mxu0 0.0
    %2024 = vmatprep.subr.mxu0 0.0
    %2025 = vmatpush1.msra.mxu0 0.0
    %2026 = vmatprep.subr.mxu0 0.0
    %2027 = vmatpush1.msra.mxu0 0.0
    %2028 = vmatprep.subr.mxu0 0.0
    %2029 = vmatpush1.msra.mxu0 0.0
    %2030 = vmatprep.subr.mxu0 0.0
    %2031 = vmatpush1.msra.mxu0 0.0
    %2032 = vmatprep.subr.mxu0 0.0
    %2033 = vmatpush1.msra.mxu0 0.0
    %2034 = vmatprep.subr.mxu0 0.0
    %2035 = vmatpush1.msra.mxu0 0.0
    %2036 = vmatprep.subr.mxu0 0.0
    %2037 = vmatpush1.msra.mxu0 0.0
    %2038 = vmatprep.subr.mxu0 0.0
    %2039 = vmatpush1.msra.mxu0 0.0
    %2040 = vmatprep.subr.mxu0 0.0
    %2041 = vmatpush1.msra.mxu0 0.0
    %2042 = vmatprep.subr.mxu0 0.0
    %2043 = vmatpush1.msra.mxu0 0.0
    %2044 = vmatprep.subr.mxu0 0.0
    %2045 = vmatpush1.msra.mxu0 0.0
    %2046 = vmatprep.subr.mxu0 0.0
    %2047 = vmatpush1.msra.mxu0 0.0
    %2048 = vmatprep.subr.mxu0 0.0
    %2049 = vmatpush1.msra.mxu0 0.0
    %2050 = vmatprep.subr.mxu0 0.0
    %2051 = vmatpush1.msra.mxu0 0.0
    %2052 = vmatprep.subr.mxu0 0.0
    %2053 = vmatpush1.msra.mxu0 0.0
    %2054 = vmatprep.subr.mxu0 0.0
    %2055 = vmatpush1.msra.mxu0 0.0
    %2056 = vmatprep.subr.mxu0 0.0
    %2057 = vmatpush1.msra.mxu0 0.0
    %2058 = vmatprep.mubr.f32.mxu0 0.0
    %2059 = vmatmul.mubr.f32.gmra.mrb[0].mxu0 %v1992
    %v2060 = vpop.f32.mrb[0].mxu0
    %v2061 = vadd.f32 %v1989, %v2060
    %v2062 = vpop.f32.mrb[0].mxu0
    %2063 = vdwg.mxu0
    %v2064 = vxor.u32 %v2061, 2147483648
    %v2065 = vmul.f32 %v2064, 1.442695
    %v2066 = vpow.pop %v2065
    %v2067 = vadd.f32 %v2066, 1.0
    %v2068 = vrcp.pop %v2067
    %v2069 = vmul.f32 1.0, %v2068
    %v2070 = vtanh.pop %v2061
    %v2071 = vmul.f32 %v2069, %v1813
    %2073 = vrot.lane.b32.xlu0 %v2070, 64
    %v2074 = vpop.permute.xlu0 %2073
    %v2076 = vmul.f32 %v2069, %v2074
    %2078 = vrot.lane.b32.xlu0 %v2076, 32
    %v2079 = vpop.permute.xlu0 %2078
    %v2081 = vadd.f32 %v2071, %v2079
    %v2082 = vtanh.pop %v2081
    %2084 = vrot.lane.b32.xlu0 %v2082, 64
    %v2085 = vpop.permute.xlu0 %2084
    %v2087 = vmul.f32 %v2069, %v2085
    %vm2088 = vcmp.eq.s32.totalorder %v260, 6
    %v2091 = vunpack.c.l.s4 1966171168
    %v2092 = vunpack.c.0.s8 %v2091
    %v2093 = vlaneseq
    %v2094 = vshrl.u32 %v2093, 7
    %v2095 = vsub.s32 %v2092, %v2094
    %v2096 = vrot.slane %v2087, %v2095
    %v2097 = vcombine.high %v2096, %v2096
    %v2099 = vunpack.c.l.s4 1966171168
    %v2100 = vunpack.c.0.s8 %v2099
    %v2101 = vlaneseq
    %v2102 = vshrl.u32 %v2101, 7
    %v2103 = vsub.s32 %v2100, %v2102
    %v2104 = vrot.slane %v2096, %v2103
    %v2106 = vunpack.c.l.s4 1966171168
    %v2107 = vunpack.c.0.s8 %v2106
    %v2108 = vlaneseq
    %v2109 = vshrl.u32 %v2108, 7
    %v2110 = vsub.s32 %v2107, %v2109
    %v2111 = vrot.slane %v2097, %v2110
    %v2112 = vlaneseq
    %v2113 = vshrl.u32 %v2112, 7
    %v2114 = vsub.s32 0, %v2113
    %v2115 = vrot.slane %v2104, %v2114
    %v2116 = vlaneseq
    %v2117 = vshrl.u32 %v2116, 7
    %v2118 = vsub.s32 0, %v2117
    %v2119 = vrot.slane %v2111, %v2118
    %v2122 = vsel %vm2088, %v2115, %v1854
    %v2123 = vsel %vm2088, %v2119, %v1855
    %v2124 = vld [vmem:[%s4] sm:$0xff]
    %v2125 = vld [vmem:[%s4 + $0x8] sm:$0xff]
    %v2126 = vld [vmem:[%s4 + $0x10] sm:$0xff]
    %v2127 = vld [vmem:[%s4 + $0x18] sm:$0xff]
    %v2128 = vrot.slane %v1965, 4
    %2129 = vrot.lane.b32.xlu0 %v2128, 32
    %v2130 = vpop.permute.xlu0 %2129
    %v2131 = vsel %vm265, %v2130, 0
    %2133 = vmatprep.subr.mxu0 0.0
    %2134 = vmatpush1.msra.mxu0 %v2124
    %2135 = vmatprep.subr.mxu0 0.0
    %2136 = vmatpush1.msra.mxu0 %v2125
    %2137 = vmatprep.subr.mxu0 0.0
    %2138 = vmatpush1.msra.mxu0 %v2126
    %2139 = vmatprep.subr.mxu0 0.0
    %2140 = vmatpush1.msra.mxu0 %v2127
    %2141 = vmatprep.subr.mxu0 0.0
    %2142 = vmatpush1.msra.mxu0 0.0
    %2143 = vmatprep.subr.mxu0 0.0
    %2144 = vmatpush1.msra.mxu0 0.0
    %2145 = vmatprep.subr.mxu0 0.0
    %2146 = vmatpush1.msra.mxu0 0.0
    %2147 = vmatprep.subr.mxu0 0.0
    %2148 = vmatpush1.msra.mxu0 0.0
    %2149 = vmatprep.subr.mxu0 0.0
    %2150 = vmatpush1.msra.mxu0 0.0
    %2151 = vmatprep.subr.mxu0 0.0
    %2152 = vmatpush1.msra.mxu0 0.0
    %2153 = vmatprep.subr.mxu0 0.0
    %2154 = vmatpush1.msra.mxu0 0.0
    %2155 = vmatprep.subr.mxu0 0.0
    %2156 = vmatpush1.msra.mxu0 0.0
    %2157 = vmatprep.subr.mxu0 0.0
    %2158 = vmatpush1.msra.mxu0 0.0
    %2159 = vmatprep.subr.mxu0 0.0
    %2160 = vmatpush1.msra.mxu0 0.0
    %2161 = vmatprep.subr.mxu0 0.0
    %2162 = vmatpush1.msra.mxu0 0.0
    %2163 = vmatprep.subr.mxu0 0.0
    %2164 = vmatpush1.msra.mxu0 0.0
    %2165 = vmatprep.subr.mxu0 0.0
    %2166 = vmatpush1.msra.mxu0 0.0
    %2167 = vmatprep.subr.mxu0 0.0
    %2168 = vmatpush1.msra.mxu0 0.0
    %2169 = vmatprep.subr.mxu0 0.0
    %2170 = vmatpush1.msra.mxu0 0.0
    %2171 = vmatprep.subr.mxu0 0.0
    %2172 = vmatpush1.msra.mxu0 0.0
    %2173 = vmatprep.subr.mxu0 0.0
    %2174 = vmatpush1.msra.mxu0 0.0
    %2175 = vmatprep.subr.mxu0 0.0
    %2176 = vmatpush1.msra.mxu0 0.0
    %2177 = vmatprep.subr.mxu0 0.0
    %2178 = vmatpush1.msra.mxu0 0.0
    %2179 = vmatprep.subr.mxu0 0.0
    %2180 = vmatpush1.msra.mxu0 0.0
    %2181 = vmatprep.subr.mxu0 0.0
    %2182 = vmatpush1.msra.mxu0 0.0
    %2183 = vmatprep.subr.mxu0 0.0
    %2184 = vmatpush1.msra.mxu0 0.0
    %2185 = vmatprep.subr.mxu0 0.0
    %2186 = vmatpush1.msra.mxu0 0.0
    %2187 = vmatprep.subr.mxu0 0.0
    %2188 = vmatpush1.msra.mxu0 0.0
    %2189 = vmatprep.subr.mxu0 0.0
    %2190 = vmatpush1.msra.mxu0 0.0
    %2191 = vmatprep.subr.mxu0 0.0
    %2192 = vmatpush1.msra.mxu0 0.0
    %2193 = vmatprep.subr.mxu0 0.0
    %2194 = vmatpush1.msra.mxu0 0.0
    %2195 = vmatprep.subr.mxu0 0.0
    %2196 = vmatpush1.msra.mxu0 0.0
    %2197 = vmatprep.mubr.f32.mxu0 0.0
    %2198 = vmatmul.mubr.f32.gmra.mrb[0].mxu0 %v2131
    %v2199 = vpop.f32.mrb[0].mxu0
    %v2200 = vadd.f32 0.0, %v2199
    %v2201 = vpop.f32.mrb[0].mxu0
    %2202 = vdwg.mxu0
    %v2204 = vrot.slane %v2200, 2
    %v2206 = vadd.f32 %v148, %v2204
    %v2207 = vxor.u32 %v2206, 2147483648
    %v2208 = vmul.f32 %v2207, 1.442695
    %v2209 = vpow.pop %v2208
    %v2210 = vadd.f32 %v2209, 1.0
    %v2211 = vrcp.pop %v2210
    %v2212 = vmul.f32 1.0, %v2211
    %v2213 = vtanh.pop %v2206
    %v2215 = vrot.slane %v1959, 6
    %v2217 = vmul.f32 %v2212, %v2215
    %2219 = vrot.lane.b32.xlu0 %v2213, 64
    %v2220 = vpop.permute.xlu0 %2219
    %v2222 = vmul.f32 %v2212, %v2220
    %2224 = vrot.lane.b32.xlu0 %v2222, 32
    %v2225 = vpop.permute.xlu0 %2224
    %v2227 = vadd.f32 %v2217, %v2225
    %v2228 = vtanh.pop %v2227
    %2230 = vrot.lane.b32.xlu0 %v2228, 64
    %v2231 = vpop.permute.xlu0 %2230
    %v2233 = vmul.f32 %v2212, %v2231
    %2235 = vrot.lane.b32.xlu0 %v2233, 32
    %v2236 = vpop.permute.xlu0 %2235
    %2238 = vst.msk [vmem:[#allocation2 - $0x6] sm:$0xc0] %vm1171, %v2236
    %2239 = vrot.lane.b32.xlu0 %v2087, 64
    %v2240 = vpop.permute.xlu0 %2239
    %2242 = vst.msk [vmem:[#allocation2] sm:$0x3] %vm370, %v2240
    %v2243 = vld [vmem:[#allocation2] sm:$0x3]
    %v2244 = vld [vmem:[%s5] sm:$0xff]
    %v2245 = vld [vmem:[%s5 + $0x8] sm:$0xff]
    %v2246 = vld [vmem:[%s5 + $0x10] sm:$0xff]
    %v2247 = vld [vmem:[%s5 + $0x18] sm:$0xff]
    %v2248 = vld [vmem:[%s5 + $0x20] sm:$0xff]
    %v2249 = vld [vmem:[%s5 + $0x28] sm:$0xff]
    %v2250 = vld [vmem:[%s5 + $0x30] sm:$0xff]
    %v2251 = vld [vmem:[%s5 + $0x38] sm:$0xff]
    %v2252 = vld [vmem:[%s6] sm:$0x1]
    %v2254 = vlaneseq
    %v2255 = vshrl.u32 %v2254, 7
    %v2256 = vsub.s32 0, %v2255
    %v2257 = vrot.slane %v2252, %v2256
    %v2260 = vsel %vm388, %v2243, 0
    %2262 = vmatprep.subr.mxu0 0.0
    %2263 = vmatpush1.msra.mxu0 %v2244
    %2264 = vmatprep.subr.mxu0 0.0
    %2265 = vmatpush1.msra.mxu0 %v2245
    %2266 = vmatprep.subr.mxu0 0.0
    %2267 = vmatpush1.msra.mxu0 %v2246
    %2268 = vmatprep.subr.mxu0 0.0
    %2269 = vmatpush1.msra.mxu0 %v2247
    %2270 = vmatprep.subr.mxu0 0.0
    %2271 = vmatpush1.msra.mxu0 %v2248
    %2272 = vmatprep.subr.mxu0 0.0
    %2273 = vmatpush1.msra.mxu0 %v2249
    %2274 = vmatprep.subr.mxu0 0.0
    %2275 = vmatpush1.msra.mxu0 %v2250
    %2276 = vmatprep.subr.mxu0 0.0
    %2277 = vmatpush1.msra.mxu0 %v2251
    %2278 = vmatprep.subr.mxu0 0.0
    %2279 = vmatpush1.msra.mxu0 0.0
    %2280 = vmatprep.subr.mxu0 0.0
    %2281 = vmatpush1.msra.mxu0 0.0
    %2282 = vmatprep.subr.mxu0 0.0
    %2283 = vmatpush1.msra.mxu0 0.0
    %2284 = vmatprep.subr.mxu0 0.0
    %2285 = vmatpush1.msra.mxu0 0.0
    %2286 = vmatprep.subr.mxu0 0.0
    %2287 = vmatpush1.msra.mxu0 0.0
    %2288 = vmatprep.subr.mxu0 0.0
    %2289 = vmatpush1.msra.mxu0 0.0
    %2290 = vmatprep.subr.mxu0 0.0
    %2291 = vmatpush1.msra.mxu0 0.0
    %2292 = vmatprep.subr.mxu0 0.0
    %2293 = vmatpush1.msra.mxu0 0.0
    %2294 = vmatprep.subr.mxu0 0.0
    %2295 = vmatpush1.msra.mxu0 0.0
    %2296 = vmatprep.subr.mxu0 0.0
    %2297 = vmatpush1.msra.mxu0 0.0
    %2298 = vmatprep.subr.mxu0 0.0
    %2299 = vmatpush1.msra.mxu0 0.0
    %2300 = vmatprep.subr.mxu0 0.0
    %2301 = vmatpush1.msra.mxu0 0.0
    %2302 = vmatprep.subr.mxu0 0.0
    %2303 = vmatpush1.msra.mxu0 0.0
    %2304 = vmatprep.subr.mxu0 0.0
    %2305 = vmatpush1.msra.mxu0 0.0
    %2306 = vmatprep.subr.mxu0 0.0
    %2307 = vmatpush1.msra.mxu0 0.0
    %2308 = vmatprep.subr.mxu0 0.0
    %2309 = vmatpush1.msra.mxu0 0.0
    %2310 = vmatprep.subr.mxu0 0.0
    %2311 = vmatpush1.msra.mxu0 0.0
    %2312 = vmatprep.subr.mxu0 0.0
    %2313 = vmatpush1.msra.mxu0 0.0
    %2314 = vmatprep.subr.mxu0 0.0
    %2315 = vmatpush1.msra.mxu0 0.0
    %2316 = vmatprep.subr.mxu0 0.0
    %2317 = vmatpush1.msra.mxu0 0.0
    %2318 = vmatprep.subr.mxu0 0.0
    %2319 = vmatpush1.msra.mxu0 0.0
    %2320 = vmatprep.subr.mxu0 0.0
    %2321 = vmatpush1.msra.mxu0 0.0
    %2322 = vmatprep.subr.mxu0 0.0
    %2323 = vmatpush1.msra.mxu0 0.0
    %2324 = vmatprep.subr.mxu0 0.0
    %2325 = vmatpush1.msra.mxu0 0.0
    %2326 = vmatprep.mubr.f32.mxu0 0.0
    %2327 = vmatmul.mubr.f32.gmra.mrb[0].mxu0 %v2260
    %v2328 = vpop.f32.mrb[0].mxu0
    %v2329 = vadd.f32 %v2257, %v2328
    %v2330 = vpop.f32.mrb[0].mxu0
    %2331 = vdwg.mxu0
    %v2332 = vxor.u32 %v2329, 2147483648
    %v2333 = vmul.f32 %v2332, 1.442695
    %v2334 = vpow.pop %v2333
    %v2335 = vadd.f32 %v2334, 1.0
    %v2336 = vrcp.pop %v2335
    %v2337 = vmul.f32 1.0, %v2336
    %v2338 = vtanh.pop %v2329
    %v2339 = vmul.f32 %v2337, %v2081
    %2341 = vrot.lane.b32.xlu0 %v2338, 64
    %v2342 = vpop.permute.xlu0 %2341
    %v2344 = vmul.f32 %v2337, %v2342
    %2346 = vrot.lane.b32.xlu0 %v2344, 32
    %v2347 = vpop.permute.xlu0 %2346
    %v2349 = vadd.f32 %v2339, %v2347
    %v2350 = vtanh.pop %v2349
    %2352 = vrot.lane.b32.xlu0 %v2350, 64
    %v2353 = vpop.permute.xlu0 %2352
    %v2355 = vmul.f32 %v2337, %v2353
    %vm2356 = vcmp.eq.s32.totalorder %v260, 7
    %v2359 = vunpack.c.l.s4 1966171168
    %v2360 = vunpack.c.0.s8 %v2359
    %v2361 = vlaneseq
    %v2362 = vshrl.u32 %v2361, 7
    %v2363 = vsub.s32 %v2360, %v2362
    %v2364 = vrot.slane %v2355, %v2363
    %v2365 = vcombine.high %v2364, %v2364
    %v2367 = vunpack.c.l.s4 1966171168
    %v2368 = vunpack.c.0.s8 %v2367
    %v2369 = vlaneseq
    %v2370 = vshrl.u32 %v2369, 7
    %v2371 = vsub.s32 %v2368, %v2370
    %v2372 = vrot.slane %v2364, %v2371
    %v2374 = vunpack.c.l.s4 1966171168
    %v2375 = vunpack.c.0.s8 %v2374
    %v2376 = vlaneseq
    %v2377 = vshrl.u32 %v2376, 7
    %v2378 = vsub.s32 %v2375, %v2377
    %v2379 = vrot.slane %v2365, %v2378
    %v2380 = vlaneseq
    %v2381 = vshrl.u32 %v2380, 7
    %v2382 = vsub.s32 0, %v2381
    %v2383 = vrot.slane %v2372, %v2382
    %v2384 = vlaneseq
    %v2385 = vshrl.u32 %v2384, 7
    %v2386 = vsub.s32 0, %v2385
    %v2387 = vrot.slane %v2379, %v2386
    %v2390 = vsel %vm2356, %v2383, %v2122
    %v2391 = vsel %vm2356, %v2387, %v2123
    %v2392 = vmul.f32 %v2390, %v2390
    %v2393 = vmul.f32 %v2391, %v2391
    %2396 = vrot.lane.b32.xlu0 %v2392, 32
    %v2397 = vpop.permute.xlu0 %2396
    %2398 = vrot.lane.b32.xlu0 %v2393, 32
    %v2399 = vpop.permute.xlu0 %2398
    %v2402 = vsel %vm265, %v2397, 0.0
    %2403 = vadd.xlane.f32.xlu0 %v2402
    %v2404 = vpop.xlane.xlu0 %2403
    %v2405 = vsel %vm265, %v2399, 0.0
    %2406 = vadd.xlane.f32.xlu0 %v2405
    %v2407 = vpop.xlane.xlu0 %2406
    %v2408 = vrsqrt.pop %v2404
    %v2409 = vmul.f32 %v2404, %v2408
    %vm2410 = vcmp.eq.f32.partialorder %v2404, inf
    %v2411 = vsel %vm2410, %v2404, %v2409
    %vm2412 = vcmp.eq.f32.partialorder %v2404, 0.0
    %v2413 = vand.u32 %v2404, 2147483648
    %v2414 = vsel %vm2412, %v2413, %v2411
    %v2415 = vrsqrt.pop %v2407
    %v2416 = vmul.f32 %v2407, %v2415
    %vm2417 = vcmp.eq.f32.partialorder %v2407, inf
    %v2418 = vsel %vm2417, %v2407, %v2416
    %vm2419 = vcmp.eq.f32.partialorder %v2407, 0.0
    %v2420 = vand.u32 %v2407, 2147483648
    %v2421 = vsel %vm2419, %v2420, %v2418
    %v2422 = vmul.f32 %v2390, 0.0
    %v2423 = vmul.f32 %v2391, 0.0
    %2426 = vrot.lane.b32.xlu0 %v2422, 32
    %v2427 = vpop.permute.xlu0 %2426
    %2428 = vrot.lane.b32.xlu0 %v2423, 32
    %v2429 = vpop.permute.xlu0 %2428
    %v2432 = vsel %vm265, %v2427, 0.0
    %2433 = vadd.xlane.f32.xlu0 %v2432
    %v2434 = vpop.xlane.xlu0 %2433
    %v2435 = vsel %vm265, %v2429, 0.0
    %2436 = vadd.xlane.f32.xlu0 %v2435
    %v2437 = vpop.xlane.xlu0 %2436
    %2438 = vadd.xlane.f32.xlu0 0.0
    %v2439 = vpop.xlane.xlu0 %2438
    %v2440 = vrsqrt.pop %v2439
    %v2441 = vmul.f32 %v2439, %v2440
    %vm2442 = vcmp.eq.f32.partialorder %v2439, inf
    %v2443 = vsel %vm2442, %v2439, %v2441
    %vm2444 = vcmp.eq.f32.partialorder %v2439, 0.0
    %v2445 = vand.u32 %v2439, 2147483648
    %v2446 = vsel %vm2444, %v2445, %v2443
    %v2447 = vmul.f32 %v2446, %v2414
    %v2448 = vmul.f32 %v2446, %v2421
    %v2449 = vmax.f32 %v2447, 1e-08
    %v2450 = vmax.f32 %v2448, 1e-08
    %v2451 = vrcp.pop %v2449
    %v2452 = vmul.f32 %v2434, %v2451
    %v2453 = vrcp.pop %v2450
    %v2454 = vmul.f32 %v2437, %v2453
    %v2457 = vlaneseq
    %v2458 = vshrl.u32 %v2457, 7
    %v2459 = vsub.s32 %v40, %v2458
    %v2460 = vrot.slane %v2452, %v2459
    %v2461 = vlaneseq
    %v2462 = vshrl.u32 %v2461, 7
    %v2463 = vsub.s32 %v40, %v2462
    %v2464 = vrot.slane %v2454, %v2463
    %vm2465 = vcmask 1041409
    %v2466 = vsel %vm2465, %v2464, %v2460
    %vm2468 = vcmask 58368
    %v2469 = vsel %vm2468, %v2466, -inf
    %2470 = vmax.xlane.f32.xlu0 %v2469
    %v2471 = vpop.xlane.xlu0 %2470
    %v2473 = vlaneseq
    %v2474 = vshrl.u32 %v2473, 7
    %v2475 = vsub.s32 0, %v2474
    %v2476 = vrot.slane %v2471, %v2475
    %v2477 = vlaneseq
    %v2478 = vshrl.u32 %v2477, 7
    %v2479 = vsub.s32 1, %v2478
    %v2480 = vrot.slane %v2471, %v2479
    %v2483 = vsub.f32 %v2452, %v2476
    %v2484 = vsub.f32 %v2454, %v2480
    %v2485 = vmul.f32 %v2483, 1.442695
    %v2486 = vpow.pop %v2485
    %v2487 = vmul.f32 %v2484, 1.442695
    %v2488 = vpow.pop %v2487
    %2491 = vset.pattern.permute.xlu0 0
    %2492 = vperm.xlu0 %2491, %v2486
    %v2493 = vpop.permute.xlu0 %2492
    %2494 = vset.pattern.permute.xlu0 0
    %2495 = vperm.xlu0 %2494, %v2488
    %v2496 = vpop.permute.xlu0 %2495
    %v2497 = vlaneseq
    %v2498 = vshrl.u32 %v2497, 7
    %v2499 = vsub.s32 %v40, %v2498
    %v2500 = vrot.slane %v2493, %v2499
    %v2501 = vlaneseq
    %v2502 = vshrl.u32 %v2501, 7
    %v2503 = vsub.s32 %v40, %v2502
    %v2504 = vrot.slane %v2496, %v2503
    %v2505 = vsel %vm2465, %v2504, %v2500
    %v2507 = vsel %vm2468, %v2505, 0.0
    %2508 = vadd.xlane.f32.xlu0 %v2507
    %v2509 = vpop.xlane.xlu0 %2508
    %v2511 = vlaneseq
    %v2512 = vshrl.u32 %v2511, 7
    %v2513 = vsub.s32 0, %v2512
    %v2514 = vrot.slane %v2509, %v2513
    %v2515 = vlaneseq
    %v2516 = vshrl.u32 %v2515, 7
    %v2517 = vsub.s32 1, %v2516
    %v2518 = vrot.slane %v2509, %v2517
    %v2521 = vrcp.pop %v2514
    %v2522 = vmul.f32 %v2486, %v2521
    %v2523 = vrcp.pop %v2518
    %v2524 = vmul.f32 %v2488, %v2523
    %2526 = vset.pattern.permute.xlu0 0
    %2527 = vperm.xlu0 %2526, %v2522
    %v2528 = vpop.permute.xlu0 %2527
    %2531 = vset.pattern.permute.xlu0 0
    %2532 = vperm.xlu0 %2531, %v2524
    %v2533 = vpop.permute.xlu0 %2532
    %v2535 = vmul.f32 %v2528, %v2390
    %v2536 = vmul.f32 %v2533, %v2391
    %vm2537 = vcmask 1048320
    %v2538 = vsel %vm2537, %v2535, 0.0
    %v2539 = vrot.slane %v2538, 4
    %v2540 = vadd.f32 %v2538, %v2539
    %v2541 = vrot.slane %v2540, 2
    %v2542 = vadd.f32 %v2540, %v2541
    %v2543 = vrot.slane %v2542, 1
    %v2544 = vadd.f32 %v2542, %v2543
    %v2545 = vsel %vm2537, %v2536, 0.0
    %v2546 = vrot.slane %v2545, 4
    %v2547 = vadd.f32 %v2545, %v2546
    %v2548 = vrot.slane %v2547, 2
    %v2549 = vadd.f32 %v2547, %v2548
    %v2550 = vrot.slane %v2549, 1
    %v2551 = vadd.f32 %v2549, %v2550
    %v2554 = vsel %vm2465, %v2551, %v2544
    %2555 = vrot.lane.b32.xlu0 %v2554, 32
    %v2556 = vpop.permute.xlu0 %2555
    %2558 = vst.msk [vmem:[#allocation2] sm:$0x3] %vm368, %v2556
    %2559 = vst.msk [vmem:[#allocation2] sm:$0x3] %vm370, 0.0
    %v2560 = vld [vmem:[#allocation2] sm:$0x3]
    %v2561 = vld [vmem:[%s9] sm:$0xff]
    %v2562 = vld [vmem:[%s9 + $0x8] sm:$0xff]
    %v2563 = vld [vmem:[%s9 + $0x10] sm:$0xff]
    %v2564 = vld [vmem:[%s9 + $0x18] sm:$0xff]
    %v2565 = vld [vmem:[%s9 + $0x20] sm:$0xff]
    %v2566 = vld [vmem:[%s9 + $0x28] sm:$0xff]
    %v2567 = vld [vmem:[%s9 + $0x30] sm:$0xff]
    %v2568 = vld [vmem:[%s9 + $0x38] sm:$0xff]
    %v2569 = vld [vmem:[%s9 + $0x40] sm:$0xff]
    %v2570 = vld [vmem:[%s9 + $0x48] sm:$0xff]
    %v2571 = vld [vmem:[%s9 + $0x50] sm:$0xff]
    %v2572 = vld [vmem:[%s9 + $0x58] sm:$0xff]
    %v2573 = vld [vmem:[%s9 + $0x60] sm:$0xff]
    %v2574 = vld [vmem:[%s9 + $0x68] sm:$0xff]
    %v2575 = vld [vmem:[%s9 + $0x70] sm:$0xff]
    %v2576 = vld [vmem:[%s9 + $0x78] sm:$0xff]
    %v2578 = vsel %vm388, %v2560, 0
    %2580 = vmatprep.subr.mxu0 %v2562
    %2581 = vmatpush1.msra.mxu0 %v2561
    %2582 = vmatprep.subr.mxu0 %v2564
    %2583 = vmatpush1.msra.mxu0 %v2563
    %2584 = vmatprep.subr.mxu0 %v2566
    %2585 = vmatpush1.msra.mxu0 %v2565
    %2586 = vmatprep.subr.mxu0 %v2568
    %2587 = vmatpush1.msra.mxu0 %v2567
    %2588 = vmatprep.subr.mxu0 %v2570
    %2589 = vmatpush1.msra.mxu0 %v2569
    %2590 = vmatprep.subr.mxu0 %v2572
    %2591 = vmatpush1.msra.mxu0 %v2571
    %2592 = vmatprep.subr.mxu0 %v2574
    %2593 = vmatpush1.msra.mxu0 %v2573
    %2594 = vmatprep.subr.mxu0 %v2576
    %2595 = vmatpush1.msra.mxu0 %v2575
    %2596 = vmatprep.subr.mxu0 0.0
    %2597 = vmatpush1.msra.mxu0 0.0
    %2598 = vmatprep.subr.mxu0 0.0
    %2599 = vmatpush1.msra.mxu0 0.0
    %2600 = vmatprep.subr.mxu0 0.0
    %2601 = vmatpush1.msra.mxu0 0.0
    %2602 = vmatprep.subr.mxu0 0.0
    %2603 = vmatpush1.msra.mxu0 0.0
    %2604 = vmatprep.subr.mxu0 0.0
    %2605 = vmatpush1.msra.mxu0 0.0
    %2606 = vmatprep.subr.mxu0 0.0
    %2607 = vmatpush1.msra.mxu0 0.0
    %2608 = vmatprep.subr.mxu0 0.0
    %2609 = vmatpush1.msra.mxu0 0.0
    %2610 = vmatprep.subr.mxu0 0.0
    %2611 = vmatpush1.msra.mxu0 0.0
    %2612 = vmatprep.subr.mxu0 0.0
    %2613 = vmatpush1.msra.mxu0 0.0
    %2614 = vmatprep.subr.mxu0 0.0
    %2615 = vmatpush1.msra.mxu0 0.0
    %2616 = vmatprep.subr.mxu0 0.0
    %2617 = vmatpush1.msra.mxu0 0.0
    %2618 = vmatprep.subr.mxu0 0.0
    %2619 = vmatpush1.msra.mxu0 0.0
    %2620 = vmatprep.subr.mxu0 0.0
    %2621 = vmatpush1.msra.mxu0 0.0
    %2622 = vmatprep.subr.mxu0 0.0
    %2623 = vmatpush1.msra.mxu0 0.0
    %2624 = vmatprep.subr.mxu0 0.0
    %2625 = vmatpush1.msra.mxu0 0.0
    %2626 = vmatprep.subr.mxu0 0.0
    %2627 = vmatpush1.msra.mxu0 0.0
    %2628 = vmatprep.subr.mxu0 0.0
    %2629 = vmatpush1.msra.mxu0 0.0
    %2630 = vmatprep.subr.mxu0 0.0
    %2631 = vmatpush1.msra.mxu0 0.0
    %2632 = vmatprep.subr.mxu0 0.0
    %2633 = vmatpush1.msra.mxu0 0.0
    %2634 = vmatprep.subr.mxu0 0.0
    %2635 = vmatpush1.msra.mxu0 0.0
    %2636 = vmatprep.subr.mxu0 0.0
    %2637 = vmatpush1.msra.mxu0 0.0
    %2638 = vmatprep.subr.mxu0 0.0
    %2639 = vmatpush1.msra.mxu0 0.0
    %2640 = vmatprep.subr.mxu0 0.0
    %2641 = vmatpush1.msra.mxu0 0.0
    %2642 = vmatprep.subr.mxu0 0.0
    %2643 = vmatpush1.msra.mxu0 0.0
    %2644 = vmatprep.mubr.f32.mxu0 0.0
    %2645 = vmatmul.mubr.f32.gmra.mrb[0].mxu0 %v2578
    %v2646 = vpop.f32.mrb[0].mxu0
    %v2647 = vadd.f32 0.0, %v2646
    %v2648 = vpop.f32.mrb[0].mxu0
    %2649 = vdwg.mxu0
    %v2650 = vadd.f32 %v251, %v2647
    %v2651 = vxor.u32 %v2650, 2147483648
    %v2652 = vmul.f32 %v2651, 1.442695
    %v2653 = vpow.pop %v2652
    %v2654 = vadd.f32 %v2653, 1.0
    %v2655 = vrcp.pop %v2654
    %v2656 = vmul.f32 1.0, %v2655
    %v2657 = vtanh.pop %v2650
    %v2658 = vmul.f32 %v2656, 0.0
    %2660 = vrot.lane.b32.xlu0 %v2657, 64
    %v2661 = vpop.permute.xlu0 %2660
    %v2663 = vmul.f32 %v2656, %v2661
    %2665 = vrot.lane.b32.xlu0 %v2663, 32
    %v2666 = vpop.permute.xlu0 %2665
    %v2668 = vadd.f32 %v2658, %v2666
    %v2669 = vtanh.pop %v2668
    %2671 = vrot.lane.b32.xlu0 %v2669, 64
    %v2672 = vpop.permute.xlu0 %2671
    %v2674 = vmul.f32 %v2656, %v2672
    %v2677 = vunpack.c.l.s4 1966171168
    %v2678 = vunpack.c.0.s8 %v2677
    %v2679 = vlaneseq
    %v2680 = vshrl.u32 %v2679, 7
    %v2681 = vsub.s32 %v2678, %v2680
    %v2682 = vrot.slane %v2674, %v2681
    %v2683 = vcombine.high %v2682, %v2682
    %v2685 = vunpack.c.l.s4 1966171168
    %v2686 = vunpack.c.0.s8 %v2685
    %v2687 = vlaneseq
    %v2688 = vshrl.u32 %v2687, 7
    %v2689 = vsub.s32 %v2686, %v2688
    %v2690 = vrot.slane %v2682, %v2689
    %v2692 = vunpack.c.l.s4 1966171168
    %v2693 = vunpack.c.0.s8 %v2692
    %v2694 = vlaneseq
    %v2695 = vshrl.u32 %v2694, 7
    %v2696 = vsub.s32 %v2693, %v2695
    %v2697 = vrot.slane %v2683, %v2696
    %v2698 = vlaneseq
    %v2699 = vshrl.u32 %v2698, 7
    %v2700 = vsub.s32 0, %v2699
    %v2701 = vrot.slane %v2690, %v2700
    %v2702 = vlaneseq
    %v2703 = vshrl.u32 %v2702, 7
    %v2704 = vsub.s32 0, %v2703
    %v2705 = vrot.slane %v2697, %v2704
    %v2708 = vmul.f32 %v2390, %v2701
    %v2709 = vmul.f32 %v2391, %v2705
    %2712 = vrot.lane.b32.xlu0 %v2708, 32
    %v2713 = vpop.permute.xlu0 %2712
    %2714 = vrot.lane.b32.xlu0 %v2709, 32
    %v2715 = vpop.permute.xlu0 %2714
    %v2718 = vsel %vm265, %v2713, 0.0
    %2719 = vadd.xlane.f32.xlu0 %v2718
    %v2720 = vpop.xlane.xlu0 %2719
    %v2721 = vsel %vm265, %v2715, 0.0
    %2722 = vadd.xlane.f32.xlu0 %v2721
    %v2723 = vpop.xlane.xlu0 %2722
    %v2724 = vmul.f32 %v2674, %v2674
    %2726 = vrot.lane.b32.xlu0 %v2724, 32
    %v2727 = vpop.permute.xlu0 %2726
    %v2729 = vsel %vm368, %v2727, 0.0
    %2730 = vadd.xlane.f32.xlu0 %v2729
    %v2731 = vpop.xlane.xlu0 %2730
    %v2732 = vrsqrt.pop %v2731
    %v2733 = vmul.f32 %v2731, %v2732
    %vm2734 = vcmp.eq.f32.partialorder %v2731, inf
    %v2735 = vsel %vm2734, %v2731, %v2733
    %vm2736 = vcmp.eq.f32.partialorder %v2731, 0.0
    %v2737 = vand.u32 %v2731, 2147483648
    %v2738 = vsel %vm2736, %v2737, %v2735
    %v2741 = vlaneseq
    %v2742 = vshrl.u32 %v2741, 7
    %v2743 = vsub.s32 %v40, %v2742
    %v2744 = vrot.slane %v2414, %v2743
    %v2745 = vlaneseq
    %v2746 = vshrl.u32 %v2745, 7
    %v2747 = vsub.s32 %v40, %v2746
    %v2748 = vrot.slane %v2421, %v2747
    %v2749 = vsel %vm2465, %v2748, %v2744
    %v2751 = vmul.f32 %v2738, %v2749
    %v2752 = vmax.f32 %v2751, 1e-08
    %v2754 = vlaneseq
    %v2755 = vshrl.u32 %v2754, 7
    %v2756 = vsub.s32 0, %v2755
    %v2757 = vrot.slane %v2752, %v2756
    %2759 = vbcast.lane.b32.xlu0 %v2757, 256
    %v2760 = vpop.permute.xlu0 %2759
    %v2761 = vlaneseq
    %v2762 = vshrl.u32 %v2761, 7
    %v2763 = vsub.s32 1, %v2762
    %v2764 = vrot.slane %v2752, %v2763
    %2766 = vbcast.lane.b32.xlu0 %v2764, 256
    %v2767 = vpop.permute.xlu0 %2766
    %v2770 = vrcp.pop %v2760
    %v2771 = vmul.f32 %v2720, %v2770
    %v2772 = vrcp.pop %v2767
    %v2773 = vmul.f32 %v2723, %v2772
    %2776 = vset.pattern.permute.xlu0 0
    %2777 = vperm.xlu0 %2776, %v2771
    %v2778 = vpop.permute.xlu0 %2777
    %2779 = vset.pattern.permute.xlu0 0
    %2780 = vperm.xlu0 %2779, %v2773
    %v2781 = vpop.permute.xlu0 %2780
    %v2782 = vlaneseq
    %v2783 = vshrl.u32 %v2782, 7
    %v2784 = vsub.s32 %v40, %v2783
    %v2785 = vrot.slane %v2778, %v2784
    %v2786 = vlaneseq
    %v2787 = vshrl.u32 %v2786, 7
    %v2788 = vsub.s32 %v40, %v2787
    %v2789 = vrot.slane %v2781, %v2788
    %v2790 = vsel %vm2465, %v2789, %v2785
    %v2792 = vsel %vm2468, %v2790, -inf
    %2793 = vmax.xlane.f32.xlu0 %v2792
    %v2794 = vpop.xlane.xlu0 %2793
    %v2796 = vlaneseq
    %v2797 = vshrl.u32 %v2796, 7
    %v2798 = vsub.s32 0, %v2797
    %v2799 = vrot.slane %v2794, %v2798
    %v2800 = vlaneseq
    %v2801 = vshrl.u32 %v2800, 7
    %v2802 = vsub.s32 1, %v2801
    %v2803 = vrot.slane %v2794, %v2802
    %v2806 = vsub.f32 %v2771, %v2799
    %v2807 = vsub.f32 %v2773, %v2803
    %v2808 = vmul.f32 %v2806, 1.442695
    %v2809 = vpow.pop %v2808
    %v2810 = vmul.f32 %v2807, 1.442695
    %v2811 = vpow.pop %v2810
    %2814 = vset.pattern.permute.xlu0 0
    %2815 = vperm.xlu0 %2814, %v2809
    %v2816 = vpop.permute.xlu0 %2815
    %2817 = vset.pattern.permute.xlu0 0
    %2818 = vperm.xlu0 %2817, %v2811
    %v2819 = vpop.permute.xlu0 %2818
    %v2820 = vlaneseq
    %v2821 = vshrl.u32 %v2820, 7
    %v2822 = vsub.s32 %v40, %v2821
    %v2823 = vrot.slane %v2816, %v2822
    %v2824 = vlaneseq
    %v2825 = vshrl.u32 %v2824, 7
    %v2826 = vsub.s32 %v40, %v2825
    %v2827 = vrot.slane %v2819, %v2826
    %v2828 = vsel %vm2465, %v2827, %v2823
    %v2830 = vsel %vm2468, %v2828, 0.0
    %2831 = vadd.xlane.f32.xlu0 %v2830
    %v2832 = vpop.xlane.xlu0 %2831
    %v2834 = vlaneseq
    %v2835 = vshrl.u32 %v2834, 7
    %v2836 = vsub.s32 0, %v2835
    %v2837 = vrot.slane %v2832, %v2836
    %v2838 = vlaneseq
    %v2839 = vshrl.u32 %v2838, 7
    %v2840 = vsub.s32 1, %v2839
    %v2841 = vrot.slane %v2832, %v2840
    %v2844 = vrcp.pop %v2837
    %v2845 = vmul.f32 %v2809, %v2844
    %v2846 = vrcp.pop %v2841
    %v2847 = vmul.f32 %v2811, %v2846
    %2849 = vset.pattern.permute.xlu0 0
    %2850 = vperm.xlu0 %2849, %v2845
    %v2851 = vpop.permute.xlu0 %2850
    %2854 = vset.pattern.permute.xlu0 0
    %2855 = vperm.xlu0 %2854, %v2847
    %v2856 = vpop.permute.xlu0 %2855
    %v2858 = vmul.f32 %v2851, %v2390
    %v2859 = vmul.f32 %v2856, %v2391
    %v2860 = vsel %vm2537, %v2858, 0.0
    %v2861 = vrot.slane %v2860, 4
    %v2862 = vadd.f32 %v2860, %v2861
    %v2863 = vrot.slane %v2862, 2
    %v2864 = vadd.f32 %v2862, %v2863
    %v2865 = vrot.slane %v2864, 1
    %v2866 = vadd.f32 %v2864, %v2865
    %v2867 = vsel %vm2537, %v2859, 0.0
    %v2868 = vrot.slane %v2867, 4
    %v2869 = vadd.f32 %v2867, %v2868
    %v2870 = vrot.slane %v2869, 2
    %v2871 = vadd.f32 %v2869, %v2870
    %v2872 = vrot.slane %v2871, 1
    %v2873 = vadd.f32 %v2871, %v2872
    %v2876 = vsel %vm2465, %v2873, %v2866
    %2877 = vrot.lane.b32.xlu0 %v2876, 32
    %v2878 = vpop.permute.xlu0 %2877
    %2880 = vst.msk [vmem:[#allocation2] sm:$0x3] %vm368, %v2878
    %2881 = vrot.lane.b32.xlu0 %v2674, 64
    %v2882 = vpop.permute.xlu0 %2881
    %2884 = vst.msk [vmem:[#allocation2] sm:$0x3] %vm370, %v2882
    %v2885 = vld [vmem:[#allocation2] sm:$0x3]
    %v2886 = vld [vmem:[%s9] sm:$0xff]
    %v2887 = vld [vmem:[%s9 + $0x8] sm:$0xff]
    %v2888 = vld [vmem:[%s9 + $0x10] sm:$0xff]
    %v2889 = vld [vmem:[%s9 + $0x18] sm:$0xff]
    %v2890 = vld [vmem:[%s9 + $0x20] sm:$0xff]
    %v2891 = vld [vmem:[%s9 + $0x28] sm:$0xff]
    %v2892 = vld [vmem:[%s9 + $0x30] sm:$0xff]
    %v2893 = vld [vmem:[%s9 + $0x38] sm:$0xff]
    %v2894 = vld [vmem:[%s9 + $0x40] sm:$0xff]
    %v2895 = vld [vmem:[%s9 + $0x48] sm:$0xff]
    %v2896 = vld [vmem:[%s9 + $0x50] sm:$0xff]
    %v2897 = vld [vmem:[%s9 + $0x58] sm:$0xff]
    %v2898 = vld [vmem:[%s9 + $0x60] sm:$0xff]
    %v2899 = vld [vmem:[%s9 + $0x68] sm:$0xff]
    %v2900 = vld [vmem:[%s9 + $0x70] sm:$0xff]
    %v2901 = vld [vmem:[%s9 + $0x78] sm:$0xff]
    %v2903 = vsel %vm388, %v2885, 0
    %2905 = vmatprep.subr.mxu0 %v2887
    %2906 = vmatpush1.msra.mxu0 %v2886
    %2907 = vmatprep.subr.mxu0 %v2889
    %2908 = vmatpush1.msra.mxu0 %v2888
    %2909 = vmatprep.subr.mxu0 %v2891
    %2910 = vmatpush1.msra.mxu0 %v2890
    %2911 = vmatprep.subr.mxu0 %v2893
    %2912 = vmatpush1.msra.mxu0 %v2892
    %2913 = vmatprep.subr.mxu0 %v2895
    %2914 = vmatpush1.msra.mxu0 %v2894
    %2915 = vmatprep.subr.mxu0 %v2897
    %2916 = vmatpush1.msra.mxu0 %v2896
    %2917 = vmatprep.subr.mxu0 %v2899
    %2918 = vmatpush1.msra.mxu0 %v2898
    %2919 = vmatprep.subr.mxu0 %v2901
    %2920 = vmatpush1.msra.mxu0 %v2900
    %2921 = vmatprep.subr.mxu0 0.0
    %2922 = vmatpush1.msra.mxu0 0.0
    %2923 = vmatprep.subr.mxu0 0.0
    %2924 = vmatpush1.msra.mxu0 0.0
    %2925 = vmatprep.subr.mxu0 0.0
    %2926 = vmatpush1.msra.mxu0 0.0
    %2927 = vmatprep.subr.mxu0 0.0
    %2928 = vmatpush1.msra.mxu0 0.0
    %2929 = vmatprep.subr.mxu0 0.0
    %2930 = vmatpush1.msra.mxu0 0.0
    %2931 = vmatprep.subr.mxu0 0.0
    %2932 = vmatpush1.msra.mxu0 0.0
    %2933 = vmatprep.subr.mxu0 0.0
    %2934 = vmatpush1.msra.mxu0 0.0
    %2935 = vmatprep.subr.mxu0 0.0
    %2936 = vmatpush1.msra.mxu0 0.0
    %2937 = vmatprep.subr.mxu0 0.0
    %2938 = vmatpush1.msra.mxu0 0.0
    %2939 = vmatprep.subr.mxu0 0.0
    %2940 = vmatpush1.msra.mxu0 0.0
    %2941 = vmatprep.subr.mxu0 0.0
    %2942 = vmatpush1.msra.mxu0 0.0
    %2943 = vmatprep.subr.mxu0 0.0
    %2944 = vmatpush1.msra.mxu0 0.0
    %2945 = vmatprep.subr.mxu0 0.0
    %2946 = vmatpush1.msra.mxu0 0.0
    %2947 = vmatprep.subr.mxu0 0.0
    %2948 = vmatpush1.msra.mxu0 0.0
    %2949 = vmatprep.subr.mxu0 0.0
    %2950 = vmatpush1.msra.mxu0 0.0
    %2951 = vmatprep.subr.mxu0 0.0
    %2952 = vmatpush1.msra.mxu0 0.0
    %2953 = vmatprep.subr.mxu0 0.0
    %2954 = vmatpush1.msra.mxu0 0.0
    %2955 = vmatprep.subr.mxu0 0.0
    %2956 = vmatpush1.msra.mxu0 0.0
    %2957 = vmatprep.subr.mxu0 0.0
    %2958 = vmatpush1.msra.mxu0 0.0
    %2959 = vmatprep.subr.mxu0 0.0
    %2960 = vmatpush1.msra.mxu0 0.0
    %2961 = vmatprep.subr.mxu0 0.0
    %2962 = vmatpush1.msra.mxu0 0.0
    %2963 = vmatprep.subr.mxu0 0.0
    %2964 = vmatpush1.msra.mxu0 0.0
    %2965 = vmatprep.subr.mxu0 0.0
    %2966 = vmatpush1.msra.mxu0 0.0
    %2967 = vmatprep.subr.mxu0 0.0
    %2968 = vmatpush1.msra.mxu0 0.0
    %2969 = vmatprep.mubr.f32.mxu0 0.0
    %2970 = vmatmul.mubr.f32.gmra.mrb[0].mxu0 %v2903
    %v2971 = vpop.f32.mrb[0].mxu0
    %v2972 = vadd.f32 0.0, %v2971
    %v2973 = vpop.f32.mrb[0].mxu0
    %v2974 = vadd.f32 0.0, %v2973
    %2975 = vdwg.mxu0
    %v2976 = vld [vmem:[%s10] sm:$0x1]
    %v2978 = vlaneseq
    %v2979 = vshrl.u32 %v2978, 7
    %v2980 = vsub.s32 0, %v2979
    %v2981 = vrot.slane %v2976, %v2980
    %v2983 = vadd.f32 %v2974, %v2981
    %2984 = vst [vmem:[#allocation3] sm:$0x3] %v2983
    %v2986 = vrot.slane %v2972, 6
    %v2988 = vadd.f32 %v251, %v2986
    %v2989 = vxor.u32 %v2988, 2147483648
    %v2990 = vmul.f32 %v2989, 1.442695
    %v2991 = vpow.pop %v2990
    %v2992 = vadd.f32 %v2991, 1.0
    %v2993 = vrcp.pop %v2992
    %v2994 = vmul.f32 1.0, %v2993
    %v2995 = vtanh.pop %v2988
    %v2997 = vrot.slane %v2668, 6
    %v2999 = vmul.f32 %v2994, %v2997
    %3001 = vrot.lane.b32.xlu0 %v2995, 64
    %v3002 = vpop.permute.xlu0 %3001
    %v3004 = vmul.f32 %v2994, %v3002
    %3006 = vrot.lane.b32.xlu0 %v3004, 32
    %v3007 = vpop.permute.xlu0 %3006
    %v3009 = vadd.f32 %v2999, %v3007
    %v3010 = vtanh.pop %v3009
    %3012 = vrot.lane.b32.xlu0 %v3010, 64
    %v3013 = vpop.permute.xlu0 %3012
    %v3015 = vmul.f32 %v2994, %v3013
    %v3018 = vunpack.c.l.s4 1966171168
    %v3019 = vunpack.c.0.s8 %v3018
    %v3020 = vlaneseq
    %v3021 = vshrl.u32 %v3020, 7
    %v3022 = vsub.s32 %v3019, %v3021
    %v3023 = vrot.slane %v3015, %v3022
    %v3024 = vcombine.high %v3023, %v3023
    %v3026 = vunpack.c.l.s4 1966171168
    %v3027 = vunpack.c.0.s8 %v3026
    %v3028 = vlaneseq
    %v3029 = vshrl.u32 %v3028, 7
    %v3030 = vsub.s32 %v3027, %v3029
    %v3031 = vrot.slane %v3023, %v3030
    %v3033 = vunpack.c.l.s4 1966171168
    %v3034 = vunpack.c.0.s8 %v3033
    %v3035 = vlaneseq
    %v3036 = vshrl.u32 %v3035, 7
    %v3037 = vsub.s32 %v3034, %v3036
    %v3038 = vrot.slane %v3024, %v3037
    %v3039 = vcombine.high %v3031, %v3031
    %v3040 = vcombine.high %v3038, %v3038
    %v3041 = vlaneseq
    %v3042 = vshrl.u32 %v3041, 7
    %v3043 = vsub.s32 0, %v3042
    %v3044 = vrot.slane %v3039, %v3043
    %v3045 = vlaneseq
    %v3046 = vshrl.u32 %v3045, 7
    %v3047 = vsub.s32 0, %v3046
    %v3048 = vrot.slane %v3040, %v3047
    %v3051 = vmul.f32 %v2390, %v3044
    %v3052 = vmul.f32 %v2391, %v3048
    %3055 = vrot.lane.b32.xlu0 %v3051, 32
    %v3056 = vpop.permute.xlu0 %3055
    %3057 = vrot.lane.b32.xlu0 %v3052, 32
    %v3058 = vpop.permute.xlu0 %3057
    %v3061 = vsel %vm265, %v3056, 0.0
    %3062 = vadd.xlane.f32.xlu0 %v3061
    %v3063 = vpop.xlane.xlu0 %3062
    %v3064 = vsel %vm265, %v3058, 0.0
    %3065 = vadd.xlane.f32.xlu0 %v3064
    %v3066 = vpop.xlane.xlu0 %3065
    %v3067 = vmul.f32 %v3015, %v3015
    %3069 = vrot.lane.b32.xlu0 %v3067, 32
    %v3070 = vpop.permute.xlu0 %3069
    %v3072 = vsel %vm633, %v3070, 0.0
    %3073 = vadd.xlane.f32.xlu0 %v3072
    %v3074 = vpop.xlane.xlu0 %3073
    %v3075 = vrsqrt.pop %v3074
    %v3076 = vmul.f32 %v3074, %v3075
    %vm3077 = vcmp.eq.f32.partialorder %v3074, inf
    %v3078 = vsel %vm3077, %v3074, %v3076
    %vm3079 = vcmp.eq.f32.partialorder %v3074, 0.0
    %v3080 = vand.u32 %v3074, 2147483648
    %v3081 = vsel %vm3079, %v3080, %v3078
    %vm3082 = vcmask 1043459
    %v3083 = vsel %vm3082, %v2748, %v2744
    %v3085 = vmul.f32 %v3081, %v3083
    %v3086 = vmax.f32 %v3085, 1e-08
    %v3088 = vlaneseq
    %v3089 = vshrl.u32 %v3088, 7
    %v3090 = vsub.s32 2, %v3089
    %v3091 = vrot.slane %v3086, %v3090
    %3093 = vbcast.lane.b32.xlu0 %v3091, 256
    %v3094 = vpop.permute.xlu0 %3093
    %v3095 = vlaneseq
    %v3096 = vshrl.u32 %v3095, 7
    %v3097 = vsub.s32 3, %v3096
    %v3098 = vrot.slane %v3086, %v3097
    %3100 = vbcast.lane.b32.xlu0 %v3098, 256
    %v3101 = vpop.permute.xlu0 %3100
    %v3104 = vrcp.pop %v3094
    %v3105 = vmul.f32 %v3063, %v3104
    %v3106 = vrcp.pop %v3101
    %v3107 = vmul.f32 %v3066, %v3106
    %3110 = vset.pattern.permute.xlu0 0
    %3111 = vperm.xlu0 %3110, %v3105
    %v3112 = vpop.permute.xlu0 %3111
    %3113 = vset.pattern.permute.xlu0 0
    %3114 = vperm.xlu0 %3113, %v3107
    %v3115 = vpop.permute.xlu0 %3114
    %v3116 = vlaneseq
    %v3117 = vshrl.u32 %v3116, 7
    %v3118 = vsub.s32 %v40, %v3117
    %v3119 = vrot.slane %v3112, %v3118
    %v3120 = vlaneseq
    %v3121 = vshrl.u32 %v3120, 7
    %v3122 = vsub.s32 %v40, %v3121
    %v3123 = vrot.slane %v3115, %v3122
    %v3124 = vsel %vm2465, %v3123, %v3119
    %v3126 = vsel %vm2468, %v3124, -inf
    %3127 = vmax.xlane.f32.xlu0 %v3126
    %v3128 = vpop.xlane.xlu0 %3127
    %v3130 = vlaneseq
    %v3131 = vshrl.u32 %v3130, 7
    %v3132 = vsub.s32 0, %v3131
    %v3133 = vrot.slane %v3128, %v3132
    %v3134 = vlaneseq
    %v3135 = vshrl.u32 %v3134, 7
    %v3136 = vsub.s32 1, %v3135
    %v3137 = vrot.slane %v3128, %v3136
    %v3140 = vsub.f32 %v3105, %v3133
    %v3141 = vsub.f32 %v3107, %v3137
    %v3142 = vmul.f32 %v3140, 1.442695
    %v3143 = vpow.pop %v3142
    %v3144 = vmul.f32 %v3141, 1.442695
    %v3145 = vpow.pop %v3144
    %3148 = vset.pattern.permute.xlu0 0
    %3149 = vperm.xlu0 %3148, %v3143
    %v3150 = vpop.permute.xlu0 %3149
    %3151 = vset.pattern.permute.xlu0 0
    %3152 = vperm.xlu0 %3151, %v3145
    %v3153 = vpop.permute.xlu0 %3152
    %v3154 = vlaneseq
    %v3155 = vshrl.u32 %v3154, 7
    %v3156 = vsub.s32 %v40, %v3155
    %v3157 = vrot.slane %v3150, %v3156
    %v3158 = vlaneseq
    %v3159 = vshrl.u32 %v3158, 7
    %v3160 = vsub.s32 %v40, %v3159
    %v3161 = vrot.slane %v3153, %v3160
    %v3162 = vsel %vm2465, %v3161, %v3157
    %v3164 = vsel %vm2468, %v3162, 0.0
    %3165 = vadd.xlane.f32.xlu0 %v3164
    %v3166 = vpop.xlane.xlu0 %3165
    %v3168 = vlaneseq
    %v3169 = vshrl.u32 %v3168, 7
    %v3170 = vsub.s32 0, %v3169
    %v3171 = vrot.slane %v3166, %v3170
    %v3172 = vlaneseq
    %v3173 = vshrl.u32 %v3172, 7
    %v3174 = vsub.s32 1, %v3173
    %v3175 = vrot.slane %v3166, %v3174
    %v3178 = vrcp.pop %v3171
    %v3179 = vmul.f32 %v3143, %v3178
    %v3180 = vrcp.pop %v3175
    %v3181 = vmul.f32 %v3145, %v3180
    %3183 = vset.pattern.permute.xlu0 0
    %3184 = vperm.xlu0 %3183, %v3179
    %v3185 = vpop.permute.xlu0 %3184
    %3188 = vset.pattern.permute.xlu0 0
    %3189 = vperm.xlu0 %3188, %v3181
    %v3190 = vpop.permute.xlu0 %3189
    %v3192 = vmul.f32 %v3185, %v2390
    %v3193 = vmul.f32 %v3190, %v2391
    %v3194 = vsel %vm2537, %v3192, 0.0
    %v3195 = vrot.slane %v3194, 4
    %v3196 = vadd.f32 %v3194, %v3195
    %v3197 = vrot.slane %v3196, 2
    %v3198 = vadd.f32 %v3196, %v3197
    %v3199 = vrot.slane %v3198, 1
    %v3200 = vadd.f32 %v3198, %v3199
    %v3201 = vsel %vm2537, %v3193, 0.0
    %v3202 = vrot.slane %v3201, 4
    %v3203 = vadd.f32 %v3201, %v3202
    %v3204 = vrot.slane %v3203, 2
    %v3205 = vadd.f32 %v3203, %v3204
    %v3206 = vrot.slane %v3205, 1
    %v3207 = vadd.f32 %v3205, %v3206
    %v3210 = vsel %vm2465, %v3207, %v3200
    %3211 = vrot.lane.b32.xlu0 %v3210, 32
    %v3212 = vpop.permute.xlu0 %3211
    %3214 = vst.msk [vmem:[#allocation2] sm:$0x3] %vm368, %v3212
    %3215 = vrot.lane.b32.xlu0 %v3015, 64
    %v3216 = vpop.permute.xlu0 %3215
    %vm3218 = vcmask 519426
    %3219 = vst.msk [vmem:[#allocation2 - $0x2] sm:$0xc] %vm3218, %v3216
    %v3220 = vld [vmem:[#allocation2] sm:$0x3]
    %v3221 = vld [vmem:[%s9] sm:$0xff]
    %v3222 = vld [vmem:[%s9 + $0x8] sm:$0xff]
    %v3223 = vld [vmem:[%s9 + $0x10] sm:$0xff]
    %v3224 = vld [vmem:[%s9 + $0x18] sm:$0xff]
    %v3225 = vld [vmem:[%s9 + $0x20] sm:$0xff]
    %v3226 = vld [vmem:[%s9 + $0x28] sm:$0xff]
    %v3227 = vld [vmem:[%s9 + $0x30] sm:$0xff]
    %v3228 = vld [vmem:[%s9 + $0x38] sm:$0xff]
    %v3229 = vld [vmem:[%s9 + $0x40] sm:$0xff]
    %v3230 = vld [vmem:[%s9 + $0x48] sm:$0xff]
    %v3231 = vld [vmem:[%s9 + $0x50] sm:$0xff]
    %v3232 = vld [vmem:[%s9 + $0x58] sm:$0xff]
    %v3233 = vld [vmem:[%s9 + $0x60] sm:$0xff]
    %v3234 = vld [vmem:[%s9 + $0x68] sm:$0xff]
    %v3235 = vld [vmem:[%s9 + $0x70] sm:$0xff]
    %v3236 = vld [vmem:[%s9 + $0x78] sm:$0xff]
    %v3238 = vsel %vm388, %v3220, 0
    %3240 = vmatprep.subr.mxu0 %v3222
    %3241 = vmatpush1.msra.mxu0 %v3221
    %3242 = vmatprep.subr.mxu0 %v3224
    %3243 = vmatpush1.msra.mxu0 %v3223
    %3244 = vmatprep.subr.mxu0 %v3226
    %3245 = vmatpush1.msra.mxu0 %v3225
    %3246 = vmatprep.subr.mxu0 %v3228
    %3247 = vmatpush1.msra.mxu0 %v3227
    %3248 = vmatprep.subr.mxu0 %v3230
    %3249 = vmatpush1.msra.mxu0 %v3229
    %3250 = vmatprep.subr.mxu0 %v3232
    %3251 = vmatpush1.msra.mxu0 %v3231
    %3252 = vmatprep.subr.mxu0 %v3234
    %3253 = vmatpush1.msra.mxu0 %v3233
    %3254 = vmatprep.subr.mxu0 %v3236
    %3255 = vmatpush1.msra.mxu0 %v3235
    %3256 = vmatprep.subr.mxu0 0.0
    %3257 = vmatpush1.msra.mxu0 0.0
    %3258 = vmatprep.subr.mxu0 0.0
    %3259 = vmatpush1.msra.mxu0 0.0
    %3260 = vmatprep.subr.mxu0 0.0
    %3261 = vmatpush1.msra.mxu0 0.0
    %3262 = vmatprep.subr.mxu0 0.0
    %3263 = vmatpush1.msra.mxu0 0.0
    %3264 = vmatprep.subr.mxu0 0.0
    %3265 = vmatpush1.msra.mxu0 0.0
    %3266 = vmatprep.subr.mxu0 0.0
    %3267 = vmatpush1.msra.mxu0 0.0
    %3268 = vmatprep.subr.mxu0 0.0
    %3269 = vmatpush1.msra.mxu0 0.0
    %3270 = vmatprep.subr.mxu0 0.0
    %3271 = vmatpush1.msra.mxu0 0.0
    %3272 = vmatprep.subr.mxu0 0.0
    %3273 = vmatpush1.msra.mxu0 0.0
    %3274 = vmatprep.subr.mxu0 0.0
    %3275 = vmatpush1.msra.mxu0 0.0
    %3276 = vmatprep.subr.mxu0 0.0
    %3277 = vmatpush1.msra.mxu0 0.0
    %3278 = vmatprep.subr.mxu0 0.0
    %3279 = vmatpush1.msra.mxu0 0.0
    %3280 = vmatprep.subr.mxu0 0.0
    %3281 = vmatpush1.msra.mxu0 0.0
    %3282 = vmatprep.subr.mxu0 0.0
    %3283 = vmatpush1.msra.mxu0 0.0
    %3284 = vmatprep.subr.mxu0 0.0
    %3285 = vmatpush1.msra.mxu0 0.0
    %3286 = vmatprep.subr.mxu0 0.0
    %3287 = vmatpush1.msra.mxu0 0.0
    %3288 = vmatprep.subr.mxu0 0.0
    %3289 = vmatpush1.msra.mxu0 0.0
    %3290 = vmatprep.subr.mxu0 0.0
    %3291 = vmatpush1.msra.mxu0 0.0
    %3292 = vmatprep.subr.mxu0 0.0
    %3293 = vmatpush1.msra.mxu0 0.0
    %3294 = vmatprep.subr.mxu0 0.0
    %3295 = vmatpush1.msra.mxu0 0.0
    %3296 = vmatprep.subr.mxu0 0.0
    %3297 = vmatpush1.msra.mxu0 0.0
    %3298 = vmatprep.subr.mxu0 0.0
    %3299 = vmatpush1.msra.mxu0 0.0
    %3300 = vmatprep.subr.mxu0 0.0
    %3301 = vmatpush1.msra.mxu0 0.0
    %3302 = vmatprep.subr.mxu0 0.0
    %3303 = vmatpush1.msra.mxu0 0.0
    %3304 = vmatprep.mubr.f32.mxu0 0.0
    %3305 = vmatmul.mubr.f32.gmra.mrb[0].mxu0 %v3238
    %v3306 = vpop.f32.mrb[0].mxu0
    %v3307 = vadd.f32 0.0, %v3306
    %v3308 = vpop.f32.mrb[0].mxu0
    %v3309 = vadd.f32 0.0, %v3308
    %3310 = vdwg.mxu0
    %v3311 = vld [vmem:[%s10] sm:$0x1]
    %v3313 = vlaneseq
    %v3314 = vshrl.u32 %v3313, 7
    %v3315 = vsub.s32 0, %v3314
    %v3316 = vrot.slane %v3311, %v3315
    %v3318 = vadd.f32 %v3309, %v3316
    %s3319 = scalar_lea.vmem [#allocation3], 2
    %3320 = vst [vmem:[%s3319] sm:$0x3] %v3318
    %v3322 = vrot.slane %v3307, 4
    %v3324 = vadd.f32 %v251, %v3322
    %v3325 = vxor.u32 %v3324, 2147483648
    %v3326 = vmul.f32 %v3325, 1.442695
    %v3327 = vpow.pop %v3326
    %v3328 = vadd.f32 %v3327, 1.0
    %v3329 = vrcp.pop %v3328
    %v3330 = vmul.f32 1.0, %v3329
    %v3331 = vtanh.pop %v3324
    %v3333 = vrot.slane %v3009, 6
    %v3335 = vmul.f32 %v3330, %v3333
    %3337 = vrot.lane.b32.xlu0 %v3331, 64
    %v3338 = vpop.permute.xlu0 %3337
    %v3340 = vmul.f32 %v3330, %v3338
    %3342 = vrot.lane.b32.xlu0 %v3340, 32
    %v3343 = vpop.permute.xlu0 %3342
    %v3345 = vadd.f32 %v3335, %v3343
    %v3346 = vtanh.pop %v3345
    %3348 = vrot.lane.b32.xlu0 %v3346, 64
    %v3349 = vpop.permute.xlu0 %3348
    %v3351 = vmul.f32 %v3330, %v3349
    %v3353 = vcombine.high %v3351, %v3351
    %v3355 = vunpack.c.l.s4 1966171168
    %v3356 = vunpack.c.0.s8 %v3355
    %v3357 = vlaneseq
    %v3358 = vshrl.u32 %v3357, 7
    %v3359 = vsub.s32 %v3356, %v3358
    %v3360 = vrot.slane %v3353, %v3359
    %v3361 = vcombine.high %v3360, %v3360
    %v3363 = vunpack.c.l.s4 1966171168
    %v3364 = vunpack.c.0.s8 %v3363
    %v3365 = vlaneseq
    %v3366 = vshrl.u32 %v3365, 7
    %v3367 = vsub.s32 %v3364, %v3366
    %v3368 = vrot.slane %v3360, %v3367
    %v3370 = vunpack.c.l.s4 1966171168
    %v3371 = vunpack.c.0.s8 %v3370
    %v3372 = vlaneseq
    %v3373 = vshrl.u32 %v3372, 7
    %v3374 = vsub.s32 %v3371, %v3373
    %v3375 = vrot.slane %v3361, %v3374
    %v3376 = vlaneseq
    %v3377 = vshrl.u32 %v3376, 7
    %v3378 = vsub.s32 0, %v3377
    %v3379 = vrot.slane %v3368, %v3378
    %v3380 = vlaneseq
    %v3381 = vshrl.u32 %v3380, 7
    %v3382 = vsub.s32 0, %v3381
    %v3383 = vrot.slane %v3375, %v3382
    %v3386 = vmul.f32 %v2390, %v3379
    %v3387 = vmul.f32 %v2391, %v3383
    %3390 = vrot.lane.b32.xlu0 %v3386, 32
    %v3391 = vpop.permute.xlu0 %3390
    %3392 = vrot.lane.b32.xlu0 %v3387, 32
    %v3393 = vpop.permute.xlu0 %3392
    %v3396 = vsel %vm265, %v3391, 0.0
    %3397 = vadd.xlane.f32.xlu0 %v3396
    %v3398 = vpop.xlane.xlu0 %3397
    %v3399 = vsel %vm265, %v3393, 0.0
    %3400 = vadd.xlane.f32.xlu0 %v3399
    %v3401 = vpop.xlane.xlu0 %3400
    %v3402 = vmul.f32 %v3351, %v3351
    %3404 = vrot.lane.b32.xlu0 %v3402, 32
    %v3405 = vpop.permute.xlu0 %3404
    %v3407 = vsel %vm902, %v3405, 0.0
    %3408 = vadd.xlane.f32.xlu0 %v3407
    %v3409 = vpop.xlane.xlu0 %3408
    %v3410 = vrsqrt.pop %v3409
    %v3411 = vmul.f32 %v3409, %v3410
    %vm3412 = vcmp.eq.f32.partialorder %v3409, inf
    %v3413 = vsel %vm3412, %v3409, %v3411
    %vm3414 = vcmp.eq.f32.partialorder %v3409, 0.0
    %v3415 = vand.u32 %v3409, 2147483648
    %v3416 = vsel %vm3414, %v3415, %v3413
    %vm3417 = vcmask 1045509
    %v3418 = vsel %vm3417, %v2748, %v2744
    %v3420 = vmul.f32 %v3416, %v3418
    %v3421 = vmax.f32 %v3420, 1e-08
    %v3423 = vlaneseq
    %v3424 = vshrl.u32 %v3423, 7
    %v3425 = vsub.s32 4, %v3424
    %v3426 = vrot.slane %v3421, %v3425
    %3428 = vbcast.lane.b32.xlu0 %v3426, 256
    %v3429 = vpop.permute.xlu0 %3428
    %v3430 = vlaneseq
    %v3431 = vshrl.u32 %v3430, 7
    %v3432 = vsub.s32 5, %v3431
    %v3433 = vrot.slane %v3421, %v3432
    %3435 = vbcast.lane.b32.xlu0 %v3433, 256
    %v3436 = vpop.permute.xlu0 %3435
    %v3439 = vrcp.pop %v3429
    %v3440 = vmul.f32 %v3398, %v3439
    %v3441 = vrcp.pop %v3436
    %v3442 = vmul.f32 %v3401, %v3441
    %3445 = vset.pattern.permute.xlu0 0
    %3446 = vperm.xlu0 %3445, %v3440
    %v3447 = vpop.permute.xlu0 %3446
    %3448 = vset.pattern.permute.xlu0 0
    %3449 = vperm.xlu0 %3448, %v3442
    %v3450 = vpop.permute.xlu0 %3449
    %v3451 = vlaneseq
    %v3452 = vshrl.u32 %v3451, 7
    %v3453 = vsub.s32 %v40, %v3452
    %v3454 = vrot.slane %v3447, %v3453
    %v3455 = vlaneseq
    %v3456 = vshrl.u32 %v3455, 7
    %v3457 = vsub.s32 %v40, %v3456
    %v3458 = vrot.slane %v3450, %v3457
    %v3459 = vsel %vm2465, %v3458, %v3454
    %v3461 = vsel %vm2468, %v3459, -inf
    %3462 = vmax.xlane.f32.xlu0 %v3461
    %v3463 = vpop.xlane.xlu0 %3462
    %v3465 = vlaneseq
    %v3466 = vshrl.u32 %v3465, 7
    %v3467 = vsub.s32 0, %v3466
    %v3468 = vrot.slane %v3463, %v3467
    %v3469 = vlaneseq
    %v3470 = vshrl.u32 %v3469, 7
    %v3471 = vsub.s32 1, %v3470
    %v3472 = vrot.slane %v3463, %v3471
    %v3475 = vsub.f32 %v3440, %v3468
    %v3476 = vsub.f32 %v3442, %v3472
    %v3477 = vmul.f32 %v3475, 1.442695
    %v3478 = vpow.pop %v3477
    %v3479 = vmul.f32 %v3476, 1.442695
    %v3480 = vpow.pop %v3479
    %3483 = vset.pattern.permute.xlu0 0
    %3484 = vperm.xlu0 %3483, %v3478
    %v3485 = vpop.permute.xlu0 %3484
    %3486 = vset.pattern.permute.xlu0 0
    %3487 = vperm.xlu0 %3486, %v3480
    %v3488 = vpop.permute.xlu0 %3487
    %v3489 = vlaneseq
    %v3490 = vshrl.u32 %v3489, 7
    %v3491 = vsub.s32 %v40, %v3490
    %v3492 = vrot.slane %v3485, %v3491
    %v3493 = vlaneseq
    %v3494 = vshrl.u32 %v3493, 7
    %v3495 = vsub.s32 %v40, %v3494
    %v3496 = vrot.slane %v3488, %v3495
    %v3497 = vsel %vm2465, %v3496, %v3492
    %v3499 = vsel %vm2468, %v3497, 0.0
    %3500 = vadd.xlane.f32.xlu0 %v3499
    %v3501 = vpop.xlane.xlu0 %3500
    %v3503 = vlaneseq
    %v3504 = vshrl.u32 %v3503, 7
    %v3505 = vsub.s32 0, %v3504
    %v3506 = vrot.slane %v3501, %v3505
    %v3507 = vlaneseq
    %v3508 = vshrl.u32 %v3507, 7
    %v3509 = vsub.s32 1, %v3508
    %v3510 = vrot.slane %v3501, %v3509
    %v3513 = vrcp.pop %v3506
    %v3514 = vmul.f32 %v3478, %v3513
    %v3515 = vrcp.pop %v3510
    %v3516 = vmul.f32 %v3480, %v3515
    %3518 = vset.pattern.permute.xlu0 0
    %3519 = vperm.xlu0 %3518, %v3514
    %v3520 = vpop.permute.xlu0 %3519
    %3523 = vset.pattern.permute.xlu0 0
    %3524 = vperm.xlu0 %3523, %v3516
    %v3525 = vpop.permute.xlu0 %3524
    %v3527 = vmul.f32 %v3520, %v2390
    %v3528 = vmul.f32 %v3525, %v2391
    %v3529 = vsel %vm2537, %v3527, 0.0
    %v3530 = vrot.slane %v3529, 4
    %v3531 = vadd.f32 %v3529, %v3530
    %v3532 = vrot.slane %v3531, 2
    %v3533 = vadd.f32 %v3531, %v3532
    %v3534 = vrot.slane %v3533, 1
    %v3535 = vadd.f32 %v3533, %v3534
    %v3536 = vsel %vm2537, %v3528, 0.0
    %v3537 = vrot.slane %v3536, 4
    %v3538 = vadd.f32 %v3536, %v3537
    %v3539 = vrot.slane %v3538, 2
    %v3540 = vadd.f32 %v3538, %v3539
    %v3541 = vrot.slane %v3540, 1
    %v3542 = vadd.f32 %v3540, %v3541
    %v3545 = vsel %vm2465, %v3542, %v3535
    %3546 = vrot.lane.b32.xlu0 %v3545, 32
    %v3547 = vpop.permute.xlu0 %3546
    %3549 = vst.msk [vmem:[#allocation2] sm:$0x3] %vm368, %v3547
    %3550 = vrot.lane.b32.xlu0 %v3351, 64
    %v3551 = vpop.permute.xlu0 %3550
    %vm3553 = vcmask 521476
    %3554 = vst.msk [vmem:[#allocation2 - $0x4] sm:$0x30] %vm3553, %v3551
    %v3555 = vld [vmem:[#allocation2] sm:$0x3]
    %v3556 = vld [vmem:[%s9] sm:$0xff]
    %v3557 = vld [vmem:[%s9 + $0x8] sm:$0xff]
    %v3558 = vld [vmem:[%s9 + $0x10] sm:$0xff]
    %v3559 = vld [vmem:[%s9 + $0x18] sm:$0xff]
    %v3560 = vld [vmem:[%s9 + $0x20] sm:$0xff]
    %v3561 = vld [vmem:[%s9 + $0x28] sm:$0xff]
    %v3562 = vld [vmem:[%s9 + $0x30] sm:$0xff]
    %v3563 = vld [vmem:[%s9 + $0x38] sm:$0xff]
    %v3564 = vld [vmem:[%s9 + $0x40] sm:$0xff]
    %v3565 = vld [vmem:[%s9 + $0x48] sm:$0xff]
    %v3566 = vld [vmem:[%s9 + $0x50] sm:$0xff]
    %v3567 = vld [vmem:[%s9 + $0x58] sm:$0xff]
    %v3568 = vld [vmem:[%s9 + $0x60] sm:$0xff]
    %v3569 = vld [vmem:[%s9 + $0x68] sm:$0xff]
    %v3570 = vld [vmem:[%s9 + $0x70] sm:$0xff]
    %v3571 = vld [vmem:[%s9 + $0x78] sm:$0xff]
    %v3573 = vsel %vm388, %v3555, 0
    %3575 = vmatprep.subr.mxu0 %v3557
    %3576 = vmatpush1.msra.mxu0 %v3556
    %3577 = vmatprep.subr.mxu0 %v3559
    %3578 = vmatpush1.msra.mxu0 %v3558
    %3579 = vmatprep.subr.mxu0 %v3561
    %3580 = vmatpush1.msra.mxu0 %v3560
    %3581 = vmatprep.subr.mxu0 %v3563
    %3582 = vmatpush1.msra.mxu0 %v3562
    %3583 = vmatprep.subr.mxu0 %v3565
    %3584 = vmatpush1.msra.mxu0 %v3564
    %3585 = vmatprep.subr.mxu0 %v3567
    %3586 = vmatpush1.msra.mxu0 %v3566
    %3587 = vmatprep.subr.mxu0 %v3569
    %3588 = vmatpush1.msra.mxu0 %v3568
    %3589 = vmatprep.subr.mxu0 %v3571
    %3590 = vmatpush1.msra.mxu0 %v3570
    %3591 = vmatprep.subr.mxu0 0.0
    %3592 = vmatpush1.msra.mxu0 0.0
    %3593 = vmatprep.subr.mxu0 0.0
    %3594 = vmatpush1.msra.mxu0 0.0
    %3595 = vmatprep.subr.mxu0 0.0
    %3596 = vmatpush1.msra.mxu0 0.0
    %3597 = vmatprep.subr.mxu0 0.0
    %3598 = vmatpush1.msra.mxu0 0.0
    %3599 = vmatprep.subr.mxu0 0.0
    %3600 = vmatpush1.msra.mxu0 0.0
    %3601 = vmatprep.subr.mxu0 0.0
    %3602 = vmatpush1.msra.mxu0 0.0
    %3603 = vmatprep.subr.mxu0 0.0
    %3604 = vmatpush1.msra.mxu0 0.0
    %3605 = vmatprep.subr.mxu0 0.0
    %3606 = vmatpush1.msra.mxu0 0.0
    %3607 = vmatprep.subr.mxu0 0.0
    %3608 = vmatpush1.msra.mxu0 0.0
    %3609 = vmatprep.subr.mxu0 0.0
    %3610 = vmatpush1.msra.mxu0 0.0
    %3611 = vmatprep.subr.mxu0 0.0
    %3612 = vmatpush1.msra.mxu0 0.0
    %3613 = vmatprep.subr.mxu0 0.0
    %3614 = vmatpush1.msra.mxu0 0.0
    %3615 = vmatprep.subr.mxu0 0.0
    %3616 = vmatpush1.msra.mxu0 0.0
    %3617 = vmatprep.subr.mxu0 0.0
    %3618 = vmatpush1.msra.mxu0 0.0
    %3619 = vmatprep.subr.mxu0 0.0
    %3620 = vmatpush1.msra.mxu0 0.0
    %3621 = vmatprep.subr.mxu0 0.0
    %3622 = vmatpush1.msra.mxu0 0.0
    %3623 = vmatprep.subr.mxu0 0.0
    %3624 = vmatpush1.msra.mxu0 0.0
    %3625 = vmatprep.subr.mxu0 0.0
    %3626 = vmatpush1.msra.mxu0 0.0
    %3627 = vmatprep.subr.mxu0 0.0
    %3628 = vmatpush1.msra.mxu0 0.0
    %3629 = vmatprep.subr.mxu0 0.0
    %3630 = vmatpush1.msra.mxu0 0.0
    %3631 = vmatprep.subr.mxu0 0.0
    %3632 = vmatpush1.msra.mxu0 0.0
    %3633 = vmatprep.subr.mxu0 0.0
    %3634 = vmatpush1.msra.mxu0 0.0
    %3635 = vmatprep.subr.mxu0 0.0
    %3636 = vmatpush1.msra.mxu0 0.0
    %3637 = vmatprep.subr.mxu0 0.0
    %3638 = vmatpush1.msra.mxu0 0.0
    %3639 = vmatprep.mubr.f32.mxu0 0.0
    %3640 = vmatmul.mubr.f32.gmra.mrb[0].mxu0 %v3573
    %v3641 = vpop.f32.mrb[0].mxu0
    %v3642 = vadd.f32 0.0, %v3641
    %v3643 = vpop.f32.mrb[0].mxu0
    %v3644 = vadd.f32 0.0, %v3643
    %3645 = vdwg.mxu0
    %v3646 = vld [vmem:[%s10] sm:$0x1]
    %v3648 = vlaneseq
    %v3649 = vshrl.u32 %v3648, 7
    %v3650 = vsub.s32 0, %v3649
    %v3651 = vrot.slane %v3646, %v3650
    %v3653 = vadd.f32 %v3644, %v3651
    %s3654 = scalar_lea.vmem [#allocation3], 4
    %3655 = vst [vmem:[%s3654] sm:$0x3] %v3653
    %v3657 = vrot.slane %v3642, 2
    %v3659 = vadd.f32 %v251, %v3657
    %v3660 = vxor.u32 %v3659, 2147483648
    %v3661 = vmul.f32 %v3660, 1.442695
    %v3662 = vpow.pop %v3661
    %v3663 = vadd.f32 %v3662, 1.0
    %v3664 = vrcp.pop %v3663
    %v3665 = vmul.f32 1.0, %v3664
    %v3666 = vtanh.pop %v3659
    %v3668 = vrot.slane %v3345, 6
    %v3670 = vmul.f32 %v3665, %v3668
    %3672 = vrot.lane.b32.xlu0 %v3666, 64
    %v3673 = vpop.permute.xlu0 %3672
    %v3675 = vmul.f32 %v3665, %v3673
    %3677 = vrot.lane.b32.xlu0 %v3675, 32
    %v3678 = vpop.permute.xlu0 %3677
    %v3680 = vadd.f32 %v3670, %v3678
    %v3681 = vtanh.pop %v3680
    %3683 = vrot.lane.b32.xlu0 %v3681, 64
    %v3684 = vpop.permute.xlu0 %3683
    %v3686 = vmul.f32 %v3665, %v3684
    %v3688 = vcombine.high %v3686, %v3686
    %v3690 = vunpack.c.l.s4 1966171168
    %v3691 = vunpack.c.0.s8 %v3690
    %v3692 = vlaneseq
    %v3693 = vshrl.u32 %v3692, 7
    %v3694 = vsub.s32 %v3691, %v3693
    %v3695 = vrot.slane %v3688, %v3694
    %v3696 = vcombine.high %v3695, %v3695
    %v3698 = vunpack.c.l.s4 1966171168
    %v3699 = vunpack.c.0.s8 %v3698
    %v3700 = vlaneseq
    %v3701 = vshrl.u32 %v3700, 7
    %v3702 = vsub.s32 %v3699, %v3701
    %v3703 = vrot.slane %v3695, %v3702
    %v3705 = vunpack.c.l.s4 1966171168
    %v3706 = vunpack.c.0.s8 %v3705
    %v3707 = vlaneseq
    %v3708 = vshrl.u32 %v3707, 7
    %v3709 = vsub.s32 %v3706, %v3708
    %v3710 = vrot.slane %v3696, %v3709
    %v3711 = vcombine.high %v3703, %v3703
    %v3712 = vcombine.high %v3710, %v3710
    %v3713 = vlaneseq
    %v3714 = vshrl.u32 %v3713, 7
    %v3715 = vsub.s32 0, %v3714
    %v3716 = vrot.slane %v3711, %v3715
    %v3717 = vlaneseq
    %v3718 = vshrl.u32 %v3717, 7
    %v3719 = vsub.s32 0, %v3718
    %v3720 = vrot.slane %v3712, %v3719
    %v3723 = vmul.f32 %v2390, %v3716
    %v3724 = vmul.f32 %v2391, %v3720
    %3727 = vrot.lane.b32.xlu0 %v3723, 32
    %v3728 = vpop.permute.xlu0 %3727
    %3729 = vrot.lane.b32.xlu0 %v3724, 32
    %v3730 = vpop.permute.xlu0 %3729
    %v3733 = vsel %vm265, %v3728, 0.0
    %3734 = vadd.xlane.f32.xlu0 %v3733
    %v3735 = vpop.xlane.xlu0 %3734
    %v3736 = vsel %vm265, %v3730, 0.0
    %3737 = vadd.xlane.f32.xlu0 %v3736
    %v3738 = vpop.xlane.xlu0 %3737
    %v3739 = vmul.f32 %v3686, %v3686
    %3741 = vrot.lane.b32.xlu0 %v3739, 32
    %v3742 = vpop.permute.xlu0 %3741
    %v3744 = vsel %vm1171, %v3742, 0.0
    %3745 = vadd.xlane.f32.xlu0 %v3744
    %v3746 = vpop.xlane.xlu0 %3745
    %v3747 = vrsqrt.pop %v3746
    %v3748 = vmul.f32 %v3746, %v3747
    %vm3749 = vcmp.eq.f32.partialorder %v3746, inf
    %v3750 = vsel %vm3749, %v3746, %v3748
    %vm3751 = vcmp.eq.f32.partialorder %v3746, 0.0
    %v3752 = vand.u32 %v3746, 2147483648
    %v3753 = vsel %vm3751, %v3752, %v3750
    %vm3754 = vcmask 1047559
    %v3755 = vsel %vm3754, %v2748, %v2744
    %v3757 = vmul.f32 %v3753, %v3755
    %v3758 = vmax.f32 %v3757, 1e-08
    %v3760 = vlaneseq
    %v3761 = vshrl.u32 %v3760, 7
    %v3762 = vsub.s32 6, %v3761
    %v3763 = vrot.slane %v3758, %v3762
    %3765 = vbcast.lane.b32.xlu0 %v3763, 256
    %v3766 = vpop.permute.xlu0 %3765
    %v3767 = vlaneseq
    %v3768 = vshrl.u32 %v3767, 7
    %v3769 = vsub.s32 7, %v3768
    %v3770 = vrot.slane %v3758, %v3769
    %3772 = vbcast.lane.b32.xlu0 %v3770, 256
    %v3773 = vpop.permute.xlu0 %3772
    %v3776 = vrcp.pop %v3766
    %v3777 = vmul.f32 %v3735, %v3776
    %v3778 = vrcp.pop %v3773
    %v3779 = vmul.f32 %v3738, %v3778
    %3782 = vset.pattern.permute.xlu0 0
    %3783 = vperm.xlu0 %3782, %v3777
    %v3784 = vpop.permute.xlu0 %3783
    %3785 = vset.pattern.permute.xlu0 0
    %3786 = vperm.xlu0 %3785, %v3779
    %v3787 = vpop.permute.xlu0 %3786
    %v3788 = vlaneseq
    %v3789 = vshrl.u32 %v3788, 7
    %v3790 = vsub.s32 %v40, %v3789
    %v3791 = vrot.slane %v3784, %v3790
    %v3792 = vlaneseq
    %v3793 = vshrl.u32 %v3792, 7
    %v3794 = vsub.s32 %v40, %v3793
    %v3795 = vrot.slane %v3787, %v3794
    %v3796 = vsel %vm2465, %v3795, %v3791
    %v3798 = vsel %vm2468, %v3796, -inf
    %3799 = vmax.xlane.f32.xlu0 %v3798
    %v3800 = vpop.xlane.xlu0 %3799
    %v3802 = vlaneseq
    %v3803 = vshrl.u32 %v3802, 7
    %v3804 = vsub.s32 0, %v3803
    %v3805 = vrot.slane %v3800, %v3804
    %v3806 = vlaneseq
    %v3807 = vshrl.u32 %v3806, 7
    %v3808 = vsub.s32 1, %v3807
    %v3809 = vrot.slane %v3800, %v3808
    %v3812 = vsub.f32 %v3777, %v3805
    %v3813 = vsub.f32 %v3779, %v3809
    %v3814 = vmul.f32 %v3812, 1.442695
    %v3815 = vpow.pop %v3814
    %v3816 = vmul.f32 %v3813, 1.442695
    %v3817 = vpow.pop %v3816
    %3820 = vset.pattern.permute.xlu0 0
    %3821 = vperm.xlu0 %3820, %v3815
    %v3822 = vpop.permute.xlu0 %3821
    %3823 = vset.pattern.permute.xlu0 0
    %3824 = vperm.xlu0 %3823, %v3817
    %v3825 = vpop.permute.xlu0 %3824
    %v3826 = vlaneseq
    %v3827 = vshrl.u32 %v3826, 7
    %v3828 = vsub.s32 %v40, %v3827
    %v3829 = vrot.slane %v3822, %v3828
    %v3830 = vlaneseq
    %v3831 = vshrl.u32 %v3830, 7
    %v3832 = vsub.s32 %v40, %v3831
    %v3833 = vrot.slane %v3825, %v3832
    %v3834 = vsel %vm2465, %v3833, %v3829
    %v3836 = vsel %vm2468, %v3834, 0.0
    %3837 = vadd.xlane.f32.xlu0 %v3836
    %v3838 = vpop.xlane.xlu0 %3837
    %v3840 = vlaneseq
    %v3841 = vshrl.u32 %v3840, 7
    %v3842 = vsub.s32 0, %v3841
    %v3843 = vrot.slane %v3838, %v3842
    %v3844 = vlaneseq
    %v3845 = vshrl.u32 %v3844, 7
    %v3846 = vsub.s32 1, %v3845
    %v3847 = vrot.slane %v3838, %v3846
    %v3850 = vrcp.pop %v3843
    %v3851 = vmul.f32 %v3815, %v3850
    %v3852 = vrcp.pop %v3847
    %v3853 = vmul.f32 %v3817, %v3852
    %3855 = vset.pattern.permute.xlu0 0
    %3856 = vperm.xlu0 %3855, %v3851
    %v3857 = vpop.permute.xlu0 %3856
    %3860 = vset.pattern.permute.xlu0 0
    %3861 = vperm.xlu0 %3860, %v3853
    %v3862 = vpop.permute.xlu0 %3861
    %v3864 = vmul.f32 %v3857, %v2390
    %v3865 = vmul.f32 %v3862, %v2391
    %v3866 = vsel %vm2537, %v3864, 0.0
    %v3867 = vrot.slane %v3866, 4
    %v3868 = vadd.f32 %v3866, %v3867
    %v3869 = vrot.slane %v3868, 2
    %v3870 = vadd.f32 %v3868, %v3869
    %v3871 = vrot.slane %v3870, 1
    %v3872 = vadd.f32 %v3870, %v3871
    %v3873 = vsel %vm2537, %v3865, 0.0
    %v3874 = vrot.slane %v3873, 4
    %v3875 = vadd.f32 %v3873, %v3874
    %v3876 = vrot.slane %v3875, 2
    %v3877 = vadd.f32 %v3875, %v3876
    %v3878 = vrot.slane %v3877, 1
    %v3879 = vadd.f32 %v3877, %v3878
    %v3882 = vsel %vm2465, %v3879, %v3872
    %3883 = vrot.lane.b32.xlu0 %v3882, 32
    %v3884 = vpop.permute.xlu0 %3883
    %3886 = vst.msk [vmem:[#allocation2] sm:$0x3] %vm368, %v3884
    %3887 = vrot.lane.b32.xlu0 %v3686, 64
    %v3888 = vpop.permute.xlu0 %3887
    %vm3890 = vcmask 523526
    %3891 = vst.msk [vmem:[#allocation2 - $0x6] sm:$0xc0] %vm3890, %v3888
    %v3892 = vld [vmem:[#allocation2] sm:$0x3]
    %v3893 = vld [vmem:[%s9] sm:$0xff]
    %v3894 = vld [vmem:[%s9 + $0x8] sm:$0xff]
    %v3895 = vld [vmem:[%s9 + $0x10] sm:$0xff]
    %v3896 = vld [vmem:[%s9 + $0x18] sm:$0xff]
    %v3897 = vld [vmem:[%s9 + $0x20] sm:$0xff]
    %v3898 = vld [vmem:[%s9 + $0x28] sm:$0xff]
    %v3899 = vld [vmem:[%s9 + $0x30] sm:$0xff]
    %v3900 = vld [vmem:[%s9 + $0x38] sm:$0xff]
    %v3901 = vld [vmem:[%s9 + $0x40] sm:$0xff]
    %v3902 = vld [vmem:[%s9 + $0x48] sm:$0xff]
    %v3903 = vld [vmem:[%s9 + $0x50] sm:$0xff]
    %v3904 = vld [vmem:[%s9 + $0x58] sm:$0xff]
    %v3905 = vld [vmem:[%s9 + $0x60] sm:$0xff]
    %v3906 = vld [vmem:[%s9 + $0x68] sm:$0xff]
    %v3907 = vld [vmem:[%s9 + $0x70] sm:$0xff]
    %v3908 = vld [vmem:[%s9 + $0x78] sm:$0xff]
    %v3910 = vsel %vm388, %v3892, 0
    %3912 = vmatprep.subr.mxu0 %v3894
    %3913 = vmatpush1.msra.mxu0 %v3893
    %3914 = vmatprep.subr.mxu0 %v3896
    %3915 = vmatpush1.msra.mxu0 %v3895
    %3916 = vmatprep.subr.mxu0 %v3898
    %3917 = vmatpush1.msra.mxu0 %v3897
    %3918 = vmatprep.subr.mxu0 %v3900
    %3919 = vmatpush1.msra.mxu0 %v3899
    %3920 = vmatprep.subr.mxu0 %v3902
    %3921 = vmatpush1.msra.mxu0 %v3901
    %3922 = vmatprep.subr.mxu0 %v3904
    %3923 = vmatpush1.msra.mxu0 %v3903
    %3924 = vmatprep.subr.mxu0 %v3906
    %3925 = vmatpush1.msra.mxu0 %v3905
    %3926 = vmatprep.subr.mxu0 %v3908
    %3927 = vmatpush1.msra.mxu0 %v3907
    %3928 = vmatprep.subr.mxu0 0.0
    %3929 = vmatpush1.msra.mxu0 0.0
    %3930 = vmatprep.subr.mxu0 0.0
    %3931 = vmatpush1.msra.mxu0 0.0
    %3932 = vmatprep.subr.mxu0 0.0
    %3933 = vmatpush1.msra.mxu0 0.0
    %3934 = vmatprep.subr.mxu0 0.0
    %3935 = vmatpush1.msra.mxu0 0.0
    %3936 = vmatprep.subr.mxu0 0.0
    %3937 = vmatpush1.msra.mxu0 0.0
    %3938 = vmatprep.subr.mxu0 0.0
    %3939 = vmatpush1.msra.mxu0 0.0
    %3940 = vmatprep.subr.mxu0 0.0
    %3941 = vmatpush1.msra.mxu0 0.0
    %3942 = vmatprep.subr.mxu0 0.0
    %3943 = vmatpush1.msra.mxu0 0.0
    %3944 = vmatprep.subr.mxu0 0.0
    %3945 = vmatpush1.msra.mxu0 0.0
    %3946 = vmatprep.subr.mxu0 0.0
    %3947 = vmatpush1.msra.mxu0 0.0
    %3948 = vmatprep.subr.mxu0 0.0
    %3949 = vmatpush1.msra.mxu0 0.0
    %3950 = vmatprep.subr.mxu0 0.0
    %3951 = vmatpush1.msra.mxu0 0.0
    %3952 = vmatprep.subr.mxu0 0.0
    %3953 = vmatpush1.msra.mxu0 0.0
    %3954 = vmatprep.subr.mxu0 0.0
    %3955 = vmatpush1.msra.mxu0 0.0
    %3956 = vmatprep.subr.mxu0 0.0
    %3957 = vmatpush1.msra.mxu0 0.0
    %3958 = vmatprep.subr.mxu0 0.0
    %3959 = vmatpush1.msra.mxu0 0.0
    %3960 = vmatprep.subr.mxu0 0.0
    %3961 = vmatpush1.msra.mxu0 0.0
    %3962 = vmatprep.subr.mxu0 0.0
    %3963 = vmatpush1.msra.mxu0 0.0
    %3964 = vmatprep.subr.mxu0 0.0
    %3965 = vmatpush1.msra.mxu0 0.0
    %3966 = vmatprep.subr.mxu0 0.0
    %3967 = vmatpush1.msra.mxu0 0.0
    %3968 = vmatprep.subr.mxu0 0.0
    %3969 = vmatpush1.msra.mxu0 0.0
    %3970 = vmatprep.subr.mxu0 0.0
    %3971 = vmatpush1.msra.mxu0 0.0
    %3972 = vmatprep.subr.mxu0 0.0
    %3973 = vmatpush1.msra.mxu0 0.0
    %3974 = vmatprep.subr.mxu0 0.0
    %3975 = vmatpush1.msra.mxu0 0.0
    %3976 = vmatprep.mubr.f32.mxu0 0.0
    %3977 = vmatmul.mubr.f32.gmra.mrb[0].mxu0 %v3910
    %v3978 = vpop.f32.mrb[0].mxu0
    %v3979 = vadd.f32 0.0, %v3978
    %v3980 = vpop.f32.mrb[0].mxu0
    %v3981 = vadd.f32 0.0, %v3980
    %3982 = vdwg.mxu0
    %v3983 = vld [vmem:[%s10] sm:$0x1]
    %v3985 = vlaneseq
    %v3986 = vshrl.u32 %v3985, 7
    %v3987 = vsub.s32 0, %v3986
    %v3988 = vrot.slane %v3983, %v3987
    %v3990 = vadd.f32 %v3981, %v3988
    %s3991 = scalar_lea.vmem [#allocation3], 6
    %3992 = vst [vmem:[%s3991] sm:$0x3] %v3990
    %v3993 = vadd.f32 %v256, %v3979
    %v3994 = vxor.u32 %v3993, 2147483648
    %v3995 = vmul.f32 %v3994, 1.442695
    %v3996 = vpow.pop %v3995
    %v3997 = vadd.f32 %v3996, 1.0
    %v3998 = vrcp.pop %v3997
    %v3999 = vmul.f32 1.0, %v3998
    %v4000 = vtanh.pop %v3993
    %v4002 = vrot.slane %v3680, 6
    %v4004 = vmul.f32 %v3999, %v4002
    %4006 = vrot.lane.b32.xlu0 %v4000, 64
    %v4007 = vpop.permute.xlu0 %4006
    %v4009 = vmul.f32 %v3999, %v4007
    %4011 = vrot.lane.b32.xlu0 %v4009, 32
    %v4012 = vpop.permute.xlu0 %4011
    %v4014 = vadd.f32 %v4004, %v4012
    %v4015 = vtanh.pop %v4014
    %4017 = vrot.lane.b32.xlu0 %v4015, 64
    %v4018 = vpop.permute.xlu0 %4017
    %v4020 = vmul.f32 %v3999, %v4018
    %v4021 = vld [vmem:[%s9 + $0x48] sm:$0xff]
    %v4022 = vld [vmem:[%s9 + $0x58] sm:$0xff]
    %v4023 = vld [vmem:[%s9 + $0x68] sm:$0xff]
    %v4024 = vld [vmem:[%s9 + $0x78] sm:$0xff]
    %v4025 = vld [vmem:[%s10] sm:$0x1]
    %v4027 = vlaneseq
    %v4028 = vshrl.u32 %v4027, 7
    %v4029 = vsub.s32 0, %v4028
    %v4030 = vrot.slane %v4025, %v4029
    %4033 = vrot.lane.b32.xlu0 %v4020, 32
    %v4034 = vpop.permute.xlu0 %4033
    %v4035 = vsel %vm265, %v4034, 0
    %4037 = vmatprep.subr.mxu0 0.0
    %4038 = vmatpush1.msra.mxu0 %v4021
    %4039 = vmatprep.subr.mxu0 0.0
    %4040 = vmatpush1.msra.mxu0 %v4022
    %4041 = vmatprep.subr.mxu0 0.0
    %4042 = vmatpush1.msra.mxu0 %v4023
    %4043 = vmatprep.subr.mxu0 0.0
    %4044 = vmatpush1.msra.mxu0 %v4024
    %4045 = vmatprep.subr.mxu0 0.0
    %4046 = vmatpush1.msra.mxu0 0.0
    %4047 = vmatprep.subr.mxu0 0.0
    %4048 = vmatpush1.msra.mxu0 0.0
    %4049 = vmatprep.subr.mxu0 0.0
    %4050 = vmatpush1.msra.mxu0 0.0
    %4051 = vmatprep.subr.mxu0 0.0
    %4052 = vmatpush1.msra.mxu0 0.0
    %4053 = vmatprep.subr.mxu0 0.0
    %4054 = vmatpush1.msra.mxu0 0.0
    %4055 = vmatprep.subr.mxu0 0.0
    %4056 = vmatpush1.msra.mxu0 0.0
    %4057 = vmatprep.subr.mxu0 0.0
    %4058 = vmatpush1.msra.mxu0 0.0
    %4059 = vmatprep.subr.mxu0 0.0
    %4060 = vmatpush1.msra.mxu0 0.0
    %4061 = vmatprep.subr.mxu0 0.0
    %4062 = vmatpush1.msra.mxu0 0.0
    %4063 = vmatprep.subr.mxu0 0.0
    %4064 = vmatpush1.msra.mxu0 0.0
    %4065 = vmatprep.subr.mxu0 0.0
    %4066 = vmatpush1.msra.mxu0 0.0
    %4067 = vmatprep.subr.mxu0 0.0
    %4068 = vmatpush1.msra.mxu0 0.0
    %4069 = vmatprep.subr.mxu0 0.0
    %4070 = vmatpush1.msra.mxu0 0.0
    %4071 = vmatprep.subr.mxu0 0.0
    %4072 = vmatpush1.msra.mxu0 0.0
    %4073 = vmatprep.subr.mxu0 0.0
    %4074 = vmatpush1.msra.mxu0 0.0
    %4075 = vmatprep.subr.mxu0 0.0
    %4076 = vmatpush1.msra.mxu0 0.0
    %4077 = vmatprep.subr.mxu0 0.0
    %4078 = vmatpush1.msra.mxu0 0.0
    %4079 = vmatprep.subr.mxu0 0.0
    %4080 = vmatpush1.msra.mxu0 0.0
    %4081 = vmatprep.subr.mxu0 0.0
    %4082 = vmatpush1.msra.mxu0 0.0
    %4083 = vmatprep.subr.mxu0 0.0
    %4084 = vmatpush1.msra.mxu0 0.0
    %4085 = vmatprep.subr.mxu0 0.0
    %4086 = vmatpush1.msra.mxu0 0.0
    %4087 = vmatprep.subr.mxu0 0.0
    %4088 = vmatpush1.msra.mxu0 0.0
    %4089 = vmatprep.subr.mxu0 0.0
    %4090 = vmatpush1.msra.mxu0 0.0
    %4091 = vmatprep.subr.mxu0 0.0
    %4092 = vmatpush1.msra.mxu0 0.0
    %4093 = vmatprep.subr.mxu0 0.0
    %4094 = vmatpush1.msra.mxu0 0.0
    %4095 = vmatprep.subr.mxu0 0.0
    %4096 = vmatpush1.msra.mxu0 0.0
    %4097 = vmatprep.subr.mxu0 0.0
    %4098 = vmatpush1.msra.mxu0 0.0
    %4099 = vmatprep.subr.mxu0 0.0
    %4100 = vmatpush1.msra.mxu0 0.0
    %4101 = vmatprep.mubr.f32.mxu0 0.0
    %4102 = vmatmul.mubr.f32.gmra.mrb[0].mxu0 %v4035
    %v4103 = vpop.f32.mrb[0].mxu0
    %v4104 = vadd.f32 %v4030, %v4103
    %v4105 = vpop.f32.mrb[0].mxu0
    %4106 = vdwg.mxu0
    %s4107 = scalar_lea.vmem [#allocation3], 8
    %4108 = vst [vmem:[%s4107] sm:$0x3] %v4104
    // Predicated region
    $region46: #{encoder_decoder_forward.1} parent=1 // pred_check
      _
    $region47: #{encoder_decoder_forward.1} parent=1 // pred_check_branch
      %4110 = sbr.rel (0) target = $region49
    $region48: #{encoder_decoder_forward.1} parent=1 // pred_region
      %s4112 = ssub.s32 160, 160
      %4113 = vsyncadd [#allocation4], %s4112
      %s4114 = sshll.u32 [#allocation3], 4
      %s4115 = int_to_ptr.vmem [resolvable:$true] %s4114
      %4120 = dma.vmem_to_hbm [thread:$0]  %s4115, 160, %s11, [#allocation4], 32, 32, 2
    $region49: #{encoder_decoder_forward.1} parent=1 // pred_fallthru
      _
    // Predicated region
    $region50: #{encoder_decoder_forward.1} parent=1 // pred_check
      _
    $region51: #{encoder_decoder_forward.1} parent=1 // pred_check_branch
      %4122 = sbr.rel (0) target = $region53
    $region52: #{encoder_decoder_forward.1} parent=1 // pred_region
      %4123 = dma.done [#allocation4], 160
    $region53: #{encoder_decoder_forward.1} parent=1 // pred_fallthru
      _
    %4124 = vsyncpa [#allocation4], 1

</llo_original>
